<compile_context>
chip_gen: v7x
topology: tpu7x:2x2x1
jax: 0.10.0
libtpu: 0.0.40
codegen_flags: <defaults>
</compile_context>

<pallas_src>
import numpy as np

import jax
import jax.numpy as jnp
from jax.experimental import pallas as pl
from jax.experimental.pallas import tpu as pltpu


_TB_MAX = 1024  # max batch-tile (sublane) size; VMEM per step stays < ~4 MiB


def _round_up(x, m):
    return (x + m - 1) // m * m


def _batch_tile(n):
    """Pick the batch tile (sublane dim of every block). Returns (tile, padded_n).

    Small batches use a single block (tile == full dim is always a legal
    sublane size).  Large batches are split into >= 2 blocks so the row grid
    can shard across v7x's two TensorCores (no effect on v5e/v6e)."""
    if n <= 256:
        return n, n
    tile = min(_TB_MAX, _round_up(-(-n // 2), 8))
    return tile, _round_up(n, tile)


def _make_row_index_map(s):
    def index_map(bb, i):
        return (2 * i + s, bb, 0)
    return index_map


# ----------------------------------------------------------------------------
# Fused Conv2d(k=5, s=1, valid) + Tanh + AvgPool2d(2) kernel
# ----------------------------------------------------------------------------
def _conv_kernel(r0, r1, r2, r3, r4, r5, w_ref, b_ref, p_ref, o_ref):
    # r_s:   (TB, W*Cin)      bf16  -- input row 2*i + s of the current image tile
    # w_ref: (6, W*Cin, C2)   bf16  -- per-row block-Toeplitz conv weights
    # b_ref: (1, C2)          f32   -- bias tiled over (qy, x)
    # p_ref: (C2, Wp*Cout)    bf16  -- 2x2 average-pool matrix (0.25 folded in)
    # o_ref: (TB, Wp*Cout)    bf16  -- pooled activations for pooled row i
    rs = (r0, r1, r2, r3, r4, r5)
    acc = jnp.dot(rs[0][...], w_ref[0], preferred_element_type=jnp.float32)
    for s in range(1, 6):
        acc = acc + jnp.dot(rs[s][...], w_ref[s],
                            preferred_element_type=jnp.float32)
    t = jnp.tanh(acc + b_ref[...])            # f32 tanh (v5e-safe), dense lanes
    o_ref[...] = jnp.dot(t.astype(p_ref.dtype), p_ref[...],
                         preferred_element_type=jnp.float32).astype(o_ref.dtype)


def conv_tanh_pool(x_h, w, b, *, tb):
    """One LeNet feature stage, fully fused.

    x_h: (H, Np, W*Cin) bf16 activations in (row, batch, x*chan) layout.
    w:   (Cout, Cin, 5, 5), b: (Cout,)  (PyTorch OIHW).
    Returns (Hp, Np, Wp*Cout) bf16 in the same layout (feeds the next stage
    directly, no interstage reshuffle)."""
    Cout, Cin, k, _ = w.shape
    assert k == 5
    H, Np, WC = x_h.shape
    W = WC // Cin
    assert W * Cin == WC
    Ho, Wo = H - k + 1, W - k + 1
    Hp, Wp = Ho // 2, Wo // 2
    C2 = 2 * Wo * Cout          # two conv rows worth of (x, co) columns
    CP = Wp * Cout              # pooled (x, co) columns

    # --- Block-Toeplitz per-input-row weight matrices (tiny, built once per
    # trace with one einsum against a static one-hot placement tensor). ------
    G = np.zeros((k, W, Wo), np.float32)          # G[dx, x2, x] = [x2 == x+dx]
    for dx in range(k):
        G[dx, dx:dx + Wo, :] = np.eye(Wo, dtype=np.float32)
    wT = jnp.transpose(w.astype(jnp.float32), (2, 3, 1, 0))   # (dy, dx, ci, co)
    M = jnp.einsum('dkio,kzy->dziyo', wT, jnp.asarray(G))     # (dy, x2, ci, x, co)
    M = M.reshape(k, WC, Wo * Cout)               # rows (x2,ci), cols (x,co)
    Z = jnp.zeros((WC, Wo * Cout), jnp.float32)
    # Input row offset s = qy + dy (qy in {0,1}); the qy column half uses dy=s-qy.
    Ws = jnp.stack(
        [jnp.concatenate([M[s] if s < k else Z,
                          M[s - 1] if 1 <= s <= k else Z], axis=1)
         for s in range(k + 1)], axis=0).astype(jnp.bfloat16)  # (6, WC, C2)

    b_row = jnp.tile(b.astype(jnp.float32), 2 * Wo).reshape(1, C2)

    # 2x2 average pool as a matmul epilogue: P[(qy*Wo+2j+qx)*Cout+c, j*Cout+c]=0.25
    P = np.zeros((C2, CP), np.float32)
    eye = 0.25 * np.eye(Cout, dtype=np.float32)
    for qy in range(2):
        for j in range(Wp):
            for qx in range(2):
                row0 = (qy * Wo + 2 * j + qx) * Cout
                P[row0:row0 + Cout, j * Cout:(j + 1) * Cout] = eye
    P = jnp.asarray(P, jnp.bfloat16)

    grid = (Np // tb, Hp)
    row_specs = [pl.BlockSpec((None, tb, WC), _make_row_index_map(s))
                 for s in range(k + 1)]

    out = pl.pallas_call(
        _conv_kernel,
        out_shape=jax.ShapeDtypeStruct((Hp, Np, CP), jnp.bfloat16),
        grid=grid,
        in_specs=row_specs + [
            pl.BlockSpec((k + 1, WC, C2), lambda bb, i: (0, 0, 0)),
            pl.BlockSpec((1, C2), lambda bb, i: (0, 0)),
            pl.BlockSpec((C2, CP), lambda bb, i: (0, 0)),
        ],
        out_specs=pl.BlockSpec((None, tb, CP), lambda bb, i: (i, bb, 0)),
        compiler_params=pltpu.CompilerParams(
            dimension_semantics=("parallel", "parallel")),
    )(x_h, x_h, x_h, x_h, x_h, x_h, Ws, b_row, P)
    return out


# ----------------------------------------------------------------------------
# Fused classifier tail: conv3-as-FC + tanh + fc1 + tanh + fc2 + softmax
# ----------------------------------------------------------------------------
def _tail_kernel(h_ref, w3_ref, b3_ref, w4_ref, b4_ref, w5_ref, b5_ref,
                 logits_ref, probs_ref):
    # h_ref: (5, TB, 80) bf16 -- conv2 pooled output, rows indexed by ky.
    acc = jnp.dot(h_ref[0], w3_ref[0], preferred_element_type=jnp.float32)
    for y in range(1, 5):
        acc = acc + jnp.dot(h_ref[y], w3_ref[y],
                            preferred_element_type=jnp.float32)
    h1 = jnp.tanh(acc + b3_ref[...])
    h2 = jnp.tanh(jnp.dot(h1.astype(jnp.bfloat16), w4_ref[...],
                          preferred_element_type=jnp.float32) + b4_ref[...])
    logits = jnp.dot(h2.astype(jnp.bfloat16), w5_ref[...],
                     preferred_element_type=jnp.float32) + b5_ref[...]
    logits_ref[...] = logits.astype(logits_ref.dtype)
    m = jnp.max(logits, axis=-1, keepdims=True)
    e = jnp.exp(logits - m)
    s = jnp.sum(e, axis=-1, keepdims=True)
    probs_ref[...] = (e * pl.reciprocal(s, approx=False)).astype(probs_ref.dtype)


def classifier_tail(h, p, *, tb):
    """h: (5, Np, 80) bf16 -- conv2 stage output consumed in-place (no reshapes)."""
    ky, Np, XC = h.shape
    c3_w, c3_b = p["c3_w"], p["c3_b"]          # (120,16,5,5), (120,)
    f1_w, f1_b = p["f1_w"], p["f1_b"]          # (84,120), (84,)
    f2_w, f2_b = p["f2_w"], p["f2_b"]          # (n_classes,84), (n_classes,)
    D1, D2, D3 = c3_w.shape[0], f1_w.shape[0], f2_w.shape[0]
    D1p, D2p = _round_up(D1, 128), _round_up(D2, 128)

    # conv3-as-FC: rows ordered (ky, kx, cin) to match the h lane order (x, c).
    w3 = jnp.transpose(c3_w, (2, 3, 1, 0)).reshape(ky, XC, D1)
    w3 = jnp.pad(w3, ((0, 0), (0, 0), (0, D1p - D1))).astype(jnp.bfloat16)
    b3 = jnp.pad(c3_b, (0, D1p - D1)).reshape(1, D1p).astype(jnp.float32)
    w4 = jnp.pad(f1_w.T, ((0, D1p - D1), (0, D2p - D2))).astype(jnp.bfloat16)
    b4 = jnp.pad(f1_b, (0, D2p - D2)).reshape(1, D2p).astype(jnp.float32)
    w5 = jnp.pad(f2_w.T, ((0, D2p - D2), (0, 0))).astype(jnp.bfloat16)
    b5 = f2_b.reshape(1, D3).astype(jnp.float32)

    logits, probs = pl.pallas_call(
        _tail_kernel,
        out_shape=(jax.ShapeDtypeStruct((Np, D3), jnp.float32),
                   jax.ShapeDtypeStruct((Np, D3), jnp.float32)),
        grid=(Np // tb,),
        in_specs=[
            pl.BlockSpec((ky, tb, XC), lambda bb: (0, bb, 0)),
            pl.BlockSpec((ky, XC, D1p), lambda bb: (0, 0, 0)),
            pl.BlockSpec((1, D1p), lambda bb: (0, 0)),
            pl.BlockSpec((D1p, D2p), lambda bb: (0, 0)),
            pl.BlockSpec((1, D2p), lambda bb: (0, 0)),
            pl.BlockSpec((D2p, D3), lambda bb: (0, 0)),
            pl.BlockSpec((1, D3), lambda bb: (0, 0)),
        ],
        out_specs=(pl.BlockSpec((tb, D3), lambda bb: (bb, 0)),
                   pl.BlockSpec((tb, D3), lambda bb: (bb, 0))),
        compiler_params=pltpu.CompilerParams(
            dimension_semantics=("parallel",)),
    )(h, w3, b3, w4, b4, w5, b5)
    return logits, probs


# ----------------------------------------------------------------------------
# LeNet-5 forward
# ----------------------------------------------------------------------------
def lenet5_forward(x, p):
    """x: (N, 1, 32, 32) NCHW (PyTorch layout). Returns (logits, probs)."""
    N, Cin, H, W = x.shape
    tb, Np = _batch_tile(N)

    # NCHW -> (row, batch, x*chan) layout used by every stage. O(raw) bytes.
    x_h = jnp.transpose(x, (2, 0, 3, 1)).reshape(H, N, W * Cin)
    if Np != N:
        x_h = jnp.pad(x_h, ((0, 0), (0, Np - N), (0, 0)))
    x_h = x_h.astype(jnp.bfloat16)

    h = conv_tanh_pool(x_h, p["c1_w"], p["c1_b"], tb=tb)   # (14, Np, 84)
    h = conv_tanh_pool(h, p["c2_w"], p["c2_b"], tb=tb)     # (5,  Np, 80)
    logits, probs = classifier_tail(h, p, tb=tb)           # (Np, n_classes) x2
    return logits[:N], probs[:N]


def init_params(key, n_classes):
    ks = jax.random.split(key, 10)
    s = 0.1
    return {
        "c1_w": jax.random.normal(ks[0], (6, 1, 5, 5), jnp.float32) * s,
        "c1_b": jax.random.normal(ks[1], (6,), jnp.float32) * s,
        "c2_w": jax.random.normal(ks[2], (16, 6, 5, 5), jnp.float32) * s,
        "c2_b": jax.random.normal(ks[3], (16,), jnp.float32) * s,
        "c3_w": jax.random.normal(ks[4], (120, 16, 5, 5), jnp.float32) * s,
        "c3_b": jax.random.normal(ks[5], (120,), jnp.float32) * s,
        "f1_w": jax.random.normal(ks[6], (84, 120), jnp.float32) * s,
        "f1_b": jax.random.normal(ks[7], (84,), jnp.float32) * s,
        "f2_w": jax.random.normal(ks[8], (n_classes, 84), jnp.float32) * s,
        "f2_b": jax.random.normal(ks[9], (n_classes,), jnp.float32) * s,
    }


def _reference_forward(x, p):
    """Pure-JAX f32 reference (independent of the Pallas path)."""
    def conv(h, w, b):
        y = jax.lax.conv_general_dilated(
            h, w, (1, 1), "VALID", dimension_numbers=("NCHW", "OIHW", "NCHW"))
        return jnp.tanh(y + b[None, :, None, None])

    def pool(h):
        n, c, hh, ww = h.shape
        return h.reshape(n, c, hh // 2, 2, ww // 2, 2).mean(axis=(3, 5))

    h = pool(conv(x, p["c1_w"], p["c1_b"]))
    h = pool(conv(h, p["c2_w"], p["c2_b"]))
    h = conv(h, p["c3_w"], p["c3_b"]).reshape(x.shape[0], -1)
    h = jnp.tanh(h @ p["f1_w"].T + p["f1_b"])
    logits = h @ p["f2_w"].T + p["f2_b"]
    return logits, jax.nn.softmax(logits, axis=-1)


if __name__ == "__main__":
    n_classes = 10
    key = jax.random.PRNGKey(0)
    pkey, xkey = jax.random.split(key)
    params = init_params(pkey, n_classes)
    # LeNet-5 implies 1-channel 32x32 input (conv3 reduces 5x5 -> 1x1).
    x = jax.random.normal(xkey, (2, 1, 32, 32), jnp.float32)

    logits, probs = jax.jit(lenet5_forward)(x, params)
    jax.block_until_ready((logits, probs))

    assert logits.shape == (2, n_classes)
    assert probs.shape == (2, n_classes)
    assert bool(jnp.allclose(jnp.sum(probs, axis=1), 1.0, atol=1e-3))

    ref_logits, ref_probs = jax.jit(_reference_forward)(x, params)
    jax.block_until_ready((ref_logits, ref_probs))
    assert bool(jnp.allclose(logits, ref_logits, atol=0.3))   # bf16 MXU tolerance
    assert bool(jnp.allclose(probs, ref_probs, atol=0.05))

    print("KERNEL_OK")
</pallas_src>

<mosaic_0001>
module attributes {stable_mosaic.version = 11 : i64} {
  func.func @_conv_kernel(%arg0: i32, %arg1: i32, %arg2: memref<1x2x32xbf16, #tpu.memory_space<vmem>>, %arg3: memref<1x2x32xbf16, #tpu.memory_space<vmem>>, %arg4: memref<1x2x32xbf16, #tpu.memory_space<vmem>>, %arg5: memref<1x2x32xbf16, #tpu.memory_space<vmem>>, %arg6: memref<1x2x32xbf16, #tpu.memory_space<vmem>>, %arg7: memref<1x2x32xbf16, #tpu.memory_space<vmem>>, %arg8: memref<6x32x336xbf16, #tpu.memory_space<vmem>>, %arg9: memref<1x336xf32, #tpu.memory_space<vmem>>, %arg10: memref<336x84xbf16, #tpu.memory_space<vmem>>, %arg11: memref<1x2x84xbf16, #tpu.memory_space<vmem>>) attributes {dimension_semantics = [#tpu.dimension_semantics<parallel>, #tpu.dimension_semantics<parallel>], iteration_bounds = array<i64: 1, 14>, scalar_prefetch = 0 : i64, scratch_operands = 0 : i64, tpu.core_type = #tpu.core_type<tc>, window_params = [{transform_indices = @transform_0, window_bounds = array<i64: 1, 2, 32>}, {transform_indices = @transform_1, window_bounds = array<i64: 1, 2, 32>}, {transform_indices = @transform_2, window_bounds = array<i64: 1, 2, 32>}, {transform_indices = @transform_3, window_bounds = array<i64: 1, 2, 32>}, {transform_indices = @transform_4, window_bounds = array<i64: 1, 2, 32>}, {transform_indices = @transform_5, window_bounds = array<i64: 1, 2, 32>}, {pipeline_mode = #tpu.pipeline_mode<synchronous>, transform_indices = @transform_6, window_bounds = array<i64: 6, 32, 336>}, {pipeline_mode = #tpu.pipeline_mode<synchronous>, transform_indices = @transform_7, window_bounds = array<i64: 1, 336>}, {pipeline_mode = #tpu.pipeline_mode<synchronous>, transform_indices = @transform_8, window_bounds = array<i64: 336, 84>}, {transform_indices = @transform_9, window_bounds = array<i64: 1, 2, 84>}]} {
    %c0 = arith.constant 0 : index
    %c0_0 = arith.constant 0 : index
    %c0_1 = arith.constant 0 : index
    %0 = vector.load %arg2[%c0, %c0_0, %c0_1] : memref<1x2x32xbf16, #tpu.memory_space<vmem>>, vector<1x2x32xbf16>
    %1 = vector.shape_cast %0 : vector<1x2x32xbf16> to vector<2x32xbf16>
    %c0_2 = arith.constant 0 : index
    %c0_3 = arith.constant 0 : index
    %c0_4 = arith.constant 0 : index
    %2 = vector.load %arg8[%c0_2, %c0_3, %c0_4] : memref<6x32x336xbf16, #tpu.memory_space<vmem>>, vector<1x32x336xbf16>
    %3 = vector.shape_cast %2 : vector<1x32x336xbf16> to vector<32x336xbf16>
    %cst = arith.constant dense<0.000000e+00> : vector<2x336xf32>
    %4 = tpu.matmul %1, %3, %cst {dimension_numbers = #tpu.dot_dimension_numbers<[1], [0], [0], [1], [0, 0, 1, 1], [], []>} : vector<2x32xbf16>, vector<32x336xbf16>, vector<2x336xf32> -> vector<2x336xf32>
    %c0_5 = arith.constant 0 : index
    %c0_6 = arith.constant 0 : index
    %c0_7 = arith.constant 0 : index
    %5 = vector.load %arg3[%c0_5, %c0_6, %c0_7] : memref<1x2x32xbf16, #tpu.memory_space<vmem>>, vector<1x2x32xbf16>
    %6 = vector.shape_cast %5 : vector<1x2x32xbf16> to vector<2x32xbf16>
    %c1 = arith.constant 1 : index
    %c0_8 = arith.constant 0 : index
    %c0_9 = arith.constant 0 : index
    %7 = vector.load %arg8[%c1, %c0_8, %c0_9] : memref<6x32x336xbf16, #tpu.memory_space<vmem>>, vector<1x32x336xbf16>
    %8 = vector.shape_cast %7 : vector<1x32x336xbf16> to vector<32x336xbf16>
    %cst_10 = arith.constant dense<0.000000e+00> : vector<2x336xf32>
    %9 = tpu.matmul %6, %8, %cst_10 {dimension_numbers = #tpu.dot_dimension_numbers<[1], [0], [0], [1], [0, 0, 1, 1], [], []>} : vector<2x32xbf16>, vector<32x336xbf16>, vector<2x336xf32> -> vector<2x336xf32>
    %10 = arith.addf %4, %9 : vector<2x336xf32>
    %c0_11 = arith.constant 0 : index
    %c0_12 = arith.constant 0 : index
    %c0_13 = arith.constant 0 : index
    %11 = vector.load %arg4[%c0_11, %c0_12, %c0_13] : memref<1x2x32xbf16, #tpu.memory_space<vmem>>, vector<1x2x32xbf16>
    %12 = vector.shape_cast %11 : vector<1x2x32xbf16> to vector<2x32xbf16>
    %c2 = arith.constant 2 : index
    %c0_14 = arith.constant 0 : index
    %c0_15 = arith.constant 0 : index
    %13 = vector.load %arg8[%c2, %c0_14, %c0_15] : memref<6x32x336xbf16, #tpu.memory_space<vmem>>, vector<1x32x336xbf16>
    %14 = vector.shape_cast %13 : vector<1x32x336xbf16> to vector<32x336xbf16>
    %cst_16 = arith.constant dense<0.000000e+00> : vector<2x336xf32>
    %15 = tpu.matmul %12, %14, %cst_16 {dimension_numbers = #tpu.dot_dimension_numbers<[1], [0], [0], [1], [0, 0, 1, 1], [], []>} : vector<2x32xbf16>, vector<32x336xbf16>, vector<2x336xf32> -> vector<2x336xf32>
    %16 = arith.addf %10, %15 : vector<2x336xf32>
    %c0_17 = arith.constant 0 : index
    %c0_18 = arith.constant 0 : index
    %c0_19 = arith.constant 0 : index
    %17 = vector.load %arg5[%c0_17, %c0_18, %c0_19] : memref<1x2x32xbf16, #tpu.memory_space<vmem>>, vector<1x2x32xbf16>
    %18 = vector.shape_cast %17 : vector<1x2x32xbf16> to vector<2x32xbf16>
    %c3 = arith.constant 3 : index
    %c0_20 = arith.constant 0 : index
    %c0_21 = arith.constant 0 : index
    %19 = vector.load %arg8[%c3, %c0_20, %c0_21] : memref<6x32x336xbf16, #tpu.memory_space<vmem>>, vector<1x32x336xbf16>
    %20 = vector.shape_cast %19 : vector<1x32x336xbf16> to vector<32x336xbf16>
    %cst_22 = arith.constant dense<0.000000e+00> : vector<2x336xf32>
    %21 = tpu.matmul %18, %20, %cst_22 {dimension_numbers = #tpu.dot_dimension_numbers<[1], [0], [0], [1], [0, 0, 1, 1], [], []>} : vector<2x32xbf16>, vector<32x336xbf16>, vector<2x336xf32> -> vector<2x336xf32>
    %22 = arith.addf %16, %21 : vector<2x336xf32>
    %c0_23 = arith.constant 0 : index
    %c0_24 = arith.constant 0 : index
    %c0_25 = arith.constant 0 : index
    %23 = vector.load %arg6[%c0_23, %c0_24, %c0_25] : memref<1x2x32xbf16, #tpu.memory_space<vmem>>, vector<1x2x32xbf16>
    %24 = vector.shape_cast %23 : vector<1x2x32xbf16> to vector<2x32xbf16>
    %c4 = arith.constant 4 : index
    %c0_26 = arith.constant 0 : index
    %c0_27 = arith.constant 0 : index
    %25 = vector.load %arg8[%c4, %c0_26, %c0_27] : memref<6x32x336xbf16, #tpu.memory_space<vmem>>, vector<1x32x336xbf16>
    %26 = vector.shape_cast %25 : vector<1x32x336xbf16> to vector<32x336xbf16>
    %cst_28 = arith.constant dense<0.000000e+00> : vector<2x336xf32>
    %27 = tpu.matmul %24, %26, %cst_28 {dimension_numbers = #tpu.dot_dimension_numbers<[1], [0], [0], [1], [0, 0, 1, 1], [], []>} : vector<2x32xbf16>, vector<32x336xbf16>, vector<2x336xf32> -> vector<2x336xf32>
    %28 = arith.addf %22, %27 : vector<2x336xf32>
    %c0_29 = arith.constant 0 : index
    %c0_30 = arith.constant 0 : index
    %c0_31 = arith.constant 0 : index
    %29 = vector.load %arg7[%c0_29, %c0_30, %c0_31] : memref<1x2x32xbf16, #tpu.memory_space<vmem>>, vector<1x2x32xbf16>
    %30 = vector.shape_cast %29 : vector<1x2x32xbf16> to vector<2x32xbf16>
    %c5 = arith.constant 5 : index
    %c0_32 = arith.constant 0 : index
    %c0_33 = arith.constant 0 : index
    %31 = vector.load %arg8[%c5, %c0_32, %c0_33] : memref<6x32x336xbf16, #tpu.memory_space<vmem>>, vector<1x32x336xbf16>
    %32 = vector.shape_cast %31 : vector<1x32x336xbf16> to vector<32x336xbf16>
    %cst_34 = arith.constant dense<0.000000e+00> : vector<2x336xf32>
    %33 = tpu.matmul %30, %32, %cst_34 {dimension_numbers = #tpu.dot_dimension_numbers<[1], [0], [0], [1], [0, 0, 1, 1], [], []>} : vector<2x32xbf16>, vector<32x336xbf16>, vector<2x336xf32> -> vector<2x336xf32>
    %34 = arith.addf %28, %33 : vector<2x336xf32>
    %c0_35 = arith.constant 0 : index
    %c0_36 = arith.constant 0 : index
    %35 = vector.load %arg9[%c0_35, %c0_36] : memref<1x336xf32, #tpu.memory_space<vmem>>, vector<1x336xf32>
    %36 = vector.broadcast %35 : vector<1x336xf32> to vector<2x336xf32>
    %37 = arith.addf %34, %36 : vector<2x336xf32>
    %38 = math.tanh %37 : vector<2x336xf32>
    %39 = arith.truncf %38 : vector<2x336xf32> to vector<2x336xbf16>
    %c0_37 = arith.constant 0 : index
    %c0_38 = arith.constant 0 : index
    %40 = vector.load %arg10[%c0_37, %c0_38] : memref<336x84xbf16, #tpu.memory_space<vmem>>, vector<336x84xbf16>
    %cst_39 = arith.constant dense<0.000000e+00> : vector<2x84xf32>
    %41 = tpu.matmul %39, %40, %cst_39 {dimension_numbers = #tpu.dot_dimension_numbers<[1], [0], [0], [1], [0, 0, 1, 1], [], []>} : vector<2x336xbf16>, vector<336x84xbf16>, vector<2x84xf32> -> vector<2x84xf32>
    %42 = arith.truncf %41 : vector<2x84xf32> to vector<2x84xbf16>
    %c0_40 = arith.constant 0 : index
    %c0_41 = arith.constant 0 : index
    %c0_42 = arith.constant 0 : index
    %43 = vector.load %arg11[%c0_40, %c0_41, %c0_42] : memref<1x2x84xbf16, #tpu.memory_space<vmem>>, vector<1x2x84xbf16>
    %44 = vector.shape_cast %43 : vector<1x2x84xbf16> to vector<2x84xbf16>
    %45 = vector.shape_cast %42 : vector<2x84xbf16> to vector<1x2x84xbf16>
    tpu.vector_store %arg11[%c0_40, %c0_41, %c0_42], %45 {strides = array<i32>} : memref<1x2x84xbf16, #tpu.memory_space<vmem>>, vector<1x2x84xbf16>,
    return
  }
  func.func @transform_0(%arg0: i32, %arg1: i32) -> (i32, i32, i32) {
    %c2_i32 = arith.constant 2 : i32
    %0 = arith.muli %c2_i32, %arg1 : i32
    %c0_i32 = arith.constant 0 : i32
    %1 = arith.addi %0, %c0_i32 : i32
    %c0_i32_0 = arith.constant 0 : i32
    %c0_i32_1 = arith.constant 0 : i32
    return %1, %arg0, %c0_i32_0 : i32, i32, i32
  }
  func.func @transform_1(%arg0: i32, %arg1: i32) -> (i32, i32, i32) {
    %c2_i32 = arith.constant 2 : i32
    %0 = arith.muli %c2_i32, %arg1 : i32
    %c1_i32 = arith.constant 1 : i32
    %1 = arith.addi %0, %c1_i32 : i32
    %c0_i32 = arith.constant 0 : i32
    %c0_i32_0 = arith.constant 0 : i32
    return %1, %arg0, %c0_i32 : i32, i32, i32
  }
  func.func @transform_2(%arg0: i32, %arg1: i32) -> (i32, i32, i32) {
    %c2_i32 = arith.constant 2 : i32
    %0 = arith.muli %c2_i32, %arg1 : i32
    %c2_i32_0 = arith.constant 2 : i32
    %1 = arith.addi %0, %c2_i32_0 : i32
    %c0_i32 = arith.constant 0 : i32
    %c0_i32_1 = arith.constant 0 : i32
    return %1, %arg0, %c0_i32 : i32, i32, i32
  }
  func.func @transform_3(%arg0: i32, %arg1: i32) -> (i32, i32, i32) {
    %c2_i32 = arith.constant 2 : i32
    %0 = arith.muli %c2_i32, %arg1 : i32
    %c3_i32 = arith.constant 3 : i32
    %1 = arith.addi %0, %c3_i32 : i32
    %c0_i32 = arith.constant 0 : i32
    %c0_i32_0 = arith.constant 0 : i32
    return %1, %arg0, %c0_i32 : i32, i32, i32
  }
  func.func @transform_4(%arg0: i32, %arg1: i32) -> (i32, i32, i32) {
    %c2_i32 = arith.constant 2 : i32
    %0 = arith.muli %c2_i32, %arg1 : i32
    %c4_i32 = arith.constant 4 : i32
    %1 = arith.addi %0, %c4_i32 : i32
    %c0_i32 = arith.constant 0 : i32
    %c0_i32_0 = arith.constant 0 : i32
    return %1, %arg0, %c0_i32 : i32, i32, i32
  }
  func.func @transform_5(%arg0: i32, %arg1: i32) -> (i32, i32, i32) {
    %c2_i32 = arith.constant 2 : i32
    %0 = arith.muli %c2_i32, %arg1 : i32
    %c5_i32 = arith.constant 5 : i32
    %1 = arith.addi %0, %c5_i32 : i32
    %c0_i32 = arith.constant 0 : i32
    %c0_i32_0 = arith.constant 0 : i32
    return %1, %arg0, %c0_i32 : i32, i32, i32
  }
  func.func @transform_6(%arg0: i32, %arg1: i32) -> (i32, i32, i32) {
    %c0_i32 = arith.constant 0 : i32
    %c0_i32_0 = arith.constant 0 : i32
    %c0_i32_1 = arith.constant 0 : i32
    %c0_i32_2 = arith.constant 0 : i32
    return %c0_i32, %c0_i32_0, %c0_i32_1 : i32, i32, i32
  }
  func.func @transform_7(%arg0: i32, %arg1: i32) -> (i32, i32) {
    %c0_i32 = arith.constant 0 : i32
    %c0_i32_0 = arith.constant 0 : i32
    %c0_i32_1 = arith.constant 0 : i32
    return %c0_i32, %c0_i32_0 : i32, i32
  }
  func.func @transform_8(%arg0: i32, %arg1: i32) -> (i32, i32) {
    %c0_i32 = arith.constant 0 : i32
    %c0_i32_0 = arith.constant 0 : i32
    %c0_i32_1 = arith.constant 0 : i32
    return %c0_i32, %c0_i32_0 : i32, i32
  }
  func.func @transform_9(%arg0: i32, %arg1: i32) -> (i32, i32, i32) {
    %c0_i32 = arith.constant 0 : i32
    %c0_i32_0 = arith.constant 0 : i32
    return %arg1, %arg0, %c0_i32 : i32, i32, i32
  }
}

module attributes {stable_mosaic.version = 11 : i64} {
  func.func @_conv_kernel(%arg0: i32, %arg1: i32, %arg2: memref<1x2x84xbf16, #tpu.memory_space<vmem>>, %arg3: memref<1x2x84xbf16, #tpu.memory_space<vmem>>, %arg4: memref<1x2x84xbf16, #tpu.memory_space<vmem>>, %arg5: memref<1x2x84xbf16, #tpu.memory_space<vmem>>, %arg6: memref<1x2x84xbf16, #tpu.memory_space<vmem>>, %arg7: memref<1x2x84xbf16, #tpu.memory_space<vmem>>, %arg8: memref<6x84x320xbf16, #tpu.memory_space<vmem>>, %arg9: memref<1x320xf32, #tpu.memory_space<vmem>>, %arg10: memref<320x80xbf16, #tpu.memory_space<vmem>>, %arg11: memref<1x2x80xbf16, #tpu.memory_space<vmem>>) attributes {dimension_semantics = [#tpu.dimension_semantics<parallel>, #tpu.dimension_semantics<parallel>], iteration_bounds = array<i64: 1, 5>, scalar_prefetch = 0 : i64, scratch_operands = 0 : i64, tpu.core_type = #tpu.core_type<tc>, window_params = [{transform_indices = @transform_0, window_bounds = array<i64: 1, 2, 84>}, {transform_indices = @transform_1, window_bounds = array<i64: 1, 2, 84>}, {transform_indices = @transform_2, window_bounds = array<i64: 1, 2, 84>}, {transform_indices = @transform_3, window_bounds = array<i64: 1, 2, 84>}, {transform_indices = @transform_4, window_bounds = array<i64: 1, 2, 84>}, {transform_indices = @transform_5, window_bounds = array<i64: 1, 2, 84>}, {pipeline_mode = #tpu.pipeline_mode<synchronous>, transform_indices = @transform_6, window_bounds = array<i64: 6, 84, 320>}, {pipeline_mode = #tpu.pipeline_mode<synchronous>, transform_indices = @transform_7, window_bounds = array<i64: 1, 320>}, {pipeline_mode = #tpu.pipeline_mode<synchronous>, transform_indices = @transform_8, window_bounds = array<i64: 320, 80>}, {transform_indices = @transform_9, window_bounds = array<i64: 1, 2, 80>}]} {
    %c0 = arith.constant 0 : index
    %c0_0 = arith.constant 0 : index
    %c0_1 = arith.constant 0 : index
    %0 = vector.load %arg2[%c0, %c0_0, %c0_1] : memref<1x2x84xbf16, #tpu.memory_space<vmem>>, vector<1x2x84xbf16>
    %1 = vector.shape_cast %0 : vector<1x2x84xbf16> to vector<2x84xbf16>
    %c0_2 = arith.constant 0 : index
    %c0_3 = arith.constant 0 : index
    %c0_4 = arith.constant 0 : index
    %2 = vector.load %arg8[%c0_2, %c0_3, %c0_4] : memref<6x84x320xbf16, #tpu.memory_space<vmem>>, vector<1x84x320xbf16>
    %3 = vector.shape_cast %2 : vector<1x84x320xbf16> to vector<84x320xbf16>
    %cst = arith.constant dense<0.000000e+00> : vector<2x320xf32>
    %4 = tpu.matmul %1, %3, %cst {dimension_numbers = #tpu.dot_dimension_numbers<[1], [0], [0], [1], [0, 0, 1, 1], [], []>} : vector<2x84xbf16>, vector<84x320xbf16>, vector<2x320xf32> -> vector<2x320xf32>
    %c0_5 = arith.constant 0 : index
    %c0_6 = arith.constant 0 : index
    %c0_7 = arith.constant 0 : index
    %5 = vector.load %arg3[%c0_5, %c0_6, %c0_7] : memref<1x2x84xbf16, #tpu.memory_space<vmem>>, vector<1x2x84xbf16>
    %6 = vector.shape_cast %5 : vector<1x2x84xbf16> to vector<2x84xbf16>
    %c1 = arith.constant 1 : index
    %c0_8 = arith.constant 0 : index
    %c0_9 = arith.constant 0 : index
    %7 = vector.load %arg8[%c1, %c0_8, %c0_9] : memref<6x84x320xbf16, #tpu.memory_space<vmem>>, vector<1x84x320xbf16>
    %8 = vector.shape_cast %7 : vector<1x84x320xbf16> to vector<84x320xbf16>
    %cst_10 = arith.constant dense<0.000000e+00> : vector<2x320xf32>
    %9 = tpu.matmul %6, %8, %cst_10 {dimension_numbers = #tpu.dot_dimension_numbers<[1], [0], [0], [1], [0, 0, 1, 1], [], []>} : vector<2x84xbf16>, vector<84x320xbf16>, vector<2x320xf32> -> vector<2x320xf32>
    %10 = arith.addf %4, %9 : vector<2x320xf32>
    %c0_11 = arith.constant 0 : index
    %c0_12 = arith.constant 0 : index
    %c0_13 = arith.constant 0 : index
    %11 = vector.load %arg4[%c0_11, %c0_12, %c0_13] : memref<1x2x84xbf16, #tpu.memory_space<vmem>>, vector<1x2x84xbf16>
    %12 = vector.shape_cast %11 : vector<1x2x84xbf16> to vector<2x84xbf16>
    %c2 = arith.constant 2 : index
    %c0_14 = arith.constant 0 : index
    %c0_15 = arith.constant 0 : index
    %13 = vector.load %arg8[%c2, %c0_14, %c0_15] : memref<6x84x320xbf16, #tpu.memory_space<vmem>>, vector<1x84x320xbf16>
    %14 = vector.shape_cast %13 : vector<1x84x320xbf16> to vector<84x320xbf16>
    %cst_16 = arith.constant dense<0.000000e+00> : vector<2x320xf32>
    %15 = tpu.matmul %12, %14, %cst_16 {dimension_numbers = #tpu.dot_dimension_numbers<[1], [0], [0], [1], [0, 0, 1, 1], [], []>} : vector<2x84xbf16>, vector<84x320xbf16>, vector<2x320xf32> -> vector<2x320xf32>
    %16 = arith.addf %10, %15 : vector<2x320xf32>
    %c0_17 = arith.constant 0 : index
    %c0_18 = arith.constant 0 : index
    %c0_19 = arith.constant 0 : index
    %17 = vector.load %arg5[%c0_17, %c0_18, %c0_19] : memref<1x2x84xbf16, #tpu.memory_space<vmem>>, vector<1x2x84xbf16>
    %18 = vector.shape_cast %17 : vector<1x2x84xbf16> to vector<2x84xbf16>
    %c3 = arith.constant 3 : index
    %c0_20 = arith.constant 0 : index
    %c0_21 = arith.constant 0 : index
    %19 = vector.load %arg8[%c3, %c0_20, %c0_21] : memref<6x84x320xbf16, #tpu.memory_space<vmem>>, vector<1x84x320xbf16>
    %20 = vector.shape_cast %19 : vector<1x84x320xbf16> to vector<84x320xbf16>
    %cst_22 = arith.constant dense<0.000000e+00> : vector<2x320xf32>
    %21 = tpu.matmul %18, %20, %cst_22 {dimension_numbers = #tpu.dot_dimension_numbers<[1], [0], [0], [1], [0, 0, 1, 1], [], []>} : vector<2x84xbf16>, vector<84x320xbf16>, vector<2x320xf32> -> vector<2x320xf32>
    %22 = arith.addf %16, %21 : vector<2x320xf32>
    %c0_23 = arith.constant 0 : index
    %c0_24 = arith.constant 0 : index
    %c0_25 = arith.constant 0 : index
    %23 = vector.load %arg6[%c0_23, %c0_24, %c0_25] : memref<1x2x84xbf16, #tpu.memory_space<vmem>>, vector<1x2x84xbf16>
    %24 = vector.shape_cast %23 : vector<1x2x84xbf16> to vector<2x84xbf16>
    %c4 = arith.constant 4 : index
    %c0_26 = arith.constant 0 : index
    %c0_27 = arith.constant 0 : index
    %25 = vector.load %arg8[%c4, %c0_26, %c0_27] : memref<6x84x320xbf16, #tpu.memory_space<vmem>>, vector<1x84x320xbf16>
    %26 = vector.shape_cast %25 : vector<1x84x320xbf16> to vector<84x320xbf16>
    %cst_28 = arith.constant dense<0.000000e+00> : vector<2x320xf32>
    %27 = tpu.matmul %24, %26, %cst_28 {dimension_numbers = #tpu.dot_dimension_numbers<[1], [0], [0], [1], [0, 0, 1, 1], [], []>} : vector<2x84xbf16>, vector<84x320xbf16>, vector<2x320xf32> -> vector<2x320xf32>
    %28 = arith.addf %22, %27 : vector<2x320xf32>
    %c0_29 = arith.constant 0 : index
    %c0_30 = arith.constant 0 : index
    %c0_31 = arith.constant 0 : index
    %29 = vector.load %arg7[%c0_29, %c0_30, %c0_31] : memref<1x2x84xbf16, #tpu.memory_space<vmem>>, vector<1x2x84xbf16>
    %30 = vector.shape_cast %29 : vector<1x2x84xbf16> to vector<2x84xbf16>
    %c5 = arith.constant 5 : index
    %c0_32 = arith.constant 0 : index
    %c0_33 = arith.constant 0 : index
    %31 = vector.load %arg8[%c5, %c0_32, %c0_33] : memref<6x84x320xbf16, #tpu.memory_space<vmem>>, vector<1x84x320xbf16>
    %32 = vector.shape_cast %31 : vector<1x84x320xbf16> to vector<84x320xbf16>
    %cst_34 = arith.constant dense<0.000000e+00> : vector<2x320xf32>
    %33 = tpu.matmul %30, %32, %cst_34 {dimension_numbers = #tpu.dot_dimension_numbers<[1], [0], [0], [1], [0, 0, 1, 1], [], []>} : vector<2x84xbf16>, vector<84x320xbf16>, vector<2x320xf32> -> vector<2x320xf32>
    %34 = arith.addf %28, %33 : vector<2x320xf32>
    %c0_35 = arith.constant 0 : index
    %c0_36 = arith.constant 0 : index
    %35 = vector.load %arg9[%c0_35, %c0_36] : memref<1x320xf32, #tpu.memory_space<vmem>>, vector<1x320xf32>
    %36 = vector.broadcast %35 : vector<1x320xf32> to vector<2x320xf32>
    %37 = arith.addf %34, %36 : vector<2x320xf32>
    %38 = math.tanh %37 : vector<2x320xf32>
    %39 = arith.truncf %38 : vector<2x320xf32> to vector<2x320xbf16>
    %c0_37 = arith.constant 0 : index
    %c0_38 = arith.constant 0 : index
    %40 = vector.load %arg10[%c0_37, %c0_38] : memref<320x80xbf16, #tpu.memory_space<vmem>>, vector<320x80xbf16>
    %cst_39 = arith.constant dense<0.000000e+00> : vector<2x80xf32>
    %41 = tpu.matmul %39, %40, %cst_39 {dimension_numbers = #tpu.dot_dimension_numbers<[1], [0], [0], [1], [0, 0, 1, 1], [], []>} : vector<2x320xbf16>, vector<320x80xbf16>, vector<2x80xf32> -> vector<2x80xf32>
    %42 = arith.truncf %41 : vector<2x80xf32> to vector<2x80xbf16>
    %c0_40 = arith.constant 0 : index
    %c0_41 = arith.constant 0 : index
    %c0_42 = arith.constant 0 : index
    %43 = vector.load %arg11[%c0_40, %c0_41, %c0_42] : memref<1x2x80xbf16, #tpu.memory_space<vmem>>, vector<1x2x80xbf16>
    %44 = vector.shape_cast %43 : vector<1x2x80xbf16> to vector<2x80xbf16>
    %45 = vector.shape_cast %42 : vector<2x80xbf16> to vector<1x2x80xbf16>
    tpu.vector_store %arg11[%c0_40, %c0_41, %c0_42], %45 {strides = array<i32>} : memref<1x2x80xbf16, #tpu.memory_space<vmem>>, vector<1x2x80xbf16>,
    return
  }
  func.func @transform_0(%arg0: i32, %arg1: i32) -> (i32, i32, i32) {
    %c2_i32 = arith.constant 2 : i32
    %0 = arith.muli %c2_i32, %arg1 : i32
    %c0_i32 = arith.constant 0 : i32
    %1 = arith.addi %0, %c0_i32 : i32
    %c0_i32_0 = arith.constant 0 : i32
    %c0_i32_1 = arith.constant 0 : i32
    return %1, %arg0, %c0_i32_0 : i32, i32, i32
  }
  func.func @transform_1(%arg0: i32, %arg1: i32) -> (i32, i32, i32) {
    %c2_i32 = arith.constant 2 : i32
    %0 = arith.muli %c2_i32, %arg1 : i32
    %c1_i32 = arith.constant 1 : i32
    %1 = arith.addi %0, %c1_i32 : i32
    %c0_i32 = arith.constant 0 : i32
    %c0_i32_0 = arith.constant 0 : i32
    return %1, %arg0, %c0_i32 : i32, i32, i32
  }
  func.func @transform_2(%arg0: i32, %arg1: i32) -> (i32, i32, i32) {
    %c2_i32 = arith.constant 2 : i32
    %0 = arith.muli %c2_i32, %arg1 : i32
    %c2_i32_0 = arith.constant 2 : i32
    %1 = arith.addi %0, %c2_i32_0 : i32
    %c0_i32 = arith.constant 0 : i32
    %c0_i32_1 = arith.constant 0 : i32
    return %1, %arg0, %c0_i32 : i32, i32, i32
  }
  func.func @transform_3(%arg0: i32, %arg1: i32) -> (i32, i32, i32) {
    %c2_i32 = arith.constant 2 : i32
    %0 = arith.muli %c2_i32, %arg1 : i32
    %c3_i32 = arith.constant 3 : i32
    %1 = arith.addi %0, %c3_i32 : i32
    %c0_i32 = arith.constant 0 : i32
    %c0_i32_0 = arith.constant 0 : i32
    return %1, %arg0, %c0_i32 : i32, i32, i32
  }
  func.func @transform_4(%arg0: i32, %arg1: i32) -> (i32, i32, i32) {
    %c2_i32 = arith.constant 2 : i32
    %0 = arith.muli %c2_i32, %arg1 : i32
    %c4_i32 = arith.constant 4 : i32
    %1 = arith.addi %0, %c4_i32 : i32
    %c0_i32 = arith.constant 0 : i32
    %c0_i32_0 = arith.constant 0 : i32
    return %1, %arg0, %c0_i32 : i32, i32, i32
  }
  func.func @transform_5(%arg0: i32, %arg1: i32) -> (i32, i32, i32) {
    %c2_i32 = arith.constant 2 : i32
    %0 = arith.muli %c2_i32, %arg1 : i32
    %c5_i32 = arith.constant 5 : i32
    %1 = arith.addi %0, %c5_i32 : i32
    %c0_i32 = arith.constant 0 : i32
    %c0_i32_0 = arith.constant 0 : i32
    return %1, %arg0, %c0_i32 : i32, i32, i32
  }
  func.func @transform_6(%arg0: i32, %arg1: i32) -> (i32, i32, i32) {
    %c0_i32 = arith.constant 0 : i32
    %c0_i32_0 = arith.constant 0 : i32
    %c0_i32_1 = arith.constant 0 : i32
    %c0_i32_2 = arith.constant 0 : i32
    return %c0_i32, %c0_i32_0, %c0_i32_1 : i32, i32, i32
  }
  func.func @transform_7(%arg0: i32, %arg1: i32) -> (i32, i32) {
    %c0_i32 = arith.constant 0 : i32
    %c0_i32_0 = arith.constant 0 : i32
    %c0_i32_1 = arith.constant 0 : i32
    return %c0_i32, %c0_i32_0 : i32, i32
  }
  func.func @transform_8(%arg0: i32, %arg1: i32) -> (i32, i32) {
    %c0_i32 = arith.constant 0 : i32
    %c0_i32_0 = arith.constant 0 : i32
    %c0_i32_1 = arith.constant 0 : i32
    return %c0_i32, %c0_i32_0 : i32, i32
  }
  func.func @transform_9(%arg0: i32, %arg1: i32) -> (i32, i32, i32) {
    %c0_i32 = arith.constant 0 : i32
    %c0_i32_0 = arith.constant 0 : i32
    return %arg1, %arg0, %c0_i32 : i32, i32, i32
  }
}

module attributes {stable_mosaic.version = 11 : i64} {
  func.func @_tail_kernel(%arg0: i32, %arg1: memref<5x2x80xbf16, #tpu.memory_space<vmem>>, %arg2: memref<5x80x128xbf16, #tpu.memory_space<vmem>>, %arg3: memref<1x128xf32, #tpu.memory_space<vmem>>, %arg4: memref<128x128xbf16, #tpu.memory_space<vmem>>, %arg5: memref<1x128xf32, #tpu.memory_space<vmem>>, %arg6: memref<128x10xbf16, #tpu.memory_space<vmem>>, %arg7: memref<1x10xf32, #tpu.memory_space<vmem>>, %arg8: memref<2x10xf32, #tpu.memory_space<vmem>>, %arg9: memref<2x10xf32, #tpu.memory_space<vmem>>) attributes {dimension_semantics = [#tpu.dimension_semantics<parallel>], iteration_bounds = array<i64: 1>, scalar_prefetch = 0 : i64, scratch_operands = 0 : i64, tpu.core_type = #tpu.core_type<tc>, window_params = [{transform_indices = @transform_0, window_bounds = array<i64: 5, 2, 80>}, {pipeline_mode = #tpu.pipeline_mode<synchronous>, transform_indices = @transform_1, window_bounds = array<i64: 5, 80, 128>}, {pipeline_mode = #tpu.pipeline_mode<synchronous>, transform_indices = @transform_2, window_bounds = array<i64: 1, 128>}, {pipeline_mode = #tpu.pipeline_mode<synchronous>, transform_indices = @transform_3, window_bounds = array<i64: 128, 128>}, {pipeline_mode = #tpu.pipeline_mode<synchronous>, transform_indices = @transform_4, window_bounds = array<i64: 1, 128>}, {pipeline_mode = #tpu.pipeline_mode<synchronous>, transform_indices = @transform_5, window_bounds = array<i64: 128, 10>}, {pipeline_mode = #tpu.pipeline_mode<synchronous>, transform_indices = @transform_6, window_bounds = array<i64: 1, 10>}, {transform_indices = @transform_7, window_bounds = array<i64: 2, 10>}, {transform_indices = @transform_8, window_bounds = array<i64: 2, 10>}]} {
    %c0 = arith.constant 0 : index
    %c0_0 = arith.constant 0 : index
    %c0_1 = arith.constant 0 : index
    %0 = vector.load %arg1[%c0, %c0_0, %c0_1] : memref<5x2x80xbf16, #tpu.memory_space<vmem>>, vector<1x2x80xbf16>
    %1 = vector.shape_cast %0 : vector<1x2x80xbf16> to vector<2x80xbf16>
    %c0_2 = arith.constant 0 : index
    %c0_3 = arith.constant 0 : index
    %c0_4 = arith.constant 0 : index
    %2 = vector.load %arg2[%c0_2, %c0_3, %c0_4] : memref<5x80x128xbf16, #tpu.memory_space<vmem>>, vector<1x80x128xbf16>
    %3 = vector.shape_cast %2 : vector<1x80x128xbf16> to vector<80x128xbf16>
    %cst = arith.constant dense<0.000000e+00> : vector<2x128xf32>
    %4 = tpu.matmul %1, %3, %cst {dimension_numbers = #tpu.dot_dimension_numbers<[1], [0], [0], [1], [0, 0, 1, 1], [], []>} : vector<2x80xbf16>, vector<80x128xbf16>, vector<2x128xf32> -> vector<2x128xf32>
    %c1 = arith.constant 1 : index
    %c0_5 = arith.constant 0 : index
    %c0_6 = arith.constant 0 : index
    %5 = vector.load %arg1[%c1, %c0_5, %c0_6] : memref<5x2x80xbf16, #tpu.memory_space<vmem>>, vector<1x2x80xbf16>
    %6 = vector.shape_cast %5 : vector<1x2x80xbf16> to vector<2x80xbf16>
    %c1_7 = arith.constant 1 : index
    %c0_8 = arith.constant 0 : index
    %c0_9 = arith.constant 0 : index
    %7 = vector.load %arg2[%c1_7, %c0_8, %c0_9] : memref<5x80x128xbf16, #tpu.memory_space<vmem>>, vector<1x80x128xbf16>
    %8 = vector.shape_cast %7 : vector<1x80x128xbf16> to vector<80x128xbf16>
    %cst_10 = arith.constant dense<0.000000e+00> : vector<2x128xf32>
    %9 = tpu.matmul %6, %8, %cst_10 {dimension_numbers = #tpu.dot_dimension_numbers<[1], [0], [0], [1], [0, 0, 1, 1], [], []>} : vector<2x80xbf16>, vector<80x128xbf16>, vector<2x128xf32> -> vector<2x128xf32>
    %10 = arith.addf %4, %9 : vector<2x128xf32>
    %c2 = arith.constant 2 : index
    %c0_11 = arith.constant 0 : index
    %c0_12 = arith.constant 0 : index
    %11 = vector.load %arg1[%c2, %c0_11, %c0_12] : memref<5x2x80xbf16, #tpu.memory_space<vmem>>, vector<1x2x80xbf16>
    %12 = vector.shape_cast %11 : vector<1x2x80xbf16> to vector<2x80xbf16>
    %c2_13 = arith.constant 2 : index
    %c0_14 = arith.constant 0 : index
    %c0_15 = arith.constant 0 : index
    %13 = vector.load %arg2[%c2_13, %c0_14, %c0_15] : memref<5x80x128xbf16, #tpu.memory_space<vmem>>, vector<1x80x128xbf16>
    %14 = vector.shape_cast %13 : vector<1x80x128xbf16> to vector<80x128xbf16>
    %cst_16 = arith.constant dense<0.000000e+00> : vector<2x128xf32>
    %15 = tpu.matmul %12, %14, %cst_16 {dimension_numbers = #tpu.dot_dimension_numbers<[1], [0], [0], [1], [0, 0, 1, 1], [], []>} : vector<2x80xbf16>, vector<80x128xbf16>, vector<2x128xf32> -> vector<2x128xf32>
    %16 = arith.addf %10, %15 : vector<2x128xf32>
    %c3 = arith.constant 3 : index
    %c0_17 = arith.constant 0 : index
    %c0_18 = arith.constant 0 : index
    %17 = vector.load %arg1[%c3, %c0_17, %c0_18] : memref<5x2x80xbf16, #tpu.memory_space<vmem>>, vector<1x2x80xbf16>
    %18 = vector.shape_cast %17 : vector<1x2x80xbf16> to vector<2x80xbf16>
    %c3_19 = arith.constant 3 : index
    %c0_20 = arith.constant 0 : index
    %c0_21 = arith.constant 0 : index
    %19 = vector.load %arg2[%c3_19, %c0_20, %c0_21] : memref<5x80x128xbf16, #tpu.memory_space<vmem>>, vector<1x80x128xbf16>
    %20 = vector.shape_cast %19 : vector<1x80x128xbf16> to vector<80x128xbf16>
    %cst_22 = arith.constant dense<0.000000e+00> : vector<2x128xf32>
    %21 = tpu.matmul %18, %20, %cst_22 {dimension_numbers = #tpu.dot_dimension_numbers<[1], [0], [0], [1], [0, 0, 1, 1], [], []>} : vector<2x80xbf16>, vector<80x128xbf16>, vector<2x128xf32> -> vector<2x128xf32>
    %22 = arith.addf %16, %21 : vector<2x128xf32>
    %c4 = arith.constant 4 : index
    %c0_23 = arith.constant 0 : index
    %c0_24 = arith.constant 0 : index
    %23 = vector.load %arg1[%c4, %c0_23, %c0_24] : memref<5x2x80xbf16, #tpu.memory_space<vmem>>, vector<1x2x80xbf16>
    %24 = vector.shape_cast %23 : vector<1x2x80xbf16> to vector<2x80xbf16>
    %c4_25 = arith.constant 4 : index
    %c0_26 = arith.constant 0 : index
    %c0_27 = arith.constant 0 : index
    %25 = vector.load %arg2[%c4_25, %c0_26, %c0_27] : memref<5x80x128xbf16, #tpu.memory_space<vmem>>, vector<1x80x128xbf16>
    %26 = vector.shape_cast %25 : vector<1x80x128xbf16> to vector<80x128xbf16>
    %cst_28 = arith.constant dense<0.000000e+00> : vector<2x128xf32>
    %27 = tpu.matmul %24, %26, %cst_28 {dimension_numbers = #tpu.dot_dimension_numbers<[1], [0], [0], [1], [0, 0, 1, 1], [], []>} : vector<2x80xbf16>, vector<80x128xbf16>, vector<2x128xf32> -> vector<2x128xf32>
    %28 = arith.addf %22, %27 : vector<2x128xf32>
    %c0_29 = arith.constant 0 : index
    %c0_30 = arith.constant 0 : index
    %29 = vector.load %arg3[%c0_29, %c0_30] : memref<1x128xf32, #tpu.memory_space<vmem>>, vector<1x128xf32>
    %30 = vector.broadcast %29 : vector<1x128xf32> to vector<2x128xf32>
    %31 = arith.addf %28, %30 : vector<2x128xf32>
    %32 = math.tanh %31 : vector<2x128xf32>
    %33 = arith.truncf %32 : vector<2x128xf32> to vector<2x128xbf16>
    %c0_31 = arith.constant 0 : index
    %c0_32 = arith.constant 0 : index
    %34 = vector.load %arg4[%c0_31, %c0_32] : memref<128x128xbf16, #tpu.memory_space<vmem>>, vector<128x128xbf16>
    %cst_33 = arith.constant dense<0.000000e+00> : vector<2x128xf32>
    %35 = tpu.matmul %33, %34, %cst_33 {dimension_numbers = #tpu.dot_dimension_numbers<[1], [0], [0], [1], [0, 0, 1, 1], [], []>} : vector<2x128xbf16>, vector<128x128xbf16>, vector<2x128xf32> -> vector<2x128xf32>
    %c0_34 = arith.constant 0 : index
    %c0_35 = arith.constant 0 : index
    %36 = vector.load %arg5[%c0_34, %c0_35] : memref<1x128xf32, #tpu.memory_space<vmem>>, vector<1x128xf32>
    %37 = vector.broadcast %36 : vector<1x128xf32> to vector<2x128xf32>
    %38 = arith.addf %35, %37 : vector<2x128xf32>
    %39 = math.tanh %38 : vector<2x128xf32>
    %40 = arith.truncf %39 : vector<2x128xf32> to vector<2x128xbf16>
    %c0_36 = arith.constant 0 : index
    %c0_37 = arith.constant 0 : index
    %41 = vector.load %arg6[%c0_36, %c0_37] : memref<128x10xbf16, #tpu.memory_space<vmem>>, vector<128x10xbf16>
    %cst_38 = arith.constant dense<0.000000e+00> : vector<2x10xf32>
    %42 = tpu.matmul %40, %41, %cst_38 {dimension_numbers = #tpu.dot_dimension_numbers<[1], [0], [0], [1], [0, 0, 1, 1], [], []>} : vector<2x128xbf16>, vector<128x10xbf16>, vector<2x10xf32> -> vector<2x10xf32>
    %c0_39 = arith.constant 0 : index
    %c0_40 = arith.constant 0 : index
    %43 = vector.load %arg7[%c0_39, %c0_40] : memref<1x10xf32, #tpu.memory_space<vmem>>, vector<1x10xf32>
    %44 = vector.broadcast %43 : vector<1x10xf32> to vector<2x10xf32>
    %45 = arith.addf %42, %44 : vector<2x10xf32>
    %c0_41 = arith.constant 0 : index
    %c0_42 = arith.constant 0 : index
    %46 = vector.load %arg8[%c0_41, %c0_42] : memref<2x10xf32, #tpu.memory_space<vmem>>, vector<2x10xf32>
    tpu.vector_store %arg8[%c0_41, %c0_42], %45 {strides = array<i32>} : memref<2x10xf32, #tpu.memory_space<vmem>>, vector<2x10xf32>,
    %cst_43 = arith.constant dense<0xFF800000> : vector<2xf32>
    %47 = vector.multi_reduction <maximumf>, %45, %cst_43 [1] : vector<2x10xf32> to vector<2xf32>
    %48 = vector.shape_cast %47 : vector<2xf32> to vector<2x1xf32>
    %49 = vector.broadcast %48 : vector<2x1xf32> to vector<2x10xf32>
    %50 = arith.subf %45, %49 : vector<2x10xf32>
    %51 = math.exp %50 : vector<2x10xf32>
    %cst_44 = arith.constant dense<0.000000e+00> : vector<2xf32>
    %52 = vector.multi_reduction <add>, %51, %cst_44 [1] : vector<2x10xf32> to vector<2xf32>
    %53 = vector.shape_cast %52 : vector<2xf32> to vector<2x1xf32>
    %54 = tpu.reciprocal %53 : vector<2x1xf32> -> vector<2x1xf32>
    %55 = vector.broadcast %54 : vector<2x1xf32> to vector<2x10xf32>
    %56 = arith.mulf %51, %55 : vector<2x10xf32>
    %c0_45 = arith.constant 0 : index
    %c0_46 = arith.constant 0 : index
    %57 = vector.load %arg9[%c0_45, %c0_46] : memref<2x10xf32, #tpu.memory_space<vmem>>, vector<2x10xf32>
    tpu.vector_store %arg9[%c0_45, %c0_46], %56 {strides = array<i32>} : memref<2x10xf32, #tpu.memory_space<vmem>>, vector<2x10xf32>,
    return
  }
  func.func @transform_0(%arg0: i32) -> (i32, i32, i32) {
    %c0_i32 = arith.constant 0 : i32
    %c0_i32_0 = arith.constant 0 : i32
    %c0_i32_1 = arith.constant 0 : i32
    return %c0_i32, %arg0, %c0_i32_0 : i32, i32, i32
  }
  func.func @transform_1(%arg0: i32) -> (i32, i32, i32) {
    %c0_i32 = arith.constant 0 : i32
    %c0_i32_0 = arith.constant 0 : i32
    %c0_i32_1 = arith.constant 0 : i32
    %c0_i32_2 = arith.constant 0 : i32
    return %c0_i32, %c0_i32_0, %c0_i32_1 : i32, i32, i32
  }
  func.func @transform_2(%arg0: i32) -> (i32, i32) {
    %c0_i32 = arith.constant 0 : i32
    %c0_i32_0 = arith.constant 0 : i32
    %c0_i32_1 = arith.constant 0 : i32
    return %c0_i32, %c0_i32_0 : i32, i32
  }
  func.func @transform_3(%arg0: i32) -> (i32, i32) {
    %c0_i32 = arith.constant 0 : i32
    %c0_i32_0 = arith.constant 0 : i32
    %c0_i32_1 = arith.constant 0 : i32
    return %c0_i32, %c0_i32_0 : i32, i32
  }
  func.func @transform_4(%arg0: i32) -> (i32, i32) {
    %c0_i32 = arith.constant 0 : i32
    %c0_i32_0 = arith.constant 0 : i32
    %c0_i32_1 = arith.constant 0 : i32
    return %c0_i32, %c0_i32_0 : i32, i32
  }
  func.func @transform_5(%arg0: i32) -> (i32, i32) {
    %c0_i32 = arith.constant 0 : i32
    %c0_i32_0 = arith.constant 0 : i32
    %c0_i32_1 = arith.constant 0 : i32
    return %c0_i32, %c0_i32_0 : i32, i32
  }
  func.func @transform_6(%arg0: i32) -> (i32, i32) {
    %c0_i32 = arith.constant 0 : i32
    %c0_i32_0 = arith.constant 0 : i32
    %c0_i32_1 = arith.constant 0 : i32
    return %c0_i32, %c0_i32_0 : i32, i32
  }
  func.func @transform_7(%arg0: i32) -> (i32, i32) {
    %c0_i32 = arith.constant 0 : i32
    %c0_i32_0 = arith.constant 0 : i32
    return %arg0, %c0_i32 : i32, i32
  }
  func.func @transform_8(%arg0: i32) -> (i32, i32) {
    %c0_i32 = arith.constant 0 : i32
    %c0_i32_0 = arith.constant 0 : i32
    return %arg0, %c0_i32 : i32, i32
  }
}

</mosaic_0001>

<llo_original>
// kernel: tile.13
$region0: #{tile.13}
  #allocation0 [shape = 's32[1]{0}', space=sflag, size = 0x4, scoped, tag = 'scoped memory for tile.13']
  %s0 = inlined_call_operand.vmem [shape: f32[6], index: 0, kind: input, shape index: {}]
  %s1 = inlined_call_operand.vmem [shape: f32[56,6], index: 1, kind: output, shape index: {}]
  // Predicated region
  $region2: #{tile.13} parent=0 // pred_check
    _
  $region3: #{tile.13} parent=0 // pred_check_branch
    %3 = sbr.rel (0) target = $region5
  $region4: #{tile.13} parent=0 // pred_region
    _
  $region5: #{tile.13} parent=0 // pred_fallthru
    _
  %v4 = vld [vmem:[%s0] ss:$0 sm:$0xff]
  %5 = vst [vmem:[%s1] sm:$0xff] %v4
  %s6 = scalar_lea.vmem %s1, 8
  %7 = vst [vmem:[%s6] sm:$0xff] %v4
  %s8 = scalar_lea.vmem %s1, 16
  %9 = vst [vmem:[%s8] sm:$0xff] %v4
  %s10 = scalar_lea.vmem %s1, 24
  %11 = vst [vmem:[%s10] sm:$0xff] %v4
  %s12 = scalar_lea.vmem %s1, 32
  %13 = vst [vmem:[%s12] sm:$0xff] %v4
  %s14 = scalar_lea.vmem %s1, 40
  %15 = vst [vmem:[%s14] sm:$0xff] %v4
  %s16 = scalar_lea.vmem %s1, 48
  %17 = vst [vmem:[%s16] sm:$0xff] %v4

// kernel: tile.14
$region0: #{tile.14}
  %s0 = inlined_call_operand.vmem [shape: f32[56,6], index: 0, kind: input, shape index: {}]
  %s1 = inlined_call_operand.vmem [shape: f32[1,336], index: 1, kind: output, shape index: {}]
  $region1: #{tile.14} parent=0
    #allocation0 [shape = 'u8[12288]{0}', space=vmem, size = 0x3000, scoped, tag = 'scoped mem for output reshape']
    %v2 = vld [vmem:[%s0] sm:$0x1]
    %vm3 = vcmask 48128
    %4 = vst.msk [vmem:[#allocation0] sm:$0x1] %vm3, %v2
    %s5 = scalar_lea.vmem %s0, 21
    %v6 = vld [vmem:[%s5] sm:$0x1]
    %s7 = scalar_lea.vmem %s0, 21
    %v8 = vld [vmem:[%s7] sm:$0x1]
    %vm9 = vcmask 15360
    %v10 = vsel %vm9, %v8, %v6
    %11 = vrot.lane.b32.xlu0 %v10, 126
    %v12 = vpop.permute.xlu0 %11
    %vm13 = vcmask 31744
    %s14 = scalar_lea.vmem [#allocation0], 8
    %15 = vst.msk [vmem:[%s14] sm:$0x1] %vm13, %v12
    %vm16 = vcmask 1048560
    %17 = vst.msk [vmem:[#allocation0] sm:$0x1] %vm16, %v12
    %s18 = scalar_lea.vmem %s0, 42
    %v19 = vld [vmem:[%s18] sm:$0x1]
    %s20 = scalar_lea.vmem %s0, 42
    %v21 = vld [vmem:[%s20] sm:$0x1]
    %vm22 = vcmask 31744
    %v23 = vsel %vm22, %v21, %v19
    %24 = vrot.lane.b32.xlu0 %v23, 124
    %v25 = vpop.permute.xlu0 %24
    %vm26 = vcmask 15360
    %s27 = scalar_lea.vmem [#allocation0], 16
    %28 = vst.msk [vmem:[%s27] sm:$0x1] %vm26, %v25
    %vm29 = vcmask 1048544
    %s30 = scalar_lea.vmem [#allocation0], 8
    %31 = vst.msk [vmem:[%s30] sm:$0x1] %vm29, %v25
    %s32 = scalar_lea.vmem %s0, 20
    %v33 = vld [vmem:[%s32] sm:$0x1]
    %34 = vrot.lane.b32.xlu0 %v33, 120
    %v35 = vpop.permute.xlu0 %34
    %vm36 = vcmask 1032128
    %37 = vst.msk [vmem:[#allocation0] sm:$0x1] %vm36, %v35
    %s38 = scalar_lea.vmem %s0, 41
    %v39 = vld [vmem:[%s38] sm:$0x1]
    %40 = vrot.lane.b32.xlu0 %v39, 118
    %v41 = vpop.permute.xlu0 %40
    %vm42 = vcmask 1015728
    %s43 = scalar_lea.vmem [#allocation0], 8
    %44 = vst.msk [vmem:[%s43] sm:$0x1] %vm42, %v41
    %s45 = scalar_lea.vmem %s0, 19
    %v46 = vld [vmem:[%s45] sm:$0x1]
    %47 = vrot.lane.b32.xlu0 %v46, 114
    %v48 = vpop.permute.xlu0 %47
    %vm49 = vcmask 982928
    %50 = vst.msk [vmem:[#allocation0] sm:$0x1] %vm49, %v48
    %s51 = scalar_lea.vmem %s0, 40
    %v52 = vld [vmem:[%s51] sm:$0x1]
    %53 = vrot.lane.b32.xlu0 %v52, 112
    %v54 = vpop.permute.xlu0 %53
    %vm55 = vcmask 966528
    %s56 = scalar_lea.vmem [#allocation0], 8
    %57 = vst.msk [vmem:[%s56] sm:$0x1] %vm55, %v54
    %s58 = scalar_lea.vmem %s0, 18
    %v59 = vld [vmem:[%s58] sm:$0x1]
    %60 = vrot.lane.b32.xlu0 %v59, 108
    %v61 = vpop.permute.xlu0 %60
    %vm62 = vcmask 933728
    %63 = vst.msk [vmem:[#allocation0] sm:$0x1] %vm62, %v61
    %s64 = scalar_lea.vmem %s0, 39
    %v65 = vld [vmem:[%s64] sm:$0x1]
    %66 = vrot.lane.b32.xlu0 %v65, 106
    %v67 = vpop.permute.xlu0 %66
    %vm68 = vcmask 917328
    %s69 = scalar_lea.vmem [#allocation0], 8
    %70 = vst.msk [vmem:[%s69] sm:$0x1] %vm68, %v67
    %s71 = scalar_lea.vmem %s0, 17
    %v72 = vld [vmem:[%s71] sm:$0x1]
    %73 = vrot.lane.b32.xlu0 %v72, 102
    %v74 = vpop.permute.xlu0 %73
    %vm75 = vcmask 884528
    %76 = vst.msk [vmem:[#allocation0] sm:$0x1] %vm75, %v74
    %s77 = scalar_lea.vmem %s0, 38
    %v78 = vld [vmem:[%s77] sm:$0x1]
    %79 = vrot.lane.b32.xlu0 %v78, 100
    %v80 = vpop.permute.xlu0 %79
    %vm81 = vcmask 868128
    %s82 = scalar_lea.vmem [#allocation0], 8
    %83 = vst.msk [vmem:[%s82] sm:$0x1] %vm81, %v80
    %s84 = scalar_lea.vmem %s0, 16
    %v85 = vld [vmem:[%s84] sm:$0x1]
    %86 = vrot.lane.b32.xlu0 %v85, 96
    %v87 = vpop.permute.xlu0 %86
    %vm88 = vcmask 835328
    %89 = vst.msk [vmem:[#allocation0] sm:$0x1] %vm88, %v87
    %s90 = scalar_lea.vmem %s0, 37
    %v91 = vld [vmem:[%s90] sm:$0x1]
    %92 = vrot.lane.b32.xlu0 %v91, 94
    %v93 = vpop.permute.xlu0 %92
    %vm94 = vcmask 818928
    %s95 = scalar_lea.vmem [#allocation0], 8
    %96 = vst.msk [vmem:[%s95] sm:$0x1] %vm94, %v93
    %s97 = scalar_lea.vmem %s0, 15
    %v98 = vld [vmem:[%s97] sm:$0x1]
    %99 = vrot.lane.b32.xlu0 %v98, 90
    %v100 = vpop.permute.xlu0 %99
    %vm101 = vcmask 786128
    %102 = vst.msk [vmem:[#allocation0] sm:$0x1] %vm101, %v100
    %s103 = scalar_lea.vmem %s0, 36
    %v104 = vld [vmem:[%s103] sm:$0x1]
    %105 = vrot.lane.b32.xlu0 %v104, 88
    %v106 = vpop.permute.xlu0 %105
    %vm107 = vcmask 769728
    %s108 = scalar_lea.vmem [#allocation0], 8
    %109 = vst.msk [vmem:[%s108] sm:$0x1] %vm107, %v106
    %s110 = scalar_lea.vmem %s0, 14
    %v111 = vld [vmem:[%s110] sm:$0x1]
    %112 = vrot.lane.b32.xlu0 %v111, 84
    %v113 = vpop.permute.xlu0 %112
    %vm114 = vcmask 736928
    %115 = vst.msk [vmem:[#allocation0] sm:$0x1] %vm114, %v113
    %s116 = scalar_lea.vmem %s0, 35
    %v117 = vld [vmem:[%s116] sm:$0x1]
    %118 = vrot.lane.b32.xlu0 %v117, 82
    %v119 = vpop.permute.xlu0 %118
    %vm120 = vcmask 720528
    %s121 = scalar_lea.vmem [#allocation0], 8
    %122 = vst.msk [vmem:[%s121] sm:$0x1] %vm120, %v119
    %s123 = scalar_lea.vmem %s0, 13
    %v124 = vld [vmem:[%s123] sm:$0x1]
    %125 = vrot.lane.b32.xlu0 %v124, 78
    %v126 = vpop.permute.xlu0 %125
    %vm127 = vcmask 687728
    %128 = vst.msk [vmem:[#allocation0] sm:$0x1] %vm127, %v126
    %s129 = scalar_lea.vmem %s0, 34
    %v130 = vld [vmem:[%s129] sm:$0x1]
    %131 = vrot.lane.b32.xlu0 %v130, 76
    %v132 = vpop.permute.xlu0 %131
    %vm133 = vcmask 671328
    %s134 = scalar_lea.vmem [#allocation0], 8
    %135 = vst.msk [vmem:[%s134] sm:$0x1] %vm133, %v132
    %s136 = scalar_lea.vmem %s0, 55
    %v137 = vld [vmem:[%s136] sm:$0x1]
    %138 = vrot.lane.b32.xlu0 %v137, 74
    %v139 = vpop.permute.xlu0 %138
    %vm140 = vcmask 654928
    %s141 = scalar_lea.vmem [#allocation0], 16
    %142 = vst.msk [vmem:[%s141] sm:$0x1] %vm140, %v139
    %s143 = scalar_lea.vmem %s0, 12
    %v144 = vld [vmem:[%s143] sm:$0x1]
    %145 = vrot.lane.b32.xlu0 %v144, 72
    %v146 = vpop.permute.xlu0 %145
    %vm147 = vcmask 638528
    %148 = vst.msk [vmem:[#allocation0] sm:$0x1] %vm147, %v146
    %s149 = scalar_lea.vmem %s0, 33
    %v150 = vld [vmem:[%s149] sm:$0x1]
    %151 = vrot.lane.b32.xlu0 %v150, 70
    %v152 = vpop.permute.xlu0 %151
    %vm153 = vcmask 622128
    %s154 = scalar_lea.vmem [#allocation0], 8
    %155 = vst.msk [vmem:[%s154] sm:$0x1] %vm153, %v152
    %s156 = scalar_lea.vmem %s0, 54
    %v157 = vld [vmem:[%s156] sm:$0x1]
    %158 = vrot.lane.b32.xlu0 %v157, 68
    %v159 = vpop.permute.xlu0 %158
    %vm160 = vcmask 605728
    %s161 = scalar_lea.vmem [#allocation0], 16
    %162 = vst.msk [vmem:[%s161] sm:$0x1] %vm160, %v159
    %s163 = scalar_lea.vmem %s0, 11
    %v164 = vld [vmem:[%s163] sm:$0x1]
    %165 = vrot.lane.b32.xlu0 %v164, 66
    %v166 = vpop.permute.xlu0 %165
    %vm167 = vcmask 589328
    %168 = vst.msk [vmem:[#allocation0] sm:$0x1] %vm167, %v166
    %s169 = scalar_lea.vmem %s0, 32
    %v170 = vld [vmem:[%s169] sm:$0x1]
    %171 = vrot.lane.b32.xlu0 %v170, 64
    %v172 = vpop.permute.xlu0 %171
    %vm173 = vcmask 572928
    %s174 = scalar_lea.vmem [#allocation0], 8
    %175 = vst.msk [vmem:[%s174] sm:$0x1] %vm173, %v172
    %s176 = scalar_lea.vmem %s0, 53
    %v177 = vld [vmem:[%s176] sm:$0x1]
    %178 = vrot.lane.b32.xlu0 %v177, 62
    %v179 = vpop.permute.xlu0 %178
    %vm180 = vcmask 556528
    %s181 = scalar_lea.vmem [#allocation0], 16
    %182 = vst.msk [vmem:[%s181] sm:$0x1] %vm180, %v179
    %s183 = scalar_lea.vmem %s0, 10
    %v184 = vld [vmem:[%s183] sm:$0x1]
    %185 = vrot.lane.b32.xlu0 %v184, 60
    %v186 = vpop.permute.xlu0 %185
    %vm187 = vcmask 540128
    %188 = vst.msk [vmem:[#allocation0] sm:$0x1] %vm187, %v186
    %s189 = scalar_lea.vmem %s0, 31
    %v190 = vld [vmem:[%s189] sm:$0x1]
    %191 = vrot.lane.b32.xlu0 %v190, 58
    %v192 = vpop.permute.xlu0 %191
    %vm193 = vcmask 523728
    %s194 = scalar_lea.vmem [#allocation0], 8
    %195 = vst.msk [vmem:[%s194] sm:$0x1] %vm193, %v192
    %s196 = scalar_lea.vmem %s0, 52
    %v197 = vld [vmem:[%s196] sm:$0x1]
    %198 = vrot.lane.b32.xlu0 %v197, 56
    %v199 = vpop.permute.xlu0 %198
    %vm200 = vcmask 507328
    %s201 = scalar_lea.vmem [#allocation0], 16
    %202 = vst.msk [vmem:[%s201] sm:$0x1] %vm200, %v199
    %s203 = scalar_lea.vmem %s0, 9
    %v204 = vld [vmem:[%s203] sm:$0x1]
    %205 = vrot.lane.b32.xlu0 %v204, 54
    %v206 = vpop.permute.xlu0 %205
    %vm207 = vcmask 490928
    %208 = vst.msk [vmem:[#allocation0] sm:$0x1] %vm207, %v206
    %s209 = scalar_lea.vmem %s0, 30
    %v210 = vld [vmem:[%s209] sm:$0x1]
    %211 = vrot.lane.b32.xlu0 %v210, 52
    %v212 = vpop.permute.xlu0 %211
    %vm213 = vcmask 474528
    %s214 = scalar_lea.vmem [#allocation0], 8
    %215 = vst.msk [vmem:[%s214] sm:$0x1] %vm213, %v212
    %s216 = scalar_lea.vmem %s0, 51
    %v217 = vld [vmem:[%s216] sm:$0x1]
    %218 = vrot.lane.b32.xlu0 %v217, 50
    %v219 = vpop.permute.xlu0 %218
    %vm220 = vcmask 458128
    %s221 = scalar_lea.vmem [#allocation0], 16
    %222 = vst.msk [vmem:[%s221] sm:$0x1] %vm220, %v219
    %s223 = scalar_lea.vmem %s0, 8
    %v224 = vld [vmem:[%s223] sm:$0x1]
    %225 = vrot.lane.b32.xlu0 %v224, 48
    %v226 = vpop.permute.xlu0 %225
    %vm227 = vcmask 441728
    %228 = vst.msk [vmem:[#allocation0] sm:$0x1] %vm227, %v226
    %s229 = scalar_lea.vmem %s0, 29
    %v230 = vld [vmem:[%s229] sm:$0x1]
    %231 = vrot.lane.b32.xlu0 %v230, 46
    %v232 = vpop.permute.xlu0 %231
    %vm233 = vcmask 425328
    %s234 = scalar_lea.vmem [#allocation0], 8
    %235 = vst.msk [vmem:[%s234] sm:$0x1] %vm233, %v232
    %s236 = scalar_lea.vmem %s0, 50
    %v237 = vld [vmem:[%s236] sm:$0x1]
    %238 = vrot.lane.b32.xlu0 %v237, 44
    %v239 = vpop.permute.xlu0 %238
    %vm240 = vcmask 408928
    %s241 = scalar_lea.vmem [#allocation0], 16
    %242 = vst.msk [vmem:[%s241] sm:$0x1] %vm240, %v239
    %s243 = scalar_lea.vmem %s0, 7
    %v244 = vld [vmem:[%s243] sm:$0x1]
    %245 = vrot.lane.b32.xlu0 %v244, 42
    %v246 = vpop.permute.xlu0 %245
    %vm247 = vcmask 392528
    %248 = vst.msk [vmem:[#allocation0] sm:$0x1] %vm247, %v246
    %s249 = scalar_lea.vmem %s0, 28
    %v250 = vld [vmem:[%s249] sm:$0x1]
    %251 = vrot.lane.b32.xlu0 %v250, 40
    %v252 = vpop.permute.xlu0 %251
    %vm253 = vcmask 376128
    %s254 = scalar_lea.vmem [#allocation0], 8
    %255 = vst.msk [vmem:[%s254] sm:$0x1] %vm253, %v252
    %s256 = scalar_lea.vmem %s0, 49
    %v257 = vld [vmem:[%s256] sm:$0x1]
    %258 = vrot.lane.b32.xlu0 %v257, 38
    %v259 = vpop.permute.xlu0 %258
    %vm260 = vcmask 359728
    %s261 = scalar_lea.vmem [#allocation0], 16
    %262 = vst.msk [vmem:[%s261] sm:$0x1] %vm260, %v259
    %s263 = scalar_lea.vmem %s0, 6
    %v264 = vld [vmem:[%s263] sm:$0x1]
    %265 = vrot.lane.b32.xlu0 %v264, 36
    %v266 = vpop.permute.xlu0 %265
    %vm267 = vcmask 343328
    %268 = vst.msk [vmem:[#allocation0] sm:$0x1] %vm267, %v266
    %s269 = scalar_lea.vmem %s0, 27
    %v270 = vld [vmem:[%s269] sm:$0x1]
    %271 = vrot.lane.b32.xlu0 %v270, 34
    %v272 = vpop.permute.xlu0 %271
    %vm273 = vcmask 326928
    %s274 = scalar_lea.vmem [#allocation0], 8
    %275 = vst.msk [vmem:[%s274] sm:$0x1] %vm273, %v272
    %s276 = scalar_lea.vmem %s0, 48
    %v277 = vld [vmem:[%s276] sm:$0x1]
    %278 = vrot.lane.b32.xlu0 %v277, 32
    %v279 = vpop.permute.xlu0 %278
    %vm280 = vcmask 310528
    %s281 = scalar_lea.vmem [#allocation0], 16
    %282 = vst.msk [vmem:[%s281] sm:$0x1] %vm280, %v279
    %s283 = scalar_lea.vmem %s0, 5
    %v284 = vld [vmem:[%s283] sm:$0x1]
    %285 = vrot.lane.b32.xlu0 %v284, 30
    %v286 = vpop.permute.xlu0 %285
    %vm287 = vcmask 294128
    %288 = vst.msk [vmem:[#allocation0] sm:$0x1] %vm287, %v286
    %s289 = scalar_lea.vmem %s0, 26
    %v290 = vld [vmem:[%s289] sm:$0x1]
    %291 = vrot.lane.b32.xlu0 %v290, 28
    %v292 = vpop.permute.xlu0 %291
    %vm293 = vcmask 277728
    %s294 = scalar_lea.vmem [#allocation0], 8
    %295 = vst.msk [vmem:[%s294] sm:$0x1] %vm293, %v292
    %s296 = scalar_lea.vmem %s0, 47
    %v297 = vld [vmem:[%s296] sm:$0x1]
    %298 = vrot.lane.b32.xlu0 %v297, 26
    %v299 = vpop.permute.xlu0 %298
    %vm300 = vcmask 261328
    %s301 = scalar_lea.vmem [#allocation0], 16
    %302 = vst.msk [vmem:[%s301] sm:$0x1] %vm300, %v299
    %s303 = scalar_lea.vmem %s0, 4
    %v304 = vld [vmem:[%s303] sm:$0x1]
    %305 = vrot.lane.b32.xlu0 %v304, 24
    %v306 = vpop.permute.xlu0 %305
    %vm307 = vcmask 244928
    %308 = vst.msk [vmem:[#allocation0] sm:$0x1] %vm307, %v306
    %s309 = scalar_lea.vmem %s0, 25
    %v310 = vld [vmem:[%s309] sm:$0x1]
    %311 = vrot.lane.b32.xlu0 %v310, 22
    %v312 = vpop.permute.xlu0 %311
    %vm313 = vcmask 228528
    %s314 = scalar_lea.vmem [#allocation0], 8
    %315 = vst.msk [vmem:[%s314] sm:$0x1] %vm313, %v312
    %s316 = scalar_lea.vmem %s0, 46
    %v317 = vld [vmem:[%s316] sm:$0x1]
    %318 = vrot.lane.b32.xlu0 %v317, 20
    %v319 = vpop.permute.xlu0 %318
    %vm320 = vcmask 212128
    %s321 = scalar_lea.vmem [#allocation0], 16
    %322 = vst.msk [vmem:[%s321] sm:$0x1] %vm320, %v319
    %s323 = scalar_lea.vmem %s0, 3
    %v324 = vld [vmem:[%s323] sm:$0x1]
    %325 = vrot.lane.b32.xlu0 %v324, 18
    %v326 = vpop.permute.xlu0 %325
    %vm327 = vcmask 195728
    %328 = vst.msk [vmem:[#allocation0] sm:$0x1] %vm327, %v326
    %s329 = scalar_lea.vmem %s0, 24
    %v330 = vld [vmem:[%s329] sm:$0x1]
    %331 = vrot.lane.b32.xlu0 %v330, 16
    %v332 = vpop.permute.xlu0 %331
    %vm333 = vcmask 179328
    %s334 = scalar_lea.vmem [#allocation0], 8
    %335 = vst.msk [vmem:[%s334] sm:$0x1] %vm333, %v332
    %s336 = scalar_lea.vmem %s0, 45
    %v337 = vld [vmem:[%s336] sm:$0x1]
    %338 = vrot.lane.b32.xlu0 %v337, 14
    %v339 = vpop.permute.xlu0 %338
    %vm340 = vcmask 162928
    %s341 = scalar_lea.vmem [#allocation0], 16
    %342 = vst.msk [vmem:[%s341] sm:$0x1] %vm340, %v339
    %s343 = scalar_lea.vmem %s0, 2
    %v344 = vld [vmem:[%s343] sm:$0x1]
    %345 = vrot.lane.b32.xlu0 %v344, 12
    %v346 = vpop.permute.xlu0 %345
    %vm347 = vcmask 146528
    %348 = vst.msk [vmem:[#allocation0] sm:$0x1] %vm347, %v346
    %s349 = scalar_lea.vmem %s0, 23
    %v350 = vld [vmem:[%s349] sm:$0x1]
    %351 = vrot.lane.b32.xlu0 %v350, 10
    %v352 = vpop.permute.xlu0 %351
    %vm353 = vcmask 130128
    %s354 = scalar_lea.vmem [#allocation0], 8
    %355 = vst.msk [vmem:[%s354] sm:$0x1] %vm353, %v352
    %s356 = scalar_lea.vmem %s0, 44
    %v357 = vld [vmem:[%s356] sm:$0x1]
    %358 = vrot.lane.b32.xlu0 %v357, 8
    %v359 = vpop.permute.xlu0 %358
    %vm360 = vcmask 113728
    %s361 = scalar_lea.vmem [#allocation0], 16
    %362 = vst.msk [vmem:[%s361] sm:$0x1] %vm360, %v359
    %s363 = scalar_lea.vmem %s0, 1
    %v364 = vld [vmem:[%s363] sm:$0x1]
    %365 = vrot.lane.b32.xlu0 %v364, 6
    %v366 = vpop.permute.xlu0 %365
    %vm367 = vcmask 97328
    %368 = vst.msk [vmem:[#allocation0] sm:$0x1] %vm367, %v366
    %s369 = scalar_lea.vmem %s0, 22
    %v370 = vld [vmem:[%s369] sm:$0x1]
    %371 = vrot.lane.b32.xlu0 %v370, 4
    %v372 = vpop.permute.xlu0 %371
    %vm373 = vcmask 80928
    %s374 = scalar_lea.vmem [#allocation0], 8
    %375 = vst.msk [vmem:[%s374] sm:$0x1] %vm373, %v372
    %s376 = scalar_lea.vmem %s0, 43
    %v377 = vld [vmem:[%s376] sm:$0x1]
    %378 = vrot.lane.b32.xlu0 %v377, 2
    %v379 = vpop.permute.xlu0 %378
    %vm380 = vcmask 64528
    %s381 = scalar_lea.vmem [#allocation0], 16
    %382 = vst.msk [vmem:[%s381] sm:$0x1] %vm380, %v379
    %s384 = sshllo.u32 0, 1
    %v386 = vld [vmem:[#allocation0] sm:%s384]
    %s387 = sshllo.u32 0, 1
    %388 = vst [vmem:[%s1] sm:%s387] %v386
    %s389 = scalar_lea.vmem [#allocation0], 8
    %v390 = vld [vmem:[%s389] sm:%s384]
    %s391 = sshllo.u32 0, 1
    %s392 = scalar_lea.vmem %s1, 1
    %393 = vst [vmem:[%s392] sm:%s391] %v390
    %s394 = scalar_lea.vmem [#allocation0], 16
    %v395 = vld [vmem:[%s394] sm:%s384]
    %s396 = sshllo.u32 0, 1
    %s397 = smul.addr 1, 2
    %s398 = scalar_lea.vmem %s1, %s397
    %399 = vst [vmem:[%s398] sm:%s396] %v395

// kernel: tile.18
$region0: #{tile.18}
  #allocation0 [shape = 's32[1]{0}', space=sflag, size = 0x4, scoped, tag = 'scoped memory for tile.18']
  %s0 = inlined_call_operand.vmem [shape: f32[16], index: 0, kind: input, shape index: {}]
  %s1 = inlined_call_operand.vmem [shape: f32[20,16], index: 1, kind: output, shape index: {}]
  // Predicated region
  $region2: #{tile.18} parent=0 // pred_check
    _
  $region3: #{tile.18} parent=0 // pred_check_branch
    %3 = sbr.rel (0) target = $region5
  $region4: #{tile.18} parent=0 // pred_region
    _
  $region5: #{tile.18} parent=0 // pred_fallthru
    _
  %v4 = vld [vmem:[%s0] ss:$0 sm:$0xff]
  %5 = vst [vmem:[%s1] sm:$0xff] %v4
  %s6 = scalar_lea.vmem %s1, 8
  %7 = vst [vmem:[%s6] sm:$0xff] %v4
  %s8 = scalar_lea.vmem %s1, 16
  %9 = vst [vmem:[%s8] sm:$0xff] %v4

// kernel: tile.19
$region0: #{tile.19}
  %s0 = inlined_call_operand.vmem [shape: f32[20,16], index: 0, kind: input, shape index: {}]
  %s1 = inlined_call_operand.vmem [shape: f32[1,320], index: 1, kind: output, shape index: {}]
  $region1: #{tile.19} parent=0
    #allocation0 [shape = 'u8[12288]{0}', space=vmem, size = 0x3000, scoped, tag = 'scoped mem for output reshape']
    %v2 = vld [vmem:[%s0] ss:$8 sm:$0x7]
    %vm3 = vcmask 130048
    %4 = vst.msk [vmem:[#allocation0] ss:$8 sm:$0x7] %vm3, %v2
    %s5 = scalar_lea.vmem %s0, 7
    %s6 = smov 3
    %v7 = vld [vmem:[%s5] ss:$8 sm:%s6]
    %8 = vrot.lane.b32.xlu0 %v7, 112
    %v9 = vpop.permute.xlu0 %8
    %vm10 = vcmask 1048448
    %11 = vst.msk [vmem:[#allocation0] ss:$8 sm:$0x3] %vm10, %v9
    %s12 = scalar_lea.vmem %s0, 6
    %s13 = smov 3
    %v14 = vld [vmem:[%s12] ss:$8 sm:%s13]
    %15 = vrot.lane.b32.xlu0 %v14, 96
    %v16 = vpop.permute.xlu0 %15
    %vm17 = vcmask 917248
    %18 = vst.msk [vmem:[#allocation0] ss:$8 sm:$0x3] %vm17, %v16
    %s19 = scalar_lea.vmem %s0, 5
    %s20 = smov 3
    %v21 = vld [vmem:[%s19] ss:$8 sm:%s20]
    %22 = vrot.lane.b32.xlu0 %v21, 80
    %v23 = vpop.permute.xlu0 %22
    %vm24 = vcmask 786048
    %25 = vst.msk [vmem:[#allocation0] ss:$8 sm:$0x3] %vm24, %v23
    %s26 = scalar_lea.vmem %s0, 4
    %s27 = smov 3
    %v28 = vld [vmem:[%s26] ss:$8 sm:%s27]
    %29 = vrot.lane.b32.xlu0 %v28, 64
    %v30 = vpop.permute.xlu0 %29
    %vm31 = vcmask 654848
    %32 = vst.msk [vmem:[#allocation0] ss:$8 sm:$0x3] %vm31, %v30
    %s33 = scalar_lea.vmem %s0, 3
    %v34 = vld [vmem:[%s33] ss:$8 sm:$0x7]
    %35 = vrot.lane.b32.xlu0 %v34, 48
    %v36 = vpop.permute.xlu0 %35
    %vm37 = vcmask 523648
    %38 = vst.msk [vmem:[#allocation0] ss:$8 sm:$0x7] %vm37, %v36
    %s39 = scalar_lea.vmem %s0, 2
    %v40 = vld [vmem:[%s39] ss:$8 sm:$0x7]
    %41 = vrot.lane.b32.xlu0 %v40, 32
    %v42 = vpop.permute.xlu0 %41
    %vm43 = vcmask 392448
    %44 = vst.msk [vmem:[#allocation0] ss:$8 sm:$0x7] %vm43, %v42
    %s45 = scalar_lea.vmem %s0, 1
    %v46 = vld [vmem:[%s45] ss:$8 sm:$0x7]
    %47 = vrot.lane.b32.xlu0 %v46, 16
    %v48 = vpop.permute.xlu0 %47
    %vm49 = vcmask 261248
    %50 = vst.msk [vmem:[#allocation0] ss:$8 sm:$0x7] %vm49, %v48
    %s52 = sshllo.u32 0, 1
    %v54 = vld [vmem:[#allocation0] sm:%s52]
    %s55 = sshllo.u32 0, 1
    %56 = vst [vmem:[%s1] sm:%s55] %v54
    %s57 = scalar_lea.vmem [#allocation0], 8
    %v58 = vld [vmem:[%s57] sm:%s52]
    %s59 = sshllo.u32 0, 1
    %s60 = scalar_lea.vmem %s1, 1
    %61 = vst [vmem:[%s60] sm:%s59] %v58
    %s62 = scalar_lea.vmem [#allocation0], 16
    %v63 = vld [vmem:[%s62] sm:%s52]
    %s64 = sshllo.u32 0, 1
    %s65 = smul.addr 1, 2
    %s66 = scalar_lea.vmem %s1, %s65
    %67 = vst [vmem:[%s66] sm:%s64] %v63

// kernel: lenet5_forward.4
$region0: #{lenet5_forward.4}
  #allocation0 [shape = 'u32[]', space=smem, size = 0x4, offset = 0x4, fixed_abs, tag = 'smem constant byte address 0x4 - core index']
  #allocation1 [shape = 'u32[144,128]{1,0:T(1,128)}', space=vmem, size = 0x12000, scoped, tag = 'internal scratch']
  %s0 = inlined_call_operand.vmem [shape: bf16[14,2,84], index: 0, kind: input, shape index: {}, may-alias: {0,1,2,3,4,5}]
  %s1 = inlined_call_operand.vmem [shape: bf16[14,2,84], index: 1, kind: input, shape index: {}, may-alias: {0,1,2,3,4,5}]
  %s2 = inlined_call_operand.vmem [shape: bf16[14,2,84], index: 2, kind: input, shape index: {}, may-alias: {0,1,2,3,4,5}]
  %s3 = inlined_call_operand.vmem [shape: bf16[14,2,84], index: 3, kind: input, shape index: {}, may-alias: {0,1,2,3,4,5}]
  %s4 = inlined_call_operand.vmem [shape: bf16[14,2,84], index: 4, kind: input, shape index: {}, may-alias: {0,1,2,3,4,5}]
  %s5 = inlined_call_operand.vmem [shape: bf16[14,2,84], index: 5, kind: input, shape index: {}, may-alias: {0,1,2,3,4,5}]
  %s6 = inlined_call_operand.vmem [shape: bf16[6,84,320], index: 6, kind: input, shape index: {}]
  %s7 = inlined_call_operand.vmem [shape: f32[1,320], index: 7, kind: input, shape index: {}]
  %s8 = inlined_call_operand.vmem [shape: bf16[320,80], index: 8, kind: input, shape index: {}]
  %s9 = inlined_call_operand.vmem [shape: bf16[5,2,80], index: 9, kind: output, shape index: {}]
  %s10 = sld [smem:[#allocation0]]
  $region69: #{lenet5_forward.4} parent=0
    _
  %s12 = ssub.s32 1, %s10
  %s13 = scalar_select 0, %s12, %s10
  loop: start=0, step=1, limit=7
  $region2: #{lenet5_forward.4} parent=0 // loop_pre_header
    _
  $region3: #{lenet5_forward.4} parent=0 // loop_header
    %s15 = sphi 0, %s19
    %p16 = scmp.ge.s32.totalorder %s15, 7
    %s22 = sphi 0, %s34
    %s23 = sphi 0, %s30
    %s24 = sphi 0, %s22
    %s25 = sphi 0, %s23
    %s26 = sphi 0, %s24
    %s27 = sphi 0, %s25
    %s41 = sphi 0, %s43
    %s44 = sphi 0, %s41
    %s45 = sphi 0, %s44
    %s61 = sphi 0, %s45
    %s73 = sphi 0, %s75
    %s76 = sphi 0, %s73
    %s77 = sphi 0, %s76
    %s93 = sphi 0, %s77
    %s105 = sphi 0, %s107
    %s108 = sphi 0, %s105
    %s109 = sphi 0, %s108
    %s125 = sphi 0, %s109
    %s137 = sphi 0, %s139
    %s140 = sphi 0, %s137
    %s141 = sphi 0, %s140
    %s157 = sphi 0, %s141
    %s169 = sphi 0, %s171
    %s172 = sphi 0, %s169
    %s173 = sphi 0, %s172
    %s189 = sphi 0, %s173
    %s201 = sphi 0, %s203
    %s204 = sphi 0, %s201
    %s205 = sphi 0, %s204
    %s221 = sphi 0, %s205
    %s225 = sphi 0, %s225
    %s227 = sphi 0, %s225
    %s228 = sphi 0, %s227
    %s242 = sphi 0, %s228
    %s246 = sphi 0, %s246
    %s248 = sphi 0, %s246
    %s249 = sphi 0, %s248
    %s263 = sphi 0, %s249
    %s267 = sphi 0, %s267
    %s269 = sphi 0, %s267
    %s270 = sphi 0, %s269
    %s284 = sphi 0, %s270
    %s292 = sphi 0, %s294
    %s295 = sphi 0, %s292
    %s296 = sphi 0, %s295
    %s312 = sphi 0, %s296
  $region4: #{lenet5_forward.4} parent=0 // loop_header_branch
    %18 = sbr.rel (%p16) target = $region8
  $region5: #{lenet5_forward.4} parent=0 // loop_body
    %s20 = ssub.s32 %s15, 1
    %s21 = ssub.s32 %s15, 2
    %s28 = sadd.s32 1, %s23
    %p29 = scmp.ge.s32.totalorder %s28, 5
    %s30 = scalar_select %p29, 0, %s28
    %s31 = sadd.s32 1, %s22
    %s32 = scalar_select %p29, %s31, %s22
    %p33 = scmp.ge.s32.totalorder %s32, 1
    %s34 = scalar_select %p33, 0, %s32
    %s35 = smul.u32 %s23, 2
    %s36 = smul.u32 %s30, 2
    %s37 = ssub.s32 %s35, %s36
    %s38 = ssub.s32 %s22, %s34
    %s39 = sor.u32 %s37, %s38
    %p40 = scmp.eq.s32.totalorder %s39, 0
    %s42 = sadd.s32 %s41, 1
    %s43 = scalar_select %p40, %s41, %s42
    %p46 = pneg %p40
    %p47 = scmp.eq.s32.totalorder %s15, 4
    %p48 = por %p46, %p47
    %p49 = scmp.ne.s32.totalorder %s41, %s44
    %p50 = scmp.eq.s32.totalorder %s15, 0
    %p51 = por %p49, %p50
    %p52 = scmp.ne.s32.totalorder %s41, %s44
    %p53 = scmp.eq.s32.totalorder %s20, 4
    %p54 = por %p52, %p53
    %p55 = scmp.ne.s32.totalorder %s44, %s45
    %p56 = scmp.eq.s32.totalorder %s20, 0
    %p57 = por %p55, %p56
    %p58 = scmp.ne.s32.totalorder %s44, %s45
    %p59 = scmp.eq.s32.totalorder %s21, 4
    %p60 = por %p58, %p59
    %p62 = scmp.ne.s32.totalorder %s45, %s61
    %p63 = scmp.eq.s32.totalorder %s21, 0
    %p64 = por %p62, %p63
    %s65 = smul.u32 %s23, 2
    %s66 = sadd.s32 %s65, 1
    %s67 = smul.u32 %s30, 2
    %s68 = sadd.s32 %s67, 1
    %s69 = ssub.s32 %s66, %s68
    %s70 = ssub.s32 %s22, %s34
    %s71 = sor.u32 %s69, %s70
    %p72 = scmp.eq.s32.totalorder %s71, 0
    %s74 = sadd.s32 %s73, 1
    %s75 = scalar_select %p72, %s73, %s74
    %p78 = pneg %p72
    %p79 = scmp.eq.s32.totalorder %s15, 4
    %p80 = por %p78, %p79
    %p81 = scmp.ne.s32.totalorder %s73, %s76
    %p82 = scmp.eq.s32.totalorder %s15, 0
    %p83 = por %p81, %p82
    %p84 = scmp.ne.s32.totalorder %s73, %s76
    %p85 = scmp.eq.s32.totalorder %s20, 4
    %p86 = por %p84, %p85
    %p87 = scmp.ne.s32.totalorder %s76, %s77
    %p88 = scmp.eq.s32.totalorder %s20, 0
    %p89 = por %p87, %p88
    %p90 = scmp.ne.s32.totalorder %s76, %s77
    %p91 = scmp.eq.s32.totalorder %s21, 4
    %p92 = por %p90, %p91
    %p94 = scmp.ne.s32.totalorder %s77, %s93
    %p95 = scmp.eq.s32.totalorder %s21, 0
    %p96 = por %p94, %p95
    %s97 = smul.u32 %s23, 2
    %s98 = sadd.s32 %s97, 2
    %s99 = smul.u32 %s30, 2
    %s100 = sadd.s32 %s99, 2
    %s101 = ssub.s32 %s98, %s100
    %s102 = ssub.s32 %s22, %s34
    %s103 = sor.u32 %s101, %s102
    %p104 = scmp.eq.s32.totalorder %s103, 0
    %s106 = sadd.s32 %s105, 1
    %s107 = scalar_select %p104, %s105, %s106
    %p110 = pneg %p104
    %p111 = scmp.eq.s32.totalorder %s15, 4
    %p112 = por %p110, %p111
    %p113 = scmp.ne.s32.totalorder %s105, %s108
    %p114 = scmp.eq.s32.totalorder %s15, 0
    %p115 = por %p113, %p114
    %p116 = scmp.ne.s32.totalorder %s105, %s108
    %p117 = scmp.eq.s32.totalorder %s20, 4
    %p118 = por %p116, %p117
    %p119 = scmp.ne.s32.totalorder %s108, %s109
    %p120 = scmp.eq.s32.totalorder %s20, 0
    %p121 = por %p119, %p120
    %p122 = scmp.ne.s32.totalorder %s108, %s109
    %p123 = scmp.eq.s32.totalorder %s21, 4
    %p124 = por %p122, %p123
    %p126 = scmp.ne.s32.totalorder %s109, %s125
    %p127 = scmp.eq.s32.totalorder %s21, 0
    %p128 = por %p126, %p127
    %s129 = smul.u32 %s23, 2
    %s130 = sadd.s32 %s129, 3
    %s131 = smul.u32 %s30, 2
    %s132 = sadd.s32 %s131, 3
    %s133 = ssub.s32 %s130, %s132
    %s134 = ssub.s32 %s22, %s34
    %s135 = sor.u32 %s133, %s134
    %p136 = scmp.eq.s32.totalorder %s135, 0
    %s138 = sadd.s32 %s137, 1
    %s139 = scalar_select %p136, %s137, %s138
    %p142 = pneg %p136
    %p143 = scmp.eq.s32.totalorder %s15, 4
    %p144 = por %p142, %p143
    %p145 = scmp.ne.s32.totalorder %s137, %s140
    %p146 = scmp.eq.s32.totalorder %s15, 0
    %p147 = por %p145, %p146
    %p148 = scmp.ne.s32.totalorder %s137, %s140
    %p149 = scmp.eq.s32.totalorder %s20, 4
    %p150 = por %p148, %p149
    %p151 = scmp.ne.s32.totalorder %s140, %s141
    %p152 = scmp.eq.s32.totalorder %s20, 0
    %p153 = por %p151, %p152
    %p154 = scmp.ne.s32.totalorder %s140, %s141
    %p155 = scmp.eq.s32.totalorder %s21, 4
    %p156 = por %p154, %p155
    %p158 = scmp.ne.s32.totalorder %s141, %s157
    %p159 = scmp.eq.s32.totalorder %s21, 0
    %p160 = por %p158, %p159
    %s161 = smul.u32 %s23, 2
    %s162 = sadd.s32 %s161, 4
    %s163 = smul.u32 %s30, 2
    %s164 = sadd.s32 %s163, 4
    %s165 = ssub.s32 %s162, %s164
    %s166 = ssub.s32 %s22, %s34
    %s167 = sor.u32 %s165, %s166
    %p168 = scmp.eq.s32.totalorder %s167, 0
    %s170 = sadd.s32 %s169, 1
    %s171 = scalar_select %p168, %s169, %s170
    %p174 = pneg %p168
    %p175 = scmp.eq.s32.totalorder %s15, 4
    %p176 = por %p174, %p175
    %p177 = scmp.ne.s32.totalorder %s169, %s172
    %p178 = scmp.eq.s32.totalorder %s15, 0
    %p179 = por %p177, %p178
    %p180 = scmp.ne.s32.totalorder %s169, %s172
    %p181 = scmp.eq.s32.totalorder %s20, 4
    %p182 = por %p180, %p181
    %p183 = scmp.ne.s32.totalorder %s172, %s173
    %p184 = scmp.eq.s32.totalorder %s20, 0
    %p185 = por %p183, %p184
    %p186 = scmp.ne.s32.totalorder %s172, %s173
    %p187 = scmp.eq.s32.totalorder %s21, 4
    %p188 = por %p186, %p187
    %p190 = scmp.ne.s32.totalorder %s173, %s189
    %p191 = scmp.eq.s32.totalorder %s21, 0
    %p192 = por %p190, %p191
    %s193 = smul.u32 %s23, 2
    %s194 = sadd.s32 %s193, 5
    %s195 = smul.u32 %s30, 2
    %s196 = sadd.s32 %s195, 5
    %s197 = ssub.s32 %s194, %s196
    %s198 = ssub.s32 %s22, %s34
    %s199 = sor.u32 %s197, %s198
    %p200 = scmp.eq.s32.totalorder %s199, 0
    %s202 = sadd.s32 %s201, 1
    %s203 = scalar_select %p200, %s201, %s202
    %p206 = pneg %p200
    %p207 = scmp.eq.s32.totalorder %s15, 4
    %p208 = por %p206, %p207
    %p209 = scmp.ne.s32.totalorder %s201, %s204
    %p210 = scmp.eq.s32.totalorder %s15, 0
    %p211 = por %p209, %p210
    %p212 = scmp.ne.s32.totalorder %s201, %s204
    %p213 = scmp.eq.s32.totalorder %s20, 4
    %p214 = por %p212, %p213
    %p215 = scmp.ne.s32.totalorder %s204, %s205
    %p216 = scmp.eq.s32.totalorder %s20, 0
    %p217 = por %p215, %p216
    %p218 = scmp.ne.s32.totalorder %s204, %s205
    %p219 = scmp.eq.s32.totalorder %s21, 4
    %p220 = por %p218, %p219
    %p222 = scmp.ne.s32.totalorder %s205, %s221
    %p223 = scmp.eq.s32.totalorder %s21, 0
    %p224 = por %p222, %p223
    %s226 = sadd.s32 %s225, 1
    %p229 = scmp.eq.s32.totalorder %s15, 4
    %p230 = scmp.ne.s32.totalorder %s225, %s227
    %p231 = scmp.eq.s32.totalorder %s15, 0
    %p232 = por %p230, %p231
    %p233 = scmp.ne.s32.totalorder %s225, %s227
    %p234 = scmp.eq.s32.totalorder %s20, 4
    %p235 = por %p233, %p234
    %p236 = scmp.ne.s32.totalorder %s227, %s228
    %p237 = scmp.eq.s32.totalorder %s20, 0
    %p238 = por %p236, %p237
    %p239 = scmp.ne.s32.totalorder %s227, %s228
    %p240 = scmp.eq.s32.totalorder %s21, 4
    %p241 = por %p239, %p240
    %p243 = scmp.ne.s32.totalorder %s228, %s242
    %p244 = scmp.eq.s32.totalorder %s21, 0
    %p245 = por %p243, %p244
    %s247 = sadd.s32 %s246, 1
    %p250 = scmp.eq.s32.totalorder %s15, 4
    %p251 = scmp.ne.s32.totalorder %s246, %s248
    %p252 = scmp.eq.s32.totalorder %s15, 0
    %p253 = por %p251, %p252
    %p254 = scmp.ne.s32.totalorder %s246, %s248
    %p255 = scmp.eq.s32.totalorder %s20, 4
    %p256 = por %p254, %p255
    %p257 = scmp.ne.s32.totalorder %s248, %s249
    %p258 = scmp.eq.s32.totalorder %s20, 0
    %p259 = por %p257, %p258
    %p260 = scmp.ne.s32.totalorder %s248, %s249
    %p261 = scmp.eq.s32.totalorder %s21, 4
    %p262 = por %p260, %p261
    %p264 = scmp.ne.s32.totalorder %s249, %s263
    %p265 = scmp.eq.s32.totalorder %s21, 0
    %p266 = por %p264, %p265
    %s268 = sadd.s32 %s267, 1
    %p271 = scmp.eq.s32.totalorder %s15, 4
    %p272 = scmp.ne.s32.totalorder %s267, %s269
    %p273 = scmp.eq.s32.totalorder %s15, 0
    %p274 = por %p272, %p273
    %p275 = scmp.ne.s32.totalorder %s267, %s269
    %p276 = scmp.eq.s32.totalorder %s20, 4
    %p277 = por %p275, %p276
    %p278 = scmp.ne.s32.totalorder %s269, %s270
    %p279 = scmp.eq.s32.totalorder %s20, 0
    %p280 = por %p278, %p279
    %p281 = scmp.ne.s32.totalorder %s269, %s270
    %p282 = scmp.eq.s32.totalorder %s21, 4
    %p283 = por %p281, %p282
    %p285 = scmp.ne.s32.totalorder %s270, %s284
    %p286 = scmp.eq.s32.totalorder %s21, 0
    %p287 = por %p285, %p286
    %s288 = ssub.s32 %s23, %s30
    %s289 = ssub.s32 %s22, %s34
    %s290 = sor.u32 %s288, %s289
    %p291 = scmp.eq.s32.totalorder %s290, 0
    %s293 = sadd.s32 %s292, 1
    %s294 = scalar_select %p291, %s292, %s293
    %p297 = pneg %p291
    %p298 = scmp.eq.s32.totalorder %s15, 4
    %p299 = por %p297, %p298
    %p300 = scmp.ne.s32.totalorder %s292, %s295
    %p301 = scmp.eq.s32.totalorder %s15, 0
    %p302 = por %p300, %p301
    %p303 = scmp.ne.s32.totalorder %s292, %s295
    %p304 = scmp.eq.s32.totalorder %s20, 4
    %p305 = por %p303, %p304
    %p306 = scmp.ne.s32.totalorder %s295, %s296
    %p307 = scmp.eq.s32.totalorder %s20, 0
    %p308 = por %p306, %p307
    %p309 = scmp.ne.s32.totalorder %s295, %s296
    %p310 = scmp.eq.s32.totalorder %s21, 4
    %p311 = por %p309, %p310
    %p313 = scmp.ne.s32.totalorder %s296, %s312
    %p314 = scmp.eq.s32.totalorder %s21, 0
    %p315 = por %p313, %p314
    %p316 = scmp.le.s32.totalorder 1, %s15
    %p317 = scmp.lt.s32.totalorder %s15, 6
    %p318 = pnand %p316, %p317
    %p319 = pneg %p318
    // Predicated region
    $region9: #{lenet5_forward.4} parent=5 // pred_check
      _
    $region10: #{lenet5_forward.4} parent=5 // pred_check_branch
      %321 = sbr.rel (%p318) target = $region12
    $region11: #{lenet5_forward.4} parent=5 // pred_region
      %s322 = ssub.s32 %s15, 1
      // Predicated region
      $region13: #{lenet5_forward.4} parent=11 // pred_check
        %p323 = pneg %p238
      $region14: #{lenet5_forward.4} parent=11 // pred_check_branch
        %325 = sbr.rel (%p323) target = $region16
      $region15: #{lenet5_forward.4} parent=11 // pred_region
        _
      $region16: #{lenet5_forward.4} parent=11 // pred_fallthru
        _
      // Predicated region
      $region17: #{lenet5_forward.4} parent=11 // pred_check
        %p326 = pneg %p259
      $region18: #{lenet5_forward.4} parent=11 // pred_check_branch
        %328 = sbr.rel (%p326) target = $region20
      $region19: #{lenet5_forward.4} parent=11 // pred_region
        _
      $region20: #{lenet5_forward.4} parent=11 // pred_fallthru
        _
      // Predicated region
      $region21: #{lenet5_forward.4} parent=11 // pred_check
        %p329 = pneg %p280
      $region22: #{lenet5_forward.4} parent=11 // pred_check_branch
        %331 = sbr.rel (%p329) target = $region24
      $region23: #{lenet5_forward.4} parent=11 // pred_region
        _
      $region24: #{lenet5_forward.4} parent=11 // pred_fallthru
        _
    $region12: #{lenet5_forward.4} parent=5 // pred_fallthru
      _
    %p332 = scmp.lt.s32.totalorder %s15, 5
    // Predicated region
    $region25: #{lenet5_forward.4} parent=5 // pred_check
      %p333 = pneg %p332
    $region26: #{lenet5_forward.4} parent=5 // pred_check_branch
      %335 = sbr.rel (%p333) target = $region28
    $region27: #{lenet5_forward.4} parent=5 // pred_region
      // Predicated region
      $region29: #{lenet5_forward.4} parent=27 // pred_check
        %p336 = pneg %p51
      $region30: #{lenet5_forward.4} parent=27 // pred_check_branch
        %338 = sbr.rel (%p336) target = $region32
      $region31: #{lenet5_forward.4} parent=27 // pred_region
        %s339 = smul.u32 %s23, 2
        %p340 = scmp.lt.s32.totalorder %s339, 13
        %s341 = scalar_select %p340, %s339, 13
        %p342 = scmp.lt.s32.totalorder %s22, 0
        %s343 = scalar_select %p342, %s22, 0
        %s344 = sadd.s32 %s343, %s341
        %s345 = scalar_lea.vmem %s0, %s344
        %s346 = smul.u32 %s23, 2
      $region32: #{lenet5_forward.4} parent=27 // pred_fallthru
        _
      // Predicated region
      $region33: #{lenet5_forward.4} parent=27 // pred_check
        %p347 = pneg %p83
      $region34: #{lenet5_forward.4} parent=27 // pred_check_branch
        %349 = sbr.rel (%p347) target = $region36
      $region35: #{lenet5_forward.4} parent=27 // pred_region
        %s350 = smul.u32 %s23, 2
        %s351 = sadd.s32 %s350, 1
        %p352 = scmp.lt.s32.totalorder %s351, 13
        %s353 = scalar_select %p352, %s351, 13
        %p354 = scmp.lt.s32.totalorder %s22, 0
        %s355 = scalar_select %p354, %s22, 0
        %s356 = sadd.s32 %s355, %s353
        %s357 = scalar_lea.vmem %s1, %s356
        %s358 = smul.u32 %s23, 2
        %s359 = sadd.s32 %s358, 1
      $region36: #{lenet5_forward.4} parent=27 // pred_fallthru
        _
      // Predicated region
      $region37: #{lenet5_forward.4} parent=27 // pred_check
        %p360 = pneg %p115
      $region38: #{lenet5_forward.4} parent=27 // pred_check_branch
        %362 = sbr.rel (%p360) target = $region40
      $region39: #{lenet5_forward.4} parent=27 // pred_region
        %s363 = smul.u32 %s23, 2
        %s364 = sadd.s32 %s363, 2
        %p365 = scmp.lt.s32.totalorder %s364, 13
        %s366 = scalar_select %p365, %s364, 13
        %p367 = scmp.lt.s32.totalorder %s22, 0
        %s368 = scalar_select %p367, %s22, 0
        %s369 = sadd.s32 %s368, %s366
        %s370 = scalar_lea.vmem %s2, %s369
        %s371 = smul.u32 %s23, 2
        %s372 = sadd.s32 %s371, 2
      $region40: #{lenet5_forward.4} parent=27 // pred_fallthru
        _
      // Predicated region
      $region41: #{lenet5_forward.4} parent=27 // pred_check
        %p373 = pneg %p147
      $region42: #{lenet5_forward.4} parent=27 // pred_check_branch
        %375 = sbr.rel (%p373) target = $region44
      $region43: #{lenet5_forward.4} parent=27 // pred_region
        %s376 = smul.u32 %s23, 2
        %s377 = sadd.s32 %s376, 3
        %p378 = scmp.lt.s32.totalorder %s377, 13
        %s379 = scalar_select %p378, %s377, 13
        %p380 = scmp.lt.s32.totalorder %s22, 0
        %s381 = scalar_select %p380, %s22, 0
        %s382 = sadd.s32 %s381, %s379
        %s383 = scalar_lea.vmem %s3, %s382
        %s384 = smul.u32 %s23, 2
        %s385 = sadd.s32 %s384, 3
      $region44: #{lenet5_forward.4} parent=27 // pred_fallthru
        _
      // Predicated region
      $region45: #{lenet5_forward.4} parent=27 // pred_check
        %p386 = pneg %p179
      $region46: #{lenet5_forward.4} parent=27 // pred_check_branch
        %388 = sbr.rel (%p386) target = $region48
      $region47: #{lenet5_forward.4} parent=27 // pred_region
        %s389 = smul.u32 %s23, 2
        %s390 = sadd.s32 %s389, 4
        %p391 = scmp.lt.s32.totalorder %s390, 13
        %s392 = scalar_select %p391, %s390, 13
        %p393 = scmp.lt.s32.totalorder %s22, 0
        %s394 = scalar_select %p393, %s22, 0
        %s395 = sadd.s32 %s394, %s392
        %s396 = scalar_lea.vmem %s4, %s395
        %s397 = smul.u32 %s23, 2
        %s398 = sadd.s32 %s397, 4
      $region48: #{lenet5_forward.4} parent=27 // pred_fallthru
        _
      // Predicated region
      $region49: #{lenet5_forward.4} parent=27 // pred_check
        %p399 = pneg %p211
      $region50: #{lenet5_forward.4} parent=27 // pred_check_branch
        %401 = sbr.rel (%p399) target = $region52
      $region51: #{lenet5_forward.4} parent=27 // pred_region
        %s402 = smul.u32 %s23, 2
        %s403 = sadd.s32 %s402, 5
        %p404 = scmp.lt.s32.totalorder %s403, 13
        %s405 = scalar_select %p404, %s403, 13
        %p406 = scmp.lt.s32.totalorder %s22, 0
        %s407 = scalar_select %p406, %s22, 0
        %s408 = sadd.s32 %s407, %s405
        %s409 = scalar_lea.vmem %s5, %s408
        %s410 = smul.u32 %s23, 2
        %s411 = sadd.s32 %s410, 5
      $region52: #{lenet5_forward.4} parent=27 // pred_fallthru
        _
    $region28: #{lenet5_forward.4} parent=5 // pred_fallthru
      _
    %p412 = scmp.le.s32.totalorder 1, %s15
    %p413 = scmp.lt.s32.totalorder %s15, 6
    %p414 = pnand %p412, %p413
    %p415 = pneg %p414
    // Predicated region
    $region53: #{lenet5_forward.4} parent=5 // pred_check
      _
    $region54: #{lenet5_forward.4} parent=5 // pred_check_branch
      %417 = sbr.rel (%p414) target = $region56
    $region55: #{lenet5_forward.4} parent=5 // pred_region
      %s418 = ssub.s32 %s15, 1
      %s419 = smul.u32 %s25, 2
      %p420 = scmp.lt.s32.totalorder %s419, 13
      %s421 = scalar_select %p420, %s419, 13
      %p422 = scmp.lt.s32.totalorder %s24, 0
      %s423 = scalar_select %p422, %s24, 0
      %s424 = sadd.s32 %s423, %s421
      %s425 = scalar_lea.vmem %s0, %s424
      %p426 = pneg %p57
      %p427 = pneg %p54
      %s428 = smul.u32 %s25, 2
      %s429 = sadd.s32 %s428, 1
      %p430 = scmp.lt.s32.totalorder %s429, 13
      %s431 = scalar_select %p430, %s429, 13
      %p432 = scmp.lt.s32.totalorder %s24, 0
      %s433 = scalar_select %p432, %s24, 0
      %s434 = sadd.s32 %s433, %s431
      %s435 = scalar_lea.vmem %s1, %s434
      %p436 = pneg %p89
      %p437 = pneg %p86
      %s438 = smul.u32 %s25, 2
      %s439 = sadd.s32 %s438, 2
      %p440 = scmp.lt.s32.totalorder %s439, 13
      %s441 = scalar_select %p440, %s439, 13
      %p442 = scmp.lt.s32.totalorder %s24, 0
      %s443 = scalar_select %p442, %s24, 0
      %s444 = sadd.s32 %s443, %s441
      %s445 = scalar_lea.vmem %s2, %s444
      %p446 = pneg %p121
      %p447 = pneg %p118
      %s448 = smul.u32 %s25, 2
      %s449 = sadd.s32 %s448, 3
      %p450 = scmp.lt.s32.totalorder %s449, 13
      %s451 = scalar_select %p450, %s449, 13
      %p452 = scmp.lt.s32.totalorder %s24, 0
      %s453 = scalar_select %p452, %s24, 0
      %s454 = sadd.s32 %s453, %s451
      %s455 = scalar_lea.vmem %s3, %s454
      %p456 = pneg %p153
      %p457 = pneg %p150
      %s458 = smul.u32 %s25, 2
      %s459 = sadd.s32 %s458, 4
      %p460 = scmp.lt.s32.totalorder %s459, 13
      %s461 = scalar_select %p460, %s459, 13
      %p462 = scmp.lt.s32.totalorder %s24, 0
      %s463 = scalar_select %p462, %s24, 0
      %s464 = sadd.s32 %s463, %s461
      %s465 = scalar_lea.vmem %s4, %s464
      %p466 = pneg %p185
      %p467 = pneg %p182
      %s468 = smul.u32 %s25, 2
      %s469 = sadd.s32 %s468, 5
      %p470 = scmp.lt.s32.totalorder %s469, 13
      %s471 = scalar_select %p470, %s469, 13
      %p472 = scmp.lt.s32.totalorder %s24, 0
      %s473 = scalar_select %p472, %s24, 0
      %s474 = sadd.s32 %s473, %s471
      %s475 = scalar_lea.vmem %s5, %s474
      %p476 = pneg %p217
      %p477 = pneg %p214
      %p478 = pneg %p238
      %p479 = pneg %p235
      %p480 = pneg %p259
      %p481 = pneg %p256
      %p482 = pneg %p280
      %p483 = pneg %p277
      %p484 = pneg %p308
      %p485 = pneg %p305
      %p486 = scmp.lt.s32.totalorder %s25, 4
      %s487 = scalar_select %p486, %s25, 4
      %p488 = scmp.lt.s32.totalorder %s24, 0
      %s489 = scalar_select %p488, %s24, 0
      %s490 = sadd.s32 %s489, %s487
      %s491 = scalar_lea.vmem %s9, %s490
      %s492 = smul.u32 %s25, 2
      %p493 = scmp.lt.s32.totalorder %s492, 13
      %s494 = scalar_select %p493, %s492, 13
      %p495 = scmp.lt.s32.totalorder %s24, 0
      %s496 = scalar_select %p495, %s24, 0
      %s497 = sadd.s32 %s496, %s494
      %s498 = scalar_lea.vmem %s0, %s497
      %s499 = smul.u32 %s25, 2
      %s500 = smul.u32 %s25, 2
      %s501 = sadd.s32 %s500, 1
      %p502 = scmp.lt.s32.totalorder %s501, 13
      %s503 = scalar_select %p502, %s501, 13
      %p504 = scmp.lt.s32.totalorder %s24, 0
      %s505 = scalar_select %p504, %s24, 0
      %s506 = sadd.s32 %s505, %s503
      %s507 = scalar_lea.vmem %s1, %s506
      %s508 = smul.u32 %s25, 2
      %s509 = sadd.s32 %s508, 1
      %s510 = smul.u32 %s25, 2
      %s511 = sadd.s32 %s510, 2
      %p512 = scmp.lt.s32.totalorder %s511, 13
      %s513 = scalar_select %p512, %s511, 13
      %p514 = scmp.lt.s32.totalorder %s24, 0
      %s515 = scalar_select %p514, %s24, 0
      %s516 = sadd.s32 %s515, %s513
      %s517 = scalar_lea.vmem %s2, %s516
      %s518 = smul.u32 %s25, 2
      %s519 = sadd.s32 %s518, 2
      %s520 = smul.u32 %s25, 2
      %s521 = sadd.s32 %s520, 3
      %p522 = scmp.lt.s32.totalorder %s521, 13
      %s523 = scalar_select %p522, %s521, 13
      %p524 = scmp.lt.s32.totalorder %s24, 0
      %s525 = scalar_select %p524, %s24, 0
      %s526 = sadd.s32 %s525, %s523
      %s527 = scalar_lea.vmem %s3, %s526
      %s528 = smul.u32 %s25, 2
      %s529 = sadd.s32 %s528, 3
      %s530 = smul.u32 %s25, 2
      %s531 = sadd.s32 %s530, 4
      %p532 = scmp.lt.s32.totalorder %s531, 13
      %s533 = scalar_select %p532, %s531, 13
      %p534 = scmp.lt.s32.totalorder %s24, 0
      %s535 = scalar_select %p534, %s24, 0
      %s536 = sadd.s32 %s535, %s533
      %s537 = scalar_lea.vmem %s4, %s536
      %s538 = smul.u32 %s25, 2
      %s539 = sadd.s32 %s538, 4
      %s540 = smul.u32 %s25, 2
      %s541 = sadd.s32 %s540, 5
      %p542 = scmp.lt.s32.totalorder %s541, 13
      %s543 = scalar_select %p542, %s541, 13
      %p544 = scmp.lt.s32.totalorder %s24, 0
      %s545 = scalar_select %p544, %s24, 0
      %s546 = sadd.s32 %s545, %s543
      %s547 = scalar_lea.vmem %s5, %s546
      %s548 = smul.u32 %s25, 2
      %s549 = sadd.s32 %s548, 5
      %p550 = scmp.lt.s32.totalorder %s25, 4
      %s551 = scalar_select %p550, %s25, 4
      %p552 = scmp.lt.s32.totalorder %s24, 0
      %s553 = scalar_select %p552, %s24, 0
      %s554 = sadd.s32 %s553, %s551
      %s555 = scalar_lea.vmem %s9, %s554
      %v557 = vld [vmem:[%s498] sm:$0x1]
      %v558 = vld [vmem:[%s6] sm:$0xff]
      %v559 = vld [vmem:[%s6 + $0x8] sm:$0xf]
      %v560 = vld [vmem:[%s6 + $0xc] sm:$0xff]
      %v561 = vld [vmem:[%s6 + $0x14] sm:$0xf]
      %v562 = vld [vmem:[%s6 + $0x18] sm:$0xff]
      %v563 = vld [vmem:[%s6 + $0x20] sm:$0xf]
      %v564 = vld [vmem:[%s6 + $0x24] sm:$0xff]
      %v565 = vld [vmem:[%s6 + $0x2c] sm:$0xf]
      %v566 = vld [vmem:[%s6 + $0x30] sm:$0xff]
      %v567 = vld [vmem:[%s6 + $0x38] sm:$0xf]
      %v568 = vld [vmem:[%s6 + $0x3c] sm:$0xff]
      %v569 = vld [vmem:[%s6 + $0x44] sm:$0xf]
      %v570 = vld [vmem:[%s6 + $0x48] sm:$0xff]
      %v571 = vld [vmem:[%s6 + $0x50] sm:$0xf]
      %v572 = vld [vmem:[%s6 + $0x54] sm:$0xff]
      %v573 = vld [vmem:[%s6 + $0x5c] sm:$0xf]
      %v574 = vld [vmem:[%s6 + $0x60] sm:$0xff]
      %v575 = vld [vmem:[%s6 + $0x68] sm:$0xf]
      %v576 = vld [vmem:[%s6 + $0x6c] sm:$0xff]
      %v577 = vld [vmem:[%s6 + $0x74] sm:$0xf]
      %v578 = vld [vmem:[%s6 + $0x78] sm:$0x33]
      %v579 = vld [vmem:[%s6 + $0x80] sm:$0x3]
      %v580 = vld [vmem:[%s507] sm:$0x1]
      %s581 = scalar_lea.vmem %s6, 132
      %v582 = vld [vmem:[%s581] sm:$0xff]
      %v583 = vld [vmem:[%s581 + $0x8] sm:$0xf]
      %v584 = vld [vmem:[%s581 + $0xc] sm:$0xff]
      %v585 = vld [vmem:[%s581 + $0x14] sm:$0xf]
      %v586 = vld [vmem:[%s581 + $0x18] sm:$0xff]
      %v587 = vld [vmem:[%s581 + $0x20] sm:$0xf]
      %v588 = vld [vmem:[%s581 + $0x24] sm:$0xff]
      %v589 = vld [vmem:[%s581 + $0x2c] sm:$0xf]
      %v590 = vld [vmem:[%s581 + $0x30] sm:$0xff]
      %v591 = vld [vmem:[%s581 + $0x38] sm:$0xf]
      %v592 = vld [vmem:[%s581 + $0x3c] sm:$0xff]
      %v593 = vld [vmem:[%s581 + $0x44] sm:$0xf]
      %v594 = vld [vmem:[%s581 + $0x48] sm:$0xff]
      %v595 = vld [vmem:[%s581 + $0x50] sm:$0xf]
      %v596 = vld [vmem:[%s581 + $0x54] sm:$0xff]
      %v597 = vld [vmem:[%s581 + $0x5c] sm:$0xf]
      %v598 = vld [vmem:[%s581 + $0x60] sm:$0xff]
      %v599 = vld [vmem:[%s581 + $0x68] sm:$0xf]
      %v600 = vld [vmem:[%s581 + $0x6c] sm:$0xff]
      %v601 = vld [vmem:[%s581 + $0x74] sm:$0xf]
      %v602 = vld [vmem:[%s581 + $0x78] sm:$0x33]
      %v603 = vld [vmem:[%s581 + $0x80] sm:$0x3]
      %v626 = vunpack.c.l.b16 %v582
      %v627 = vunpack.c.h.b16 %v582
      %v628 = vunpack.c.l.b16 %v583
      %v629 = vunpack.c.l.b16 %v584
      %v630 = vunpack.c.h.b16 %v584
      %v631 = vunpack.c.l.b16 %v585
      %v632 = vunpack.c.l.b16 %v586
      %v633 = vunpack.c.h.b16 %v586
      %v634 = vunpack.c.l.b16 %v587
      %v635 = vunpack.c.l.b16 %v588
      %v636 = vunpack.c.h.b16 %v588
      %v637 = vunpack.c.l.b16 %v589
      %v638 = vunpack.c.l.b16 %v590
      %v639 = vunpack.c.h.b16 %v590
      %v640 = vunpack.c.l.b16 %v591
      %v641 = vunpack.c.l.b16 %v592
      %v642 = vunpack.c.h.b16 %v592
      %v643 = vunpack.c.l.b16 %v593
      %v644 = vunpack.c.l.b16 %v594
      %v645 = vunpack.c.h.b16 %v594
      %v646 = vunpack.c.l.b16 %v595
      %v647 = vunpack.c.l.b16 %v596
      %v648 = vunpack.c.h.b16 %v596
      %v649 = vunpack.c.l.b16 %v597
      %v650 = vunpack.c.l.b16 %v598
      %v651 = vunpack.c.h.b16 %v598
      %v652 = vunpack.c.l.b16 %v599
      %v653 = vunpack.c.l.b16 %v600
      %v654 = vunpack.c.h.b16 %v600
      %v655 = vunpack.c.l.b16 %v601
      %v656 = vunpack.c.l.b16 %v602
      %v657 = vunpack.c.h.b16 %v602
      %v658 = vunpack.c.l.b16 %v603
      %v659 = vpack.c.b16 %v629, %v626
      %v660 = vpack.c.b16 %v630, %v627
      %v661 = vpack.c.b16 %v631, %v628
      %v662 = vpack.c.b16 %v635, %v632
      %v663 = vpack.c.b16 %v636, %v633
      %v664 = vpack.c.b16 %v637, %v634
      %v665 = vpack.c.b16 %v641, %v638
      %v666 = vpack.c.b16 %v642, %v639
      %v667 = vpack.c.b16 %v643, %v640
      %v668 = vpack.c.b16 %v647, %v644
      %v669 = vpack.c.b16 %v648, %v645
      %v670 = vpack.c.b16 %v649, %v646
      %v671 = vpack.c.b16 %v653, %v650
      %v672 = vpack.c.b16 %v654, %v651
      %v673 = vpack.c.b16 %v655, %v652
      %v674 = vpack.c.b16 %v656, %v656
      %v675 = vpack.c.b16 %v657, %v657
      %v676 = vpack.c.b16 %v658, %v658
      %vm692 = vcmask 687104
      %v694 = vsel %vm692, %v580, 0
      %vm696 = vcmask 1041408
      %v698 = vsel %vm696, %v674, 0
      %v701 = vsel %vm696, %v675, 0
      %v704 = vsel %vm696, %v676, 0
      %706 = vmatprep.subr.bf16.mxu0 %v660
      %707 = vmatpush1.bf16.msra.mxu0 %v659
      %708 = vmatprep.subr.bf16.mxu0 %v663
      %709 = vmatpush1.bf16.msra.mxu0 %v662
      %710 = vmatprep.subr.bf16.mxu0 %v666
      %711 = vmatpush1.bf16.msra.mxu0 %v665
      %712 = vmatprep.subr.bf16.mxu0 %v669
      %713 = vmatpush1.bf16.msra.mxu0 %v668
      %714 = vmatprep.subr.bf16.mxu0 %v672
      %715 = vmatpush1.bf16.msra.mxu0 %v671
      %716 = vmatprep.subr.bf16.mxu0 %v701
      %717 = vmatpush1.bf16.msra.mxu0 %v698
      %718 = vmatprep.subr.bf16.mxu0 0
      %719 = vmatpush1.bf16.msra.mxu0 0
      %720 = vmatprep.subr.bf16.mxu0 0
      %721 = vmatpush1.bf16.msra.mxu0 0
      %722 = vmatprep.subr.bf16.mxu0 0
      %723 = vmatpush1.bf16.msra.mxu0 0
      %724 = vmatprep.subr.bf16.mxu0 0
      %725 = vmatpush1.bf16.msra.mxu0 0
      %726 = vmatprep.subr.bf16.mxu0 0
      %727 = vmatpush1.bf16.msra.mxu0 0
      %728 = vmatprep.subr.bf16.mxu0 0
      %729 = vmatpush1.bf16.msra.mxu0 0
      %730 = vmatprep.subr.bf16.mxu0 0
      %731 = vmatpush1.bf16.msra.mxu0 0
      %732 = vmatprep.subr.bf16.mxu0 0
      %733 = vmatpush1.bf16.msra.mxu0 0
      %734 = vmatprep.subr.bf16.mxu0 0
      %735 = vmatpush1.bf16.msra.mxu0 0
      %736 = vmatprep.subr.bf16.mxu0 0
      %737 = vmatpush1.bf16.msra.mxu0 0
      %738 = vmatprep.mubr.bf16.mxu0 0
      %739 = vmatmul.mubr.bf16.gmra.mrb[0].mxu0 %v694
      %v740 = vpop.f32.mrb[0].mxu0
      %v741 = vadd.f32 0.0, %v740
      %v742 = vpop.f32.mrb[0].mxu0
      %v743 = vadd.f32 0.0, %v742
      %v744 = vpop.f32.mrb[0].mxu0
      %v745 = vpop.f32.mrb[0].mxu0
      %746 = vdwg.mxu0
      %747 = vmatprep.subr.bf16.mxu0 0
      %748 = vmatpush1.bf16.msra.mxu0 %v661
      %749 = vmatprep.subr.bf16.mxu0 0
      %750 = vmatpush1.bf16.msra.mxu0 %v664
      %751 = vmatprep.subr.bf16.mxu0 0
      %752 = vmatpush1.bf16.msra.mxu0 %v667
      %753 = vmatprep.subr.bf16.mxu0 0
      %754 = vmatpush1.bf16.msra.mxu0 %v670
      %755 = vmatprep.subr.bf16.mxu0 0
      %756 = vmatpush1.bf16.msra.mxu0 %v673
      %757 = vmatprep.subr.bf16.mxu0 0
      %758 = vmatpush1.bf16.msra.mxu0 %v704
      %759 = vmatprep.subr.bf16.mxu0 0
      %760 = vmatpush1.bf16.msra.mxu0 0
      %761 = vmatprep.subr.bf16.mxu0 0
      %762 = vmatpush1.bf16.msra.mxu0 0
      %763 = vmatprep.subr.bf16.mxu0 0
      %764 = vmatpush1.bf16.msra.mxu0 0
      %765 = vmatprep.subr.bf16.mxu0 0
      %766 = vmatpush1.bf16.msra.mxu0 0
      %767 = vmatprep.subr.bf16.mxu0 0
      %768 = vmatpush1.bf16.msra.mxu0 0
      %769 = vmatprep.subr.bf16.mxu0 0
      %770 = vmatpush1.bf16.msra.mxu0 0
      %771 = vmatprep.subr.bf16.mxu0 0
      %772 = vmatpush1.bf16.msra.mxu0 0
      %773 = vmatprep.subr.bf16.mxu0 0
      %774 = vmatpush1.bf16.msra.mxu0 0
      %775 = vmatprep.subr.bf16.mxu0 0
      %776 = vmatpush1.bf16.msra.mxu0 0
      %777 = vmatprep.subr.bf16.mxu0 0
      %778 = vmatpush1.bf16.msra.mxu0 0
      %779 = vmatprep.mubr.bf16.mxu0 0
      %780 = vmatmul.mubr.bf16.gmra.mrb[0].mxu0 %v694
      %v781 = vpop.f32.mrb[0].mxu0
      %v782 = vadd.f32 0.0, %v781
      %v783 = vpop.f32.mrb[0].mxu0
      %v784 = vpop.f32.mrb[0].mxu0
      %v785 = vpop.f32.mrb[0].mxu0
      %786 = vdwg.mxu0
      %v809 = vunpack.c.l.b16 %v558
      %v810 = vunpack.c.h.b16 %v558
      %v811 = vunpack.c.l.b16 %v559
      %v812 = vunpack.c.l.b16 %v560
      %v813 = vunpack.c.h.b16 %v560
      %v814 = vunpack.c.l.b16 %v561
      %v815 = vunpack.c.l.b16 %v562
      %v816 = vunpack.c.h.b16 %v562
      %v817 = vunpack.c.l.b16 %v563
      %v818 = vunpack.c.l.b16 %v564
      %v819 = vunpack.c.h.b16 %v564
      %v820 = vunpack.c.l.b16 %v565
      %v821 = vunpack.c.l.b16 %v566
      %v822 = vunpack.c.h.b16 %v566
      %v823 = vunpack.c.l.b16 %v567
      %v824 = vunpack.c.l.b16 %v568
      %v825 = vunpack.c.h.b16 %v568
      %v826 = vunpack.c.l.b16 %v569
      %v827 = vunpack.c.l.b16 %v570
      %v828 = vunpack.c.h.b16 %v570
      %v829 = vunpack.c.l.b16 %v571
      %v830 = vunpack.c.l.b16 %v572
      %v831 = vunpack.c.h.b16 %v572
      %v832 = vunpack.c.l.b16 %v573
      %v833 = vunpack.c.l.b16 %v574
      %v834 = vunpack.c.h.b16 %v574
      %v835 = vunpack.c.l.b16 %v575
      %v836 = vunpack.c.l.b16 %v576
      %v837 = vunpack.c.h.b16 %v576
      %v838 = vunpack.c.l.b16 %v577
      %v839 = vunpack.c.l.b16 %v578
      %v840 = vunpack.c.h.b16 %v578
      %v841 = vunpack.c.l.b16 %v579
      %v842 = vpack.c.b16 %v812, %v809
      %v843 = vpack.c.b16 %v813, %v810
      %v844 = vpack.c.b16 %v814, %v811
      %v845 = vpack.c.b16 %v818, %v815
      %v846 = vpack.c.b16 %v819, %v816
      %v847 = vpack.c.b16 %v820, %v817
      %v848 = vpack.c.b16 %v824, %v821
      %v849 = vpack.c.b16 %v825, %v822
      %v850 = vpack.c.b16 %v826, %v823
      %v851 = vpack.c.b16 %v830, %v827
      %v852 = vpack.c.b16 %v831, %v828
      %v853 = vpack.c.b16 %v832, %v829
      %v854 = vpack.c.b16 %v836, %v833
      %v855 = vpack.c.b16 %v837, %v834
      %v856 = vpack.c.b16 %v838, %v835
      %v857 = vpack.c.b16 %v839, %v839
      %v858 = vpack.c.b16 %v840, %v840
      %v859 = vpack.c.b16 %v841, %v841
      %v876 = vsel %vm692, %v557, 0
      %v879 = vsel %vm696, %v857, 0
      %v882 = vsel %vm696, %v858, 0
      %v885 = vsel %vm696, %v859, 0
      %887 = vmatprep.subr.bf16.mxu0 %v843
      %888 = vmatpush1.bf16.msra.mxu0 %v842
      %889 = vmatprep.subr.bf16.mxu0 %v846
      %890 = vmatpush1.bf16.msra.mxu0 %v845
      %891 = vmatprep.subr.bf16.mxu0 %v849
      %892 = vmatpush1.bf16.msra.mxu0 %v848
      %893 = vmatprep.subr.bf16.mxu0 %v852
      %894 = vmatpush1.bf16.msra.mxu0 %v851
      %895 = vmatprep.subr.bf16.mxu0 %v855
      %896 = vmatpush1.bf16.msra.mxu0 %v854
      %897 = vmatprep.subr.bf16.mxu0 %v882
      %898 = vmatpush1.bf16.msra.mxu0 %v879
      %899 = vmatprep.subr.bf16.mxu0 0
      %900 = vmatpush1.bf16.msra.mxu0 0
      %901 = vmatprep.subr.bf16.mxu0 0
      %902 = vmatpush1.bf16.msra.mxu0 0
      %903 = vmatprep.subr.bf16.mxu0 0
      %904 = vmatpush1.bf16.msra.mxu0 0
      %905 = vmatprep.subr.bf16.mxu0 0
      %906 = vmatpush1.bf16.msra.mxu0 0
      %907 = vmatprep.subr.bf16.mxu0 0
      %908 = vmatpush1.bf16.msra.mxu0 0
      %909 = vmatprep.subr.bf16.mxu0 0
      %910 = vmatpush1.bf16.msra.mxu0 0
      %911 = vmatprep.subr.bf16.mxu0 0
      %912 = vmatpush1.bf16.msra.mxu0 0
      %913 = vmatprep.subr.bf16.mxu0 0
      %914 = vmatpush1.bf16.msra.mxu0 0
      %915 = vmatprep.subr.bf16.mxu0 0
      %916 = vmatpush1.bf16.msra.mxu0 0
      %917 = vmatprep.subr.bf16.mxu0 0
      %918 = vmatpush1.bf16.msra.mxu0 0
      %919 = vmatprep.mubr.bf16.mxu0 0
      %920 = vmatmul.mubr.bf16.gmra.mrb[0].mxu0 %v876
      %v921 = vpop.f32.mrb[0].mxu0
      %v922 = vadd.f32 %v741, %v921
      %v923 = vpop.f32.mrb[0].mxu0
      %v924 = vadd.f32 %v743, %v923
      %v925 = vpop.f32.mrb[0].mxu0
      %v926 = vpop.f32.mrb[0].mxu0
      %927 = vdwg.mxu0
      %928 = vmatprep.subr.bf16.mxu0 0
      %929 = vmatpush1.bf16.msra.mxu0 %v844
      %930 = vmatprep.subr.bf16.mxu0 0
      %931 = vmatpush1.bf16.msra.mxu0 %v847
      %932 = vmatprep.subr.bf16.mxu0 0
      %933 = vmatpush1.bf16.msra.mxu0 %v850
      %934 = vmatprep.subr.bf16.mxu0 0
      %935 = vmatpush1.bf16.msra.mxu0 %v853
      %936 = vmatprep.subr.bf16.mxu0 0
      %937 = vmatpush1.bf16.msra.mxu0 %v856
      %938 = vmatprep.subr.bf16.mxu0 0
      %939 = vmatpush1.bf16.msra.mxu0 %v885
      %940 = vmatprep.subr.bf16.mxu0 0
      %941 = vmatpush1.bf16.msra.mxu0 0
      %942 = vmatprep.subr.bf16.mxu0 0
      %943 = vmatpush1.bf16.msra.mxu0 0
      %944 = vmatprep.subr.bf16.mxu0 0
      %945 = vmatpush1.bf16.msra.mxu0 0
      %946 = vmatprep.subr.bf16.mxu0 0
      %947 = vmatpush1.bf16.msra.mxu0 0
      %948 = vmatprep.subr.bf16.mxu0 0
      %949 = vmatpush1.bf16.msra.mxu0 0
      %950 = vmatprep.subr.bf16.mxu0 0
      %951 = vmatpush1.bf16.msra.mxu0 0
      %952 = vmatprep.subr.bf16.mxu0 0
      %953 = vmatpush1.bf16.msra.mxu0 0
      %954 = vmatprep.subr.bf16.mxu0 0
      %955 = vmatpush1.bf16.msra.mxu0 0
      %956 = vmatprep.subr.bf16.mxu0 0
      %957 = vmatpush1.bf16.msra.mxu0 0
      %958 = vmatprep.subr.bf16.mxu0 0
      %959 = vmatpush1.bf16.msra.mxu0 0
      %960 = vmatprep.mubr.bf16.mxu0 0
      %961 = vmatmul.mubr.bf16.gmra.mrb[0].mxu0 %v876
      %v962 = vpop.f32.mrb[0].mxu0
      %v963 = vadd.f32 %v782, %v962
      %v964 = vpop.f32.mrb[0].mxu0
      %v965 = vpop.f32.mrb[0].mxu0
      %v966 = vpop.f32.mrb[0].mxu0
      %967 = vdwg.mxu0
      %v968 = vld [vmem:[%s517] sm:$0x1]
      %s969 = scalar_lea.vmem %s6, 264
      %v970 = vld [vmem:[%s969] sm:$0xff]
      %v971 = vld [vmem:[%s969 + $0x8] sm:$0xf]
      %v972 = vld [vmem:[%s969 + $0xc] sm:$0xff]
      %v973 = vld [vmem:[%s969 + $0x14] sm:$0xf]
      %v974 = vld [vmem:[%s969 + $0x18] sm:$0xff]
      %v975 = vld [vmem:[%s969 + $0x20] sm:$0xf]
      %v976 = vld [vmem:[%s969 + $0x24] sm:$0xff]
      %v977 = vld [vmem:[%s969 + $0x2c] sm:$0xf]
      %v978 = vld [vmem:[%s969 + $0x30] sm:$0xff]
      %v979 = vld [vmem:[%s969 + $0x38] sm:$0xf]
      %v980 = vld [vmem:[%s969 + $0x3c] sm:$0xff]
      %v981 = vld [vmem:[%s969 + $0x44] sm:$0xf]
      %v982 = vld [vmem:[%s969 + $0x48] sm:$0xff]
      %v983 = vld [vmem:[%s969 + $0x50] sm:$0xf]
      %v984 = vld [vmem:[%s969 + $0x54] sm:$0xff]
      %v985 = vld [vmem:[%s969 + $0x5c] sm:$0xf]
      %v986 = vld [vmem:[%s969 + $0x60] sm:$0xff]
      %v987 = vld [vmem:[%s969 + $0x68] sm:$0xf]
      %v988 = vld [vmem:[%s969 + $0x6c] sm:$0xff]
      %v989 = vld [vmem:[%s969 + $0x74] sm:$0xf]
      %v990 = vld [vmem:[%s969 + $0x78] sm:$0x33]
      %v991 = vld [vmem:[%s969 + $0x80] sm:$0x3]
      %v1014 = vunpack.c.l.b16 %v970
      %v1015 = vunpack.c.h.b16 %v970
      %v1016 = vunpack.c.l.b16 %v971
      %v1017 = vunpack.c.l.b16 %v972
      %v1018 = vunpack.c.h.b16 %v972
      %v1019 = vunpack.c.l.b16 %v973
      %v1020 = vunpack.c.l.b16 %v974
      %v1021 = vunpack.c.h.b16 %v974
      %v1022 = vunpack.c.l.b16 %v975
      %v1023 = vunpack.c.l.b16 %v976
      %v1024 = vunpack.c.h.b16 %v976
      %v1025 = vunpack.c.l.b16 %v977
      %v1026 = vunpack.c.l.b16 %v978
      %v1027 = vunpack.c.h.b16 %v978
      %v1028 = vunpack.c.l.b16 %v979
      %v1029 = vunpack.c.l.b16 %v980
      %v1030 = vunpack.c.h.b16 %v980
      %v1031 = vunpack.c.l.b16 %v981
      %v1032 = vunpack.c.l.b16 %v982
      %v1033 = vunpack.c.h.b16 %v982
      %v1034 = vunpack.c.l.b16 %v983
      %v1035 = vunpack.c.l.b16 %v984
      %v1036 = vunpack.c.h.b16 %v984
      %v1037 = vunpack.c.l.b16 %v985
      %v1038 = vunpack.c.l.b16 %v986
      %v1039 = vunpack.c.h.b16 %v986
      %v1040 = vunpack.c.l.b16 %v987
      %v1041 = vunpack.c.l.b16 %v988
      %v1042 = vunpack.c.h.b16 %v988
      %v1043 = vunpack.c.l.b16 %v989
      %v1044 = vunpack.c.l.b16 %v990
      %v1045 = vunpack.c.h.b16 %v990
      %v1046 = vunpack.c.l.b16 %v991
      %v1047 = vpack.c.b16 %v1017, %v1014
      %v1048 = vpack.c.b16 %v1018, %v1015
      %v1049 = vpack.c.b16 %v1019, %v1016
      %v1050 = vpack.c.b16 %v1023, %v1020
      %v1051 = vpack.c.b16 %v1024, %v1021
      %v1052 = vpack.c.b16 %v1025, %v1022
      %v1053 = vpack.c.b16 %v1029, %v1026
      %v1054 = vpack.c.b16 %v1030, %v1027
      %v1055 = vpack.c.b16 %v1031, %v1028
      %v1056 = vpack.c.b16 %v1035, %v1032
      %v1057 = vpack.c.b16 %v1036, %v1033
      %v1058 = vpack.c.b16 %v1037, %v1034
      %v1059 = vpack.c.b16 %v1041, %v1038
      %v1060 = vpack.c.b16 %v1042, %v1039
      %v1061 = vpack.c.b16 %v1043, %v1040
      %v1062 = vpack.c.b16 %v1044, %v1044
      %v1063 = vpack.c.b16 %v1045, %v1045
      %v1064 = vpack.c.b16 %v1046, %v1046
      %v1081 = vsel %vm692, %v968, 0
      %v1084 = vsel %vm696, %v1062, 0
      %v1087 = vsel %vm696, %v1063, 0
      %v1090 = vsel %vm696, %v1064, 0
      %1092 = vmatprep.subr.bf16.mxu0 %v1048
      %1093 = vmatpush1.bf16.msra.mxu0 %v1047
      %1094 = vmatprep.subr.bf16.mxu0 %v1051
      %1095 = vmatpush1.bf16.msra.mxu0 %v1050
      %1096 = vmatprep.subr.bf16.mxu0 %v1054
      %1097 = vmatpush1.bf16.msra.mxu0 %v1053
      %1098 = vmatprep.subr.bf16.mxu0 %v1057
      %1099 = vmatpush1.bf16.msra.mxu0 %v1056
      %1100 = vmatprep.subr.bf16.mxu0 %v1060
      %1101 = vmatpush1.bf16.msra.mxu0 %v1059
      %1102 = vmatprep.subr.bf16.mxu0 %v1087
      %1103 = vmatpush1.bf16.msra.mxu0 %v1084
      %1104 = vmatprep.subr.bf16.mxu0 0
      %1105 = vmatpush1.bf16.msra.mxu0 0
      %1106 = vmatprep.subr.bf16.mxu0 0
      %1107 = vmatpush1.bf16.msra.mxu0 0
      %1108 = vmatprep.subr.bf16.mxu0 0
      %1109 = vmatpush1.bf16.msra.mxu0 0
      %1110 = vmatprep.subr.bf16.mxu0 0
      %1111 = vmatpush1.bf16.msra.mxu0 0
      %1112 = vmatprep.subr.bf16.mxu0 0
      %1113 = vmatpush1.bf16.msra.mxu0 0
      %1114 = vmatprep.subr.bf16.mxu0 0
      %1115 = vmatpush1.bf16.msra.mxu0 0
      %1116 = vmatprep.subr.bf16.mxu0 0
      %1117 = vmatpush1.bf16.msra.mxu0 0
      %1118 = vmatprep.subr.bf16.mxu0 0
      %1119 = vmatpush1.bf16.msra.mxu0 0
      %1120 = vmatprep.subr.bf16.mxu0 0
      %1121 = vmatpush1.bf16.msra.mxu0 0
      %1122 = vmatprep.subr.bf16.mxu0 0
      %1123 = vmatpush1.bf16.msra.mxu0 0
      %1124 = vmatprep.mubr.bf16.mxu0 0
      %1125 = vmatmul.mubr.bf16.gmra.mrb[0].mxu0 %v1081
      %v1126 = vpop.f32.mrb[0].mxu0
      %v1127 = vadd.f32 0.0, %v1126
      %v1128 = vpop.f32.mrb[0].mxu0
      %v1129 = vadd.f32 0.0, %v1128
      %v1130 = vpop.f32.mrb[0].mxu0
      %v1131 = vpop.f32.mrb[0].mxu0
      %1132 = vdwg.mxu0
      %1133 = vmatprep.subr.bf16.mxu0 0
      %1134 = vmatpush1.bf16.msra.mxu0 %v1049
      %1135 = vmatprep.subr.bf16.mxu0 0
      %1136 = vmatpush1.bf16.msra.mxu0 %v1052
      %1137 = vmatprep.subr.bf16.mxu0 0
      %1138 = vmatpush1.bf16.msra.mxu0 %v1055
      %1139 = vmatprep.subr.bf16.mxu0 0
      %1140 = vmatpush1.bf16.msra.mxu0 %v1058
      %1141 = vmatprep.subr.bf16.mxu0 0
      %1142 = vmatpush1.bf16.msra.mxu0 %v1061
      %1143 = vmatprep.subr.bf16.mxu0 0
      %1144 = vmatpush1.bf16.msra.mxu0 %v1090
      %1145 = vmatprep.subr.bf16.mxu0 0
      %1146 = vmatpush1.bf16.msra.mxu0 0
      %1147 = vmatprep.subr.bf16.mxu0 0
      %1148 = vmatpush1.bf16.msra.mxu0 0
      %1149 = vmatprep.subr.bf16.mxu0 0
      %1150 = vmatpush1.bf16.msra.mxu0 0
      %1151 = vmatprep.subr.bf16.mxu0 0
      %1152 = vmatpush1.bf16.msra.mxu0 0
      %1153 = vmatprep.subr.bf16.mxu0 0
      %1154 = vmatpush1.bf16.msra.mxu0 0
      %1155 = vmatprep.subr.bf16.mxu0 0
      %1156 = vmatpush1.bf16.msra.mxu0 0
      %1157 = vmatprep.subr.bf16.mxu0 0
      %1158 = vmatpush1.bf16.msra.mxu0 0
      %1159 = vmatprep.subr.bf16.mxu0 0
      %1160 = vmatpush1.bf16.msra.mxu0 0
      %1161 = vmatprep.subr.bf16.mxu0 0
      %1162 = vmatpush1.bf16.msra.mxu0 0
      %1163 = vmatprep.subr.bf16.mxu0 0
      %1164 = vmatpush1.bf16.msra.mxu0 0
      %1165 = vmatprep.mubr.bf16.mxu0 0
      %1166 = vmatmul.mubr.bf16.gmra.mrb[0].mxu0 %v1081
      %v1167 = vpop.f32.mrb[0].mxu0
      %v1168 = vadd.f32 0.0, %v1167
      %v1169 = vpop.f32.mrb[0].mxu0
      %v1170 = vpop.f32.mrb[0].mxu0
      %v1171 = vpop.f32.mrb[0].mxu0
      %1172 = vdwg.mxu0
      %v1173 = vadd.f32 %v922, %v1127
      %v1174 = vadd.f32 %v924, %v1129
      %v1175 = vadd.f32 %v963, %v1168
      %v1176 = vld [vmem:[%s527] sm:$0x1]
      %s1177 = scalar_lea.vmem %s6, 396
      %v1178 = vld [vmem:[%s1177] sm:$0xff]
      %v1179 = vld [vmem:[%s1177 + $0x8] sm:$0xf]
      %v1180 = vld [vmem:[%s1177 + $0xc] sm:$0xff]
      %v1181 = vld [vmem:[%s1177 + $0x14] sm:$0xf]
      %v1182 = vld [vmem:[%s1177 + $0x18] sm:$0xff]
      %v1183 = vld [vmem:[%s1177 + $0x20] sm:$0xf]
      %v1184 = vld [vmem:[%s1177 + $0x24] sm:$0xff]
      %v1185 = vld [vmem:[%s1177 + $0x2c] sm:$0xf]
      %v1186 = vld [vmem:[%s1177 + $0x30] sm:$0xff]
      %v1187 = vld [vmem:[%s1177 + $0x38] sm:$0xf]
      %v1188 = vld [vmem:[%s1177 + $0x3c] sm:$0xff]
      %v1189 = vld [vmem:[%s1177 + $0x44] sm:$0xf]
      %v1190 = vld [vmem:[%s1177 + $0x48] sm:$0xff]
      %v1191 = vld [vmem:[%s1177 + $0x50] sm:$0xf]
      %v1192 = vld [vmem:[%s1177 + $0x54] sm:$0xff]
      %v1193 = vld [vmem:[%s1177 + $0x5c] sm:$0xf]
      %v1194 = vld [vmem:[%s1177 + $0x60] sm:$0xff]
      %v1195 = vld [vmem:[%s1177 + $0x68] sm:$0xf]
      %v1196 = vld [vmem:[%s1177 + $0x6c] sm:$0xff]
      %v1197 = vld [vmem:[%s1177 + $0x74] sm:$0xf]
      %v1198 = vld [vmem:[%s1177 + $0x78] sm:$0x33]
      %v1199 = vld [vmem:[%s1177 + $0x80] sm:$0x3]
      %v1222 = vunpack.c.l.b16 %v1178
      %v1223 = vunpack.c.h.b16 %v1178
      %v1224 = vunpack.c.l.b16 %v1179
      %v1225 = vunpack.c.l.b16 %v1180
      %v1226 = vunpack.c.h.b16 %v1180
      %v1227 = vunpack.c.l.b16 %v1181
      %v1228 = vunpack.c.l.b16 %v1182
      %v1229 = vunpack.c.h.b16 %v1182
      %v1230 = vunpack.c.l.b16 %v1183
      %v1231 = vunpack.c.l.b16 %v1184
      %v1232 = vunpack.c.h.b16 %v1184
      %v1233 = vunpack.c.l.b16 %v1185
      %v1234 = vunpack.c.l.b16 %v1186
      %v1235 = vunpack.c.h.b16 %v1186
      %v1236 = vunpack.c.l.b16 %v1187
      %v1237 = vunpack.c.l.b16 %v1188
      %v1238 = vunpack.c.h.b16 %v1188
      %v1239 = vunpack.c.l.b16 %v1189
      %v1240 = vunpack.c.l.b16 %v1190
      %v1241 = vunpack.c.h.b16 %v1190
      %v1242 = vunpack.c.l.b16 %v1191
      %v1243 = vunpack.c.l.b16 %v1192
      %v1244 = vunpack.c.h.b16 %v1192
      %v1245 = vunpack.c.l.b16 %v1193
      %v1246 = vunpack.c.l.b16 %v1194
      %v1247 = vunpack.c.h.b16 %v1194
      %v1248 = vunpack.c.l.b16 %v1195
      %v1249 = vunpack.c.l.b16 %v1196
      %v1250 = vunpack.c.h.b16 %v1196
      %v1251 = vunpack.c.l.b16 %v1197
      %v1252 = vunpack.c.l.b16 %v1198
      %v1253 = vunpack.c.h.b16 %v1198
      %v1254 = vunpack.c.l.b16 %v1199
      %v1255 = vpack.c.b16 %v1225, %v1222
      %v1256 = vpack.c.b16 %v1226, %v1223
      %v1257 = vpack.c.b16 %v1227, %v1224
      %v1258 = vpack.c.b16 %v1231, %v1228
      %v1259 = vpack.c.b16 %v1232, %v1229
      %v1260 = vpack.c.b16 %v1233, %v1230
      %v1261 = vpack.c.b16 %v1237, %v1234
      %v1262 = vpack.c.b16 %v1238, %v1235
      %v1263 = vpack.c.b16 %v1239, %v1236
      %v1264 = vpack.c.b16 %v1243, %v1240
      %v1265 = vpack.c.b16 %v1244, %v1241
      %v1266 = vpack.c.b16 %v1245, %v1242
      %v1267 = vpack.c.b16 %v1249, %v1246
      %v1268 = vpack.c.b16 %v1250, %v1247
      %v1269 = vpack.c.b16 %v1251, %v1248
      %v1270 = vpack.c.b16 %v1252, %v1252
      %v1271 = vpack.c.b16 %v1253, %v1253
      %v1272 = vpack.c.b16 %v1254, %v1254
      %v1289 = vsel %vm692, %v1176, 0
      %v1292 = vsel %vm696, %v1270, 0
      %v1295 = vsel %vm696, %v1271, 0
      %v1298 = vsel %vm696, %v1272, 0
      %1300 = vmatprep.subr.bf16.mxu0 %v1256
      %1301 = vmatpush1.bf16.msra.mxu0 %v1255
      %1302 = vmatprep.subr.bf16.mxu0 %v1259
      %1303 = vmatpush1.bf16.msra.mxu0 %v1258
      %1304 = vmatprep.subr.bf16.mxu0 %v1262
      %1305 = vmatpush1.bf16.msra.mxu0 %v1261
      %1306 = vmatprep.subr.bf16.mxu0 %v1265
      %1307 = vmatpush1.bf16.msra.mxu0 %v1264
      %1308 = vmatprep.subr.bf16.mxu0 %v1268
      %1309 = vmatpush1.bf16.msra.mxu0 %v1267
      %1310 = vmatprep.subr.bf16.mxu0 %v1295
      %1311 = vmatpush1.bf16.msra.mxu0 %v1292
      %1312 = vmatprep.subr.bf16.mxu0 0
      %1313 = vmatpush1.bf16.msra.mxu0 0
      %1314 = vmatprep.subr.bf16.mxu0 0
      %1315 = vmatpush1.bf16.msra.mxu0 0
      %1316 = vmatprep.subr.bf16.mxu0 0
      %1317 = vmatpush1.bf16.msra.mxu0 0
      %1318 = vmatprep.subr.bf16.mxu0 0
      %1319 = vmatpush1.bf16.msra.mxu0 0
      %1320 = vmatprep.subr.bf16.mxu0 0
      %1321 = vmatpush1.bf16.msra.mxu0 0
      %1322 = vmatprep.subr.bf16.mxu0 0
      %1323 = vmatpush1.bf16.msra.mxu0 0
      %1324 = vmatprep.subr.bf16.mxu0 0
      %1325 = vmatpush1.bf16.msra.mxu0 0
      %1326 = vmatprep.subr.bf16.mxu0 0
      %1327 = vmatpush1.bf16.msra.mxu0 0
      %1328 = vmatprep.subr.bf16.mxu0 0
      %1329 = vmatpush1.bf16.msra.mxu0 0
      %1330 = vmatprep.subr.bf16.mxu0 0
      %1331 = vmatpush1.bf16.msra.mxu0 0
      %1332 = vmatprep.mubr.bf16.mxu0 0
      %1333 = vmatmul.mubr.bf16.gmra.mrb[0].mxu0 %v1289
      %v1334 = vpop.f32.mrb[0].mxu0
      %v1335 = vadd.f32 0.0, %v1334
      %v1336 = vpop.f32.mrb[0].mxu0
      %v1337 = vadd.f32 0.0, %v1336
      %v1338 = vpop.f32.mrb[0].mxu0
      %v1339 = vpop.f32.mrb[0].mxu0
      %1340 = vdwg.mxu0
      %1341 = vmatprep.subr.bf16.mxu0 0
      %1342 = vmatpush1.bf16.msra.mxu0 %v1257
      %1343 = vmatprep.subr.bf16.mxu0 0
      %1344 = vmatpush1.bf16.msra.mxu0 %v1260
      %1345 = vmatprep.subr.bf16.mxu0 0
      %1346 = vmatpush1.bf16.msra.mxu0 %v1263
      %1347 = vmatprep.subr.bf16.mxu0 0
      %1348 = vmatpush1.bf16.msra.mxu0 %v1266
      %1349 = vmatprep.subr.bf16.mxu0 0
      %1350 = vmatpush1.bf16.msra.mxu0 %v1269
      %1351 = vmatprep.subr.bf16.mxu0 0
      %1352 = vmatpush1.bf16.msra.mxu0 %v1298
      %1353 = vmatprep.subr.bf16.mxu0 0
      %1354 = vmatpush1.bf16.msra.mxu0 0
      %1355 = vmatprep.subr.bf16.mxu0 0
      %1356 = vmatpush1.bf16.msra.mxu0 0
      %1357 = vmatprep.subr.bf16.mxu0 0
      %1358 = vmatpush1.bf16.msra.mxu0 0
      %1359 = vmatprep.subr.bf16.mxu0 0
      %1360 = vmatpush1.bf16.msra.mxu0 0
      %1361 = vmatprep.subr.bf16.mxu0 0
      %1362 = vmatpush1.bf16.msra.mxu0 0
      %1363 = vmatprep.subr.bf16.mxu0 0
      %1364 = vmatpush1.bf16.msra.mxu0 0
      %1365 = vmatprep.subr.bf16.mxu0 0
      %1366 = vmatpush1.bf16.msra.mxu0 0
      %1367 = vmatprep.subr.bf16.mxu0 0
      %1368 = vmatpush1.bf16.msra.mxu0 0
      %1369 = vmatprep.subr.bf16.mxu0 0
      %1370 = vmatpush1.bf16.msra.mxu0 0
      %1371 = vmatprep.subr.bf16.mxu0 0
      %1372 = vmatpush1.bf16.msra.mxu0 0
      %1373 = vmatprep.mubr.bf16.mxu0 0
      %1374 = vmatmul.mubr.bf16.gmra.mrb[0].mxu0 %v1289
      %v1375 = vpop.f32.mrb[0].mxu0
      %v1376 = vadd.f32 0.0, %v1375
      %v1377 = vpop.f32.mrb[0].mxu0
      %v1378 = vpop.f32.mrb[0].mxu0
      %v1379 = vpop.f32.mrb[0].mxu0
      %1380 = vdwg.mxu0
      %v1381 = vadd.f32 %v1173, %v1335
      %v1382 = vadd.f32 %v1174, %v1337
      %v1383 = vadd.f32 %v1175, %v1376
      %v1384 = vld [vmem:[%s537] sm:$0x1]
      %s1385 = scalar_lea.vmem %s6, 528
      %v1386 = vld [vmem:[%s1385] sm:$0xff]
      %v1387 = vld [vmem:[%s1385 + $0x8] sm:$0xf]
      %v1388 = vld [vmem:[%s1385 + $0xc] sm:$0xff]
      %v1389 = vld [vmem:[%s1385 + $0x14] sm:$0xf]
      %v1390 = vld [vmem:[%s1385 + $0x18] sm:$0xff]
      %v1391 = vld [vmem:[%s1385 + $0x20] sm:$0xf]
      %v1392 = vld [vmem:[%s1385 + $0x24] sm:$0xff]
      %v1393 = vld [vmem:[%s1385 + $0x2c] sm:$0xf]
      %v1394 = vld [vmem:[%s1385 + $0x30] sm:$0xff]
      %v1395 = vld [vmem:[%s1385 + $0x38] sm:$0xf]
      %v1396 = vld [vmem:[%s1385 + $0x3c] sm:$0xff]
      %v1397 = vld [vmem:[%s1385 + $0x44] sm:$0xf]
      %v1398 = vld [vmem:[%s1385 + $0x48] sm:$0xff]
      %v1399 = vld [vmem:[%s1385 + $0x50] sm:$0xf]
      %v1400 = vld [vmem:[%s1385 + $0x54] sm:$0xff]
      %v1401 = vld [vmem:[%s1385 + $0x5c] sm:$0xf]
      %v1402 = vld [vmem:[%s1385 + $0x60] sm:$0xff]
      %v1403 = vld [vmem:[%s1385 + $0x68] sm:$0xf]
      %v1404 = vld [vmem:[%s1385 + $0x6c] sm:$0xff]
      %v1405 = vld [vmem:[%s1385 + $0x74] sm:$0xf]
      %v1406 = vld [vmem:[%s1385 + $0x78] sm:$0x33]
      %v1407 = vld [vmem:[%s1385 + $0x80] sm:$0x3]
      %v1430 = vunpack.c.l.b16 %v1386
      %v1431 = vunpack.c.h.b16 %v1386
      %v1432 = vunpack.c.l.b16 %v1387
      %v1433 = vunpack.c.l.b16 %v1388
      %v1434 = vunpack.c.h.b16 %v1388
      %v1435 = vunpack.c.l.b16 %v1389
      %v1436 = vunpack.c.l.b16 %v1390
      %v1437 = vunpack.c.h.b16 %v1390
      %v1438 = vunpack.c.l.b16 %v1391
      %v1439 = vunpack.c.l.b16 %v1392
      %v1440 = vunpack.c.h.b16 %v1392
      %v1441 = vunpack.c.l.b16 %v1393
      %v1442 = vunpack.c.l.b16 %v1394
      %v1443 = vunpack.c.h.b16 %v1394
      %v1444 = vunpack.c.l.b16 %v1395
      %v1445 = vunpack.c.l.b16 %v1396
      %v1446 = vunpack.c.h.b16 %v1396
      %v1447 = vunpack.c.l.b16 %v1397
      %v1448 = vunpack.c.l.b16 %v1398
      %v1449 = vunpack.c.h.b16 %v1398
      %v1450 = vunpack.c.l.b16 %v1399
      %v1451 = vunpack.c.l.b16 %v1400
      %v1452 = vunpack.c.h.b16 %v1400
      %v1453 = vunpack.c.l.b16 %v1401
      %v1454 = vunpack.c.l.b16 %v1402
      %v1455 = vunpack.c.h.b16 %v1402
      %v1456 = vunpack.c.l.b16 %v1403
      %v1457 = vunpack.c.l.b16 %v1404
      %v1458 = vunpack.c.h.b16 %v1404
      %v1459 = vunpack.c.l.b16 %v1405
      %v1460 = vunpack.c.l.b16 %v1406
      %v1461 = vunpack.c.h.b16 %v1406
      %v1462 = vunpack.c.l.b16 %v1407
      %v1463 = vpack.c.b16 %v1433, %v1430
      %v1464 = vpack.c.b16 %v1434, %v1431
      %v1465 = vpack.c.b16 %v1435, %v1432
      %v1466 = vpack.c.b16 %v1439, %v1436
      %v1467 = vpack.c.b16 %v1440, %v1437
      %v1468 = vpack.c.b16 %v1441, %v1438
      %v1469 = vpack.c.b16 %v1445, %v1442
      %v1470 = vpack.c.b16 %v1446, %v1443
      %v1471 = vpack.c.b16 %v1447, %v1444
      %v1472 = vpack.c.b16 %v1451, %v1448
      %v1473 = vpack.c.b16 %v1452, %v1449
      %v1474 = vpack.c.b16 %v1453, %v1450
      %v1475 = vpack.c.b16 %v1457, %v1454
      %v1476 = vpack.c.b16 %v1458, %v1455
      %v1477 = vpack.c.b16 %v1459, %v1456
      %v1478 = vpack.c.b16 %v1460, %v1460
      %v1479 = vpack.c.b16 %v1461, %v1461
      %v1480 = vpack.c.b16 %v1462, %v1462
      %v1497 = vsel %vm692, %v1384, 0
      %v1500 = vsel %vm696, %v1478, 0
      %v1503 = vsel %vm696, %v1479, 0
      %v1506 = vsel %vm696, %v1480, 0
      %1508 = vmatprep.subr.bf16.mxu0 %v1464
      %1509 = vmatpush1.bf16.msra.mxu0 %v1463
      %1510 = vmatprep.subr.bf16.mxu0 %v1467
      %1511 = vmatpush1.bf16.msra.mxu0 %v1466
      %1512 = vmatprep.subr.bf16.mxu0 %v1470
      %1513 = vmatpush1.bf16.msra.mxu0 %v1469
      %1514 = vmatprep.subr.bf16.mxu0 %v1473
      %1515 = vmatpush1.bf16.msra.mxu0 %v1472
      %1516 = vmatprep.subr.bf16.mxu0 %v1476
      %1517 = vmatpush1.bf16.msra.mxu0 %v1475
      %1518 = vmatprep.subr.bf16.mxu0 %v1503
      %1519 = vmatpush1.bf16.msra.mxu0 %v1500
      %1520 = vmatprep.subr.bf16.mxu0 0
      %1521 = vmatpush1.bf16.msra.mxu0 0
      %1522 = vmatprep.subr.bf16.mxu0 0
      %1523 = vmatpush1.bf16.msra.mxu0 0
      %1524 = vmatprep.subr.bf16.mxu0 0
      %1525 = vmatpush1.bf16.msra.mxu0 0
      %1526 = vmatprep.subr.bf16.mxu0 0
      %1527 = vmatpush1.bf16.msra.mxu0 0
      %1528 = vmatprep.subr.bf16.mxu0 0
      %1529 = vmatpush1.bf16.msra.mxu0 0
      %1530 = vmatprep.subr.bf16.mxu0 0
      %1531 = vmatpush1.bf16.msra.mxu0 0
      %1532 = vmatprep.subr.bf16.mxu0 0
      %1533 = vmatpush1.bf16.msra.mxu0 0
      %1534 = vmatprep.subr.bf16.mxu0 0
      %1535 = vmatpush1.bf16.msra.mxu0 0
      %1536 = vmatprep.subr.bf16.mxu0 0
      %1537 = vmatpush1.bf16.msra.mxu0 0
      %1538 = vmatprep.subr.bf16.mxu0 0
      %1539 = vmatpush1.bf16.msra.mxu0 0
      %1540 = vmatprep.mubr.bf16.mxu0 0
      %1541 = vmatmul.mubr.bf16.gmra.mrb[0].mxu0 %v1497
      %v1542 = vpop.f32.mrb[0].mxu0
      %v1543 = vadd.f32 0.0, %v1542
      %v1544 = vpop.f32.mrb[0].mxu0
      %v1545 = vadd.f32 0.0, %v1544
      %v1546 = vpop.f32.mrb[0].mxu0
      %v1547 = vpop.f32.mrb[0].mxu0
      %1548 = vdwg.mxu0
      %1549 = vmatprep.subr.bf16.mxu0 0
      %1550 = vmatpush1.bf16.msra.mxu0 %v1465
      %1551 = vmatprep.subr.bf16.mxu0 0
      %1552 = vmatpush1.bf16.msra.mxu0 %v1468
      %1553 = vmatprep.subr.bf16.mxu0 0
      %1554 = vmatpush1.bf16.msra.mxu0 %v1471
      %1555 = vmatprep.subr.bf16.mxu0 0
      %1556 = vmatpush1.bf16.msra.mxu0 %v1474
      %1557 = vmatprep.subr.bf16.mxu0 0
      %1558 = vmatpush1.bf16.msra.mxu0 %v1477
      %1559 = vmatprep.subr.bf16.mxu0 0
      %1560 = vmatpush1.bf16.msra.mxu0 %v1506
      %1561 = vmatprep.subr.bf16.mxu0 0
      %1562 = vmatpush1.bf16.msra.mxu0 0
      %1563 = vmatprep.subr.bf16.mxu0 0
      %1564 = vmatpush1.bf16.msra.mxu0 0
      %1565 = vmatprep.subr.bf16.mxu0 0
      %1566 = vmatpush1.bf16.msra.mxu0 0
      %1567 = vmatprep.subr.bf16.mxu0 0
      %1568 = vmatpush1.bf16.msra.mxu0 0
      %1569 = vmatprep.subr.bf16.mxu0 0
      %1570 = vmatpush1.bf16.msra.mxu0 0
      %1571 = vmatprep.subr.bf16.mxu0 0
      %1572 = vmatpush1.bf16.msra.mxu0 0
      %1573 = vmatprep.subr.bf16.mxu0 0
      %1574 = vmatpush1.bf16.msra.mxu0 0
      %1575 = vmatprep.subr.bf16.mxu0 0
      %1576 = vmatpush1.bf16.msra.mxu0 0
      %1577 = vmatprep.subr.bf16.mxu0 0
      %1578 = vmatpush1.bf16.msra.mxu0 0
      %1579 = vmatprep.subr.bf16.mxu0 0
      %1580 = vmatpush1.bf16.msra.mxu0 0
      %1581 = vmatprep.mubr.bf16.mxu0 0
      %1582 = vmatmul.mubr.bf16.gmra.mrb[0].mxu0 %v1497
      %v1583 = vpop.f32.mrb[0].mxu0
      %v1584 = vadd.f32 0.0, %v1583
      %v1585 = vpop.f32.mrb[0].mxu0
      %v1586 = vpop.f32.mrb[0].mxu0
      %v1587 = vpop.f32.mrb[0].mxu0
      %1588 = vdwg.mxu0
      %v1589 = vadd.f32 %v1381, %v1543
      %v1590 = vadd.f32 %v1382, %v1545
      %v1591 = vadd.f32 %v1383, %v1584
      %v1592 = vld [vmem:[%s547] sm:$0x1]
      %s1593 = scalar_lea.vmem %s6, 660
      %v1594 = vld [vmem:[%s1593] sm:$0xff]
      %v1595 = vld [vmem:[%s1593 + $0x8] sm:$0xf]
      %v1596 = vld [vmem:[%s1593 + $0xc] sm:$0xff]
      %v1597 = vld [vmem:[%s1593 + $0x14] sm:$0xf]
      %v1598 = vld [vmem:[%s1593 + $0x18] sm:$0xff]
      %v1599 = vld [vmem:[%s1593 + $0x20] sm:$0xf]
      %v1600 = vld [vmem:[%s1593 + $0x24] sm:$0xff]
      %v1601 = vld [vmem:[%s1593 + $0x2c] sm:$0xf]
      %v1602 = vld [vmem:[%s1593 + $0x30] sm:$0xff]
      %v1603 = vld [vmem:[%s1593 + $0x38] sm:$0xf]
      %v1604 = vld [vmem:[%s1593 + $0x3c] sm:$0xff]
      %v1605 = vld [vmem:[%s1593 + $0x44] sm:$0xf]
      %v1606 = vld [vmem:[%s1593 + $0x48] sm:$0xff]
      %v1607 = vld [vmem:[%s1593 + $0x50] sm:$0xf]
      %v1608 = vld [vmem:[%s1593 + $0x54] sm:$0xff]
      %v1609 = vld [vmem:[%s1593 + $0x5c] sm:$0xf]
      %v1610 = vld [vmem:[%s1593 + $0x60] sm:$0xff]
      %v1611 = vld [vmem:[%s1593 + $0x68] sm:$0xf]
      %v1612 = vld [vmem:[%s1593 + $0x6c] sm:$0xff]
      %v1613 = vld [vmem:[%s1593 + $0x74] sm:$0xf]
      %v1614 = vld [vmem:[%s1593 + $0x78] sm:$0x33]
      %v1615 = vld [vmem:[%s1593 + $0x80] sm:$0x3]
      %v1638 = vunpack.c.l.b16 %v1594
      %v1639 = vunpack.c.h.b16 %v1594
      %v1640 = vunpack.c.l.b16 %v1595
      %v1641 = vunpack.c.l.b16 %v1596
      %v1642 = vunpack.c.h.b16 %v1596
      %v1643 = vunpack.c.l.b16 %v1597
      %v1644 = vunpack.c.l.b16 %v1598
      %v1645 = vunpack.c.h.b16 %v1598
      %v1646 = vunpack.c.l.b16 %v1599
      %v1647 = vunpack.c.l.b16 %v1600
      %v1648 = vunpack.c.h.b16 %v1600
      %v1649 = vunpack.c.l.b16 %v1601
      %v1650 = vunpack.c.l.b16 %v1602
      %v1651 = vunpack.c.h.b16 %v1602
      %v1652 = vunpack.c.l.b16 %v1603
      %v1653 = vunpack.c.l.b16 %v1604
      %v1654 = vunpack.c.h.b16 %v1604
      %v1655 = vunpack.c.l.b16 %v1605
      %v1656 = vunpack.c.l.b16 %v1606
      %v1657 = vunpack.c.h.b16 %v1606
      %v1658 = vunpack.c.l.b16 %v1607
      %v1659 = vunpack.c.l.b16 %v1608
      %v1660 = vunpack.c.h.b16 %v1608
      %v1661 = vunpack.c.l.b16 %v1609
      %v1662 = vunpack.c.l.b16 %v1610
      %v1663 = vunpack.c.h.b16 %v1610
      %v1664 = vunpack.c.l.b16 %v1611
      %v1665 = vunpack.c.l.b16 %v1612
      %v1666 = vunpack.c.h.b16 %v1612
      %v1667 = vunpack.c.l.b16 %v1613
      %v1668 = vunpack.c.l.b16 %v1614
      %v1669 = vunpack.c.h.b16 %v1614
      %v1670 = vunpack.c.l.b16 %v1615
      %v1671 = vpack.c.b16 %v1641, %v1638
      %v1672 = vpack.c.b16 %v1642, %v1639
      %v1673 = vpack.c.b16 %v1643, %v1640
      %v1674 = vpack.c.b16 %v1647, %v1644
      %v1675 = vpack.c.b16 %v1648, %v1645
      %v1676 = vpack.c.b16 %v1649, %v1646
      %v1677 = vpack.c.b16 %v1653, %v1650
      %v1678 = vpack.c.b16 %v1654, %v1651
      %v1679 = vpack.c.b16 %v1655, %v1652
      %v1680 = vpack.c.b16 %v1659, %v1656
      %v1681 = vpack.c.b16 %v1660, %v1657
      %v1682 = vpack.c.b16 %v1661, %v1658
      %v1683 = vpack.c.b16 %v1665, %v1662
      %v1684 = vpack.c.b16 %v1666, %v1663
      %v1685 = vpack.c.b16 %v1667, %v1664
      %v1686 = vpack.c.b16 %v1668, %v1668
      %v1687 = vpack.c.b16 %v1669, %v1669
      %v1688 = vpack.c.b16 %v1670, %v1670
      %v1705 = vsel %vm692, %v1592, 0
      %v1708 = vsel %vm696, %v1686, 0
      %v1711 = vsel %vm696, %v1687, 0
      %v1714 = vsel %vm696, %v1688, 0
      %1716 = vmatprep.subr.bf16.mxu0 %v1672
      %1717 = vmatpush1.bf16.msra.mxu0 %v1671
      %1718 = vmatprep.subr.bf16.mxu0 %v1675
      %1719 = vmatpush1.bf16.msra.mxu0 %v1674
      %1720 = vmatprep.subr.bf16.mxu0 %v1678
      %1721 = vmatpush1.bf16.msra.mxu0 %v1677
      %1722 = vmatprep.subr.bf16.mxu0 %v1681
      %1723 = vmatpush1.bf16.msra.mxu0 %v1680
      %1724 = vmatprep.subr.bf16.mxu0 %v1684
      %1725 = vmatpush1.bf16.msra.mxu0 %v1683
      %1726 = vmatprep.subr.bf16.mxu0 %v1711
      %1727 = vmatpush1.bf16.msra.mxu0 %v1708
      %1728 = vmatprep.subr.bf16.mxu0 0
      %1729 = vmatpush1.bf16.msra.mxu0 0
      %1730 = vmatprep.subr.bf16.mxu0 0
      %1731 = vmatpush1.bf16.msra.mxu0 0
      %1732 = vmatprep.subr.bf16.mxu0 0
      %1733 = vmatpush1.bf16.msra.mxu0 0
      %1734 = vmatprep.subr.bf16.mxu0 0
      %1735 = vmatpush1.bf16.msra.mxu0 0
      %1736 = vmatprep.subr.bf16.mxu0 0
      %1737 = vmatpush1.bf16.msra.mxu0 0
      %1738 = vmatprep.subr.bf16.mxu0 0
      %1739 = vmatpush1.bf16.msra.mxu0 0
      %1740 = vmatprep.subr.bf16.mxu0 0
      %1741 = vmatpush1.bf16.msra.mxu0 0
      %1742 = vmatprep.subr.bf16.mxu0 0
      %1743 = vmatpush1.bf16.msra.mxu0 0
      %1744 = vmatprep.subr.bf16.mxu0 0
      %1745 = vmatpush1.bf16.msra.mxu0 0
      %1746 = vmatprep.subr.bf16.mxu0 0
      %1747 = vmatpush1.bf16.msra.mxu0 0
      %1748 = vmatprep.mubr.bf16.mxu0 0
      %1749 = vmatmul.mubr.bf16.gmra.mrb[0].mxu0 %v1705
      %v1750 = vpop.f32.mrb[0].mxu0
      %v1751 = vadd.f32 0.0, %v1750
      %v1752 = vpop.f32.mrb[0].mxu0
      %v1753 = vadd.f32 0.0, %v1752
      %v1754 = vpop.f32.mrb[0].mxu0
      %v1755 = vpop.f32.mrb[0].mxu0
      %1756 = vdwg.mxu0
      %1757 = vmatprep.subr.bf16.mxu0 0
      %1758 = vmatpush1.bf16.msra.mxu0 %v1673
      %1759 = vmatprep.subr.bf16.mxu0 0
      %1760 = vmatpush1.bf16.msra.mxu0 %v1676
      %1761 = vmatprep.subr.bf16.mxu0 0
      %1762 = vmatpush1.bf16.msra.mxu0 %v1679
      %1763 = vmatprep.subr.bf16.mxu0 0
      %1764 = vmatpush1.bf16.msra.mxu0 %v1682
      %1765 = vmatprep.subr.bf16.mxu0 0
      %1766 = vmatpush1.bf16.msra.mxu0 %v1685
      %1767 = vmatprep.subr.bf16.mxu0 0
      %1768 = vmatpush1.bf16.msra.mxu0 %v1714
      %1769 = vmatprep.subr.bf16.mxu0 0
      %1770 = vmatpush1.bf16.msra.mxu0 0
      %1771 = vmatprep.subr.bf16.mxu0 0
      %1772 = vmatpush1.bf16.msra.mxu0 0
      %1773 = vmatprep.subr.bf16.mxu0 0
      %1774 = vmatpush1.bf16.msra.mxu0 0
      %1775 = vmatprep.subr.bf16.mxu0 0
      %1776 = vmatpush1.bf16.msra.mxu0 0
      %1777 = vmatprep.subr.bf16.mxu0 0
      %1778 = vmatpush1.bf16.msra.mxu0 0
      %1779 = vmatprep.subr.bf16.mxu0 0
      %1780 = vmatpush1.bf16.msra.mxu0 0
      %1781 = vmatprep.subr.bf16.mxu0 0
      %1782 = vmatpush1.bf16.msra.mxu0 0
      %1783 = vmatprep.subr.bf16.mxu0 0
      %1784 = vmatpush1.bf16.msra.mxu0 0
      %1785 = vmatprep.subr.bf16.mxu0 0
      %1786 = vmatpush1.bf16.msra.mxu0 0
      %1787 = vmatprep.subr.bf16.mxu0 0
      %1788 = vmatpush1.bf16.msra.mxu0 0
      %1789 = vmatprep.mubr.bf16.mxu0 0
      %1790 = vmatmul.mubr.bf16.gmra.mrb[0].mxu0 %v1705
      %v1791 = vpop.f32.mrb[0].mxu0
      %v1792 = vadd.f32 0.0, %v1791
      %v1793 = vpop.f32.mrb[0].mxu0
      %v1794 = vpop.f32.mrb[0].mxu0
      %v1795 = vpop.f32.mrb[0].mxu0
      %1796 = vdwg.mxu0
      %v1797 = vadd.f32 %v1589, %v1751
      %v1798 = vadd.f32 %v1590, %v1753
      %v1799 = vadd.f32 %v1591, %v1792
      %v1800 = vld [vmem:[%s7] sm:$0x7]
      %v1802 = vlaneseq
      %v1803 = vshrl.u32 %v1802, 7
      %v1804 = vsub.s32 0, %v1803
      %v1805 = vrot.slane %v1800, %v1804
      %v1806 = vlaneseq
      %v1807 = vshrl.u32 %v1806, 7
      %v1808 = vsub.s32 1, %v1807
      %v1809 = vrot.slane %v1800, %v1808
      %v1810 = vlaneseq
      %v1811 = vshrl.u32 %v1810, 7
      %v1812 = vsub.s32 2, %v1811
      %v1813 = vrot.slane %v1800, %v1812
      %v1817 = vadd.f32 %v1797, %v1805
      %v1818 = vadd.f32 %v1798, %v1809
      %v1819 = vadd.f32 %v1799, %v1813
      %v1820 = vtanh.pop %v1817
      %v1821 = vtanh.pop %v1818
      %v1822 = vtanh.pop %v1819
      %v1823 = vpack.c.bf16 %v1820, %v1820
      %v1824 = vpack.c.bf16 %v1821, %v1821
      %v1825 = vpack.c.bf16 %v1822, %v1822
      %v1826 = vld [vmem:[%s8] sm:$0xf]
      %v1827 = vld [vmem:[%s8 + $0x4] sm:$0xf]
      %v1828 = vld [vmem:[%s8 + $0x8] sm:$0xf]
      %v1829 = vld [vmem:[%s8 + $0xc] sm:$0xf]
      %v1830 = vld [vmem:[%s8 + $0x10] sm:$0xf]
      %v1831 = vld [vmem:[%s8 + $0x14] sm:$0xf]
      %v1832 = vld [vmem:[%s8 + $0x18] sm:$0xf]
      %v1833 = vld [vmem:[%s8 + $0x1c] sm:$0xf]
      %v1834 = vld [vmem:[%s8 + $0x20] sm:$0xf]
      %v1835 = vld [vmem:[%s8 + $0x24] sm:$0xf]
      %v1836 = vld [vmem:[%s8 + $0x28] sm:$0xf]
      %v1837 = vld [vmem:[%s8 + $0x2c] sm:$0xf]
      %v1838 = vld [vmem:[%s8 + $0x30] sm:$0xf]
      %v1839 = vld [vmem:[%s8 + $0x34] sm:$0xf]
      %v1840 = vld [vmem:[%s8 + $0x38] sm:$0xf]
      %v1841 = vld [vmem:[%s8 + $0x3c] sm:$0xf]
      %v1842 = vld [vmem:[%s8 + $0x40] sm:$0xf]
      %v1843 = vld [vmem:[%s8 + $0x44] sm:$0xf]
      %v1844 = vld [vmem:[%s8 + $0x48] sm:$0xf]
      %v1845 = vld [vmem:[%s8 + $0x4c] sm:$0xf]
      %v1846 = vld [vmem:[%s8 + $0x50] sm:$0xf]
      %v1847 = vld [vmem:[%s8 + $0x54] sm:$0xf]
      %v1848 = vld [vmem:[%s8 + $0x58] sm:$0xf]
      %v1849 = vld [vmem:[%s8 + $0x5c] sm:$0xf]
      %v1850 = vld [vmem:[%s8 + $0x60] sm:$0xf]
      %v1851 = vld [vmem:[%s8 + $0x64] sm:$0xf]
      %v1852 = vld [vmem:[%s8 + $0x68] sm:$0xf]
      %v1853 = vld [vmem:[%s8 + $0x6c] sm:$0xf]
      %v1854 = vld [vmem:[%s8 + $0x70] sm:$0xf]
      %v1855 = vld [vmem:[%s8 + $0x74] sm:$0xf]
      %v1856 = vld [vmem:[%s8 + $0x78] sm:$0xf]
      %v1857 = vld [vmem:[%s8 + $0x7c] sm:$0xf]
      %v1858 = vld [vmem:[%s8 + $0x80] sm:$0xf]
      %v1859 = vld [vmem:[%s8 + $0x84] sm:$0xf]
      %v1860 = vld [vmem:[%s8 + $0x88] sm:$0xf]
      %v1861 = vld [vmem:[%s8 + $0x8c] sm:$0xf]
      %v1862 = vld [vmem:[%s8 + $0x90] sm:$0xf]
      %v1863 = vld [vmem:[%s8 + $0x94] sm:$0xf]
      %v1864 = vld [vmem:[%s8 + $0x98] sm:$0xf]
      %v1865 = vld [vmem:[%s8 + $0x9c] sm:$0xf]
      %v1906 = vunpack.c.l.b16 %v1826
      %v1907 = vunpack.c.l.b16 %v1827
      %v1908 = vunpack.c.l.b16 %v1828
      %v1909 = vunpack.c.l.b16 %v1829
      %v1910 = vunpack.c.l.b16 %v1830
      %v1911 = vunpack.c.l.b16 %v1831
      %v1912 = vunpack.c.l.b16 %v1832
      %v1913 = vunpack.c.l.b16 %v1833
      %v1914 = vunpack.c.l.b16 %v1834
      %v1915 = vunpack.c.l.b16 %v1835
      %v1916 = vunpack.c.l.b16 %v1836
      %v1917 = vunpack.c.l.b16 %v1837
      %v1918 = vunpack.c.l.b16 %v1838
      %v1919 = vunpack.c.l.b16 %v1839
      %v1920 = vunpack.c.l.b16 %v1840
      %v1921 = vunpack.c.l.b16 %v1841
      %v1922 = vunpack.c.l.b16 %v1842
      %v1923 = vunpack.c.l.b16 %v1843
      %v1924 = vunpack.c.l.b16 %v1844
      %v1925 = vunpack.c.l.b16 %v1845
      %v1926 = vunpack.c.l.b16 %v1846
      %v1927 = vunpack.c.l.b16 %v1847
      %v1928 = vunpack.c.l.b16 %v1848
      %v1929 = vunpack.c.l.b16 %v1849
      %v1930 = vunpack.c.l.b16 %v1850
      %v1931 = vunpack.c.l.b16 %v1851
      %v1932 = vunpack.c.l.b16 %v1852
      %v1933 = vunpack.c.l.b16 %v1853
      %v1934 = vunpack.c.l.b16 %v1854
      %v1935 = vunpack.c.l.b16 %v1855
      %v1936 = vunpack.c.l.b16 %v1856
      %v1937 = vunpack.c.l.b16 %v1857
      %v1938 = vunpack.c.l.b16 %v1858
      %v1939 = vunpack.c.l.b16 %v1859
      %v1940 = vunpack.c.l.b16 %v1860
      %v1941 = vunpack.c.l.b16 %v1861
      %v1942 = vunpack.c.l.b16 %v1862
      %v1943 = vunpack.c.l.b16 %v1863
      %v1944 = vunpack.c.l.b16 %v1864
      %v1945 = vunpack.c.l.b16 %v1865
      %v1946 = vpack.c.b16 %v1907, %v1906
      %v1947 = vpack.c.b16 %v1909, %v1908
      %v1948 = vpack.c.b16 %v1911, %v1910
      %v1949 = vpack.c.b16 %v1913, %v1912
      %v1950 = vpack.c.b16 %v1915, %v1914
      %v1951 = vpack.c.b16 %v1917, %v1916
      %v1952 = vpack.c.b16 %v1919, %v1918
      %v1953 = vpack.c.b16 %v1921, %v1920
      %v1954 = vpack.c.b16 %v1923, %v1922
      %v1955 = vpack.c.b16 %v1925, %v1924
      %v1956 = vpack.c.b16 %v1927, %v1926
      %v1957 = vpack.c.b16 %v1929, %v1928
      %v1958 = vpack.c.b16 %v1931, %v1930
      %v1959 = vpack.c.b16 %v1933, %v1932
      %v1960 = vpack.c.b16 %v1935, %v1934
      %v1961 = vpack.c.b16 %v1937, %v1936
      %v1962 = vpack.c.b16 %v1939, %v1938
      %v1963 = vpack.c.b16 %v1941, %v1940
      %v1964 = vpack.c.b16 %v1943, %v1942
      %v1965 = vpack.c.b16 %v1945, %v1944
      %vm1986 = vcmask 523264
      %v1988 = vsel %vm1986, %v1825, 0
      %1990 = vmatprep.subr.bf16.mxu0 0
      %1991 = vmatpush1.bf16.msra.mxu0 %v1946
      %1992 = vmatprep.subr.bf16.mxu0 0
      %1993 = vmatpush1.bf16.msra.mxu0 %v1947
      %1994 = vmatprep.subr.bf16.mxu0 0
      %1995 = vmatpush1.bf16.msra.mxu0 %v1948
      %1996 = vmatprep.subr.bf16.mxu0 0
      %1997 = vmatpush1.bf16.msra.mxu0 %v1949
      %1998 = vmatprep.subr.bf16.mxu0 0
      %1999 = vmatpush1.bf16.msra.mxu0 %v1950
      %2000 = vmatprep.subr.bf16.mxu0 0
      %2001 = vmatpush1.bf16.msra.mxu0 %v1951
      %2002 = vmatprep.subr.bf16.mxu0 0
      %2003 = vmatpush1.bf16.msra.mxu0 %v1952
      %2004 = vmatprep.subr.bf16.mxu0 0
      %2005 = vmatpush1.bf16.msra.mxu0 %v1953
      %2006 = vmatprep.subr.bf16.mxu0 0
      %2007 = vmatpush1.bf16.msra.mxu0 %v1954
      %2008 = vmatprep.subr.bf16.mxu0 0
      %2009 = vmatpush1.bf16.msra.mxu0 %v1955
      %2010 = vmatprep.subr.bf16.mxu0 0
      %2011 = vmatpush1.bf16.msra.mxu0 %v1956
      %2012 = vmatprep.subr.bf16.mxu0 0
      %2013 = vmatpush1.bf16.msra.mxu0 %v1957
      %2014 = vmatprep.subr.bf16.mxu0 0
      %2015 = vmatpush1.bf16.msra.mxu0 %v1958
      %2016 = vmatprep.subr.bf16.mxu0 0
      %2017 = vmatpush1.bf16.msra.mxu0 %v1959
      %2018 = vmatprep.subr.bf16.mxu0 0
      %2019 = vmatpush1.bf16.msra.mxu0 %v1960
      %2020 = vmatprep.subr.bf16.mxu0 0
      %2021 = vmatpush1.bf16.msra.mxu0 %v1961
      %2022 = vmatprep.mubr.bf16.mxu0 %v1824
      %2023 = vmatmul.mubr.bf16.gmra.mrb[0].mxu0 %v1823
      %v2024 = vpop.f32.mrb[0].mxu0
      %v2025 = vadd.f32 0.0, %v2024
      %v2026 = vpop.f32.mrb[0].mxu0
      %v2027 = vpop.f32.mrb[0].mxu0
      %v2028 = vpop.f32.mrb[0].mxu0
      %2029 = vdwg.mxu0
      %2030 = vmatprep.subr.bf16.mxu0 0
      %2031 = vmatpush1.bf16.msra.mxu0 %v1962
      %2032 = vmatprep.subr.bf16.mxu0 0
      %2033 = vmatpush1.bf16.msra.mxu0 %v1963
      %2034 = vmatprep.subr.bf16.mxu0 0
      %2035 = vmatpush1.bf16.msra.mxu0 %v1964
      %2036 = vmatprep.subr.bf16.mxu0 0
      %2037 = vmatpush1.bf16.msra.mxu0 %v1965
      %2038 = vmatprep.subr.bf16.mxu0 0
      %2039 = vmatpush1.bf16.msra.mxu0 0
      %2040 = vmatprep.subr.bf16.mxu0 0
      %2041 = vmatpush1.bf16.msra.mxu0 0
      %2042 = vmatprep.subr.bf16.mxu0 0
      %2043 = vmatpush1.bf16.msra.mxu0 0
      %2044 = vmatprep.subr.bf16.mxu0 0
      %2045 = vmatpush1.bf16.msra.mxu0 0
      %2046 = vmatprep.subr.bf16.mxu0 0
      %2047 = vmatpush1.bf16.msra.mxu0 0
      %2048 = vmatprep.subr.bf16.mxu0 0
      %2049 = vmatpush1.bf16.msra.mxu0 0
      %2050 = vmatprep.subr.bf16.mxu0 0
      %2051 = vmatpush1.bf16.msra.mxu0 0
      %2052 = vmatprep.subr.bf16.mxu0 0
      %2053 = vmatpush1.bf16.msra.mxu0 0
      %2054 = vmatprep.subr.bf16.mxu0 0
      %2055 = vmatpush1.bf16.msra.mxu0 0
      %2056 = vmatprep.subr.bf16.mxu0 0
      %2057 = vmatpush1.bf16.msra.mxu0 0
      %2058 = vmatprep.subr.bf16.mxu0 0
      %2059 = vmatpush1.bf16.msra.mxu0 0
      %2060 = vmatprep.subr.bf16.mxu0 0
      %2061 = vmatpush1.bf16.msra.mxu0 0
      %2062 = vmatprep.mubr.bf16.mxu0 0
      %2063 = vmatmul.mubr.bf16.gmra.mrb[0].mxu0 %v1988
      %v2064 = vpop.f32.mrb[0].mxu0
      %v2065 = vadd.f32 %v2025, %v2064
      %v2066 = vpop.f32.mrb[0].mxu0
      %v2067 = vpop.f32.mrb[0].mxu0
      %v2068 = vpop.f32.mrb[0].mxu0
      %2069 = vdwg.mxu0
      %v2070 = vpack.c.bf16 %v2065, %v2065
      %vm2071 = vcmask 647168
      %2072 = vst.msk [vmem:[%s555] sm:$0x1] %vm2071, %v2070
      %p2073 = scmp.lt.s32.totalorder %s25, 4
      %s2074 = scalar_select %p2073, %s25, 4
      %p2075 = scmp.lt.s32.totalorder %s24, 0
      %s2076 = scalar_select %p2075, %s24, 0
      %s2077 = sadd.s32 %s2076, %s2074
      %s2078 = scalar_lea.vmem %s9, %s2077
      // Predicated region
      $region57: #{lenet5_forward.4} parent=55 // pred_check
        %p2079 = pneg %p305
      $region58: #{lenet5_forward.4} parent=55 // pred_check_branch
        %2081 = sbr.rel (%p2079) target = $region60
      $region59: #{lenet5_forward.4} parent=55 // pred_region
        _
      $region60: #{lenet5_forward.4} parent=55 // pred_fallthru
        _
    $region56: #{lenet5_forward.4} parent=5 // pred_fallthru
      _
    %p2082 = scmp.le.s32.totalorder 2, %s15
    // Predicated region
    $region61: #{lenet5_forward.4} parent=5 // pred_check
      %p2083 = pneg %p2082
    $region62: #{lenet5_forward.4} parent=5 // pred_check_branch
      %2085 = sbr.rel (%p2083) target = $region64
    $region63: #{lenet5_forward.4} parent=5 // pred_region
      %s2086 = ssub.s32 %s15, 2
      // Predicated region
      $region65: #{lenet5_forward.4} parent=63 // pred_check
        %p2087 = pneg %p311
      $region66: #{lenet5_forward.4} parent=63 // pred_check_branch
        %2089 = sbr.rel (%p2087) target = $region68
      $region67: #{lenet5_forward.4} parent=63 // pred_region
        %p2090 = scmp.lt.s32.totalorder %s27, 4
        %s2091 = scalar_select %p2090, %s27, 4
        %p2092 = scmp.lt.s32.totalorder %s26, 0
        %s2093 = scalar_select %p2092, %s26, 0
        %s2094 = sadd.s32 %s2093, %s2091
        %s2095 = scalar_lea.vmem %s9, %s2094
      $region68: #{lenet5_forward.4} parent=63 // pred_fallthru
        _
    $region64: #{lenet5_forward.4} parent=5 // pred_fallthru
      _
  $region6: #{lenet5_forward.4} parent=0 // loop_footer
    %s19 = sadd.s32 1, %s15
  $region7: #{lenet5_forward.4} parent=0 // loop_footer_branch
    %14 = sbr.rel target = $region3
  $region8: #{lenet5_forward.4} parent=0 // loop_exit
    _

// kernel: lenet5_forward.3
$region0: #{lenet5_forward.3}
  #allocation0 [shape = 'u32[]', space=smem, size = 0x4, offset = 0x4, fixed_abs, tag = 'smem constant byte address 0x4 - core index']
  #allocation1 [shape = 'u32[144,128]{1,0:T(1,128)}', space=vmem, size = 0x12000, scoped, tag = 'internal scratch']
  %s0 = inlined_call_operand.vmem [shape: bf16[32,2,32], index: 0, kind: input, shape index: {}, may-alias: {0,1,2,3,4,5}]
  %s1 = inlined_call_operand.vmem [shape: bf16[32,2,32], index: 1, kind: input, shape index: {}, may-alias: {0,1,2,3,4,5}]
  %s2 = inlined_call_operand.vmem [shape: bf16[32,2,32], index: 2, kind: input, shape index: {}, may-alias: {0,1,2,3,4,5}]
  %s3 = inlined_call_operand.vmem [shape: bf16[32,2,32], index: 3, kind: input, shape index: {}, may-alias: {0,1,2,3,4,5}]
  %s4 = inlined_call_operand.vmem [shape: bf16[32,2,32], index: 4, kind: input, shape index: {}, may-alias: {0,1,2,3,4,5}]
  %s5 = inlined_call_operand.vmem [shape: bf16[32,2,32], index: 5, kind: input, shape index: {}, may-alias: {0,1,2,3,4,5}]
  %s6 = inlined_call_operand.vmem [shape: bf16[6,32,336], index: 6, kind: input, shape index: {}]
  %s7 = inlined_call_operand.vmem [shape: f32[1,336], index: 7, kind: input, shape index: {}]
  %s8 = inlined_call_operand.vmem [shape: bf16[336,84], index: 8, kind: input, shape index: {}]
  %s9 = inlined_call_operand.vmem [shape: bf16[14,2,84], index: 9, kind: output, shape index: {}]
  %s10 = sld [smem:[#allocation0]]
  $region69: #{lenet5_forward.3} parent=0
    _
  %s12 = ssub.s32 1, %s10
  %s13 = scalar_select 0, %s12, %s10
  loop: start=0, step=1, limit=16
  $region2: #{lenet5_forward.3} parent=0 // loop_pre_header
    _
  $region3: #{lenet5_forward.3} parent=0 // loop_header
    %s15 = sphi 0, %s19
    %p16 = scmp.ge.s32.totalorder %s15, 16
    %s22 = sphi 0, %s34
    %s23 = sphi 0, %s30
    %s24 = sphi 0, %s22
    %s25 = sphi 0, %s23
    %s26 = sphi 0, %s24
    %s27 = sphi 0, %s25
    %s41 = sphi 0, %s43
    %s44 = sphi 0, %s41
    %s45 = sphi 0, %s44
    %s61 = sphi 0, %s45
    %s73 = sphi 0, %s75
    %s76 = sphi 0, %s73
    %s77 = sphi 0, %s76
    %s93 = sphi 0, %s77
    %s105 = sphi 0, %s107
    %s108 = sphi 0, %s105
    %s109 = sphi 0, %s108
    %s125 = sphi 0, %s109
    %s137 = sphi 0, %s139
    %s140 = sphi 0, %s137
    %s141 = sphi 0, %s140
    %s157 = sphi 0, %s141
    %s169 = sphi 0, %s171
    %s172 = sphi 0, %s169
    %s173 = sphi 0, %s172
    %s189 = sphi 0, %s173
    %s201 = sphi 0, %s203
    %s204 = sphi 0, %s201
    %s205 = sphi 0, %s204
    %s221 = sphi 0, %s205
    %s225 = sphi 0, %s225
    %s227 = sphi 0, %s225
    %s228 = sphi 0, %s227
    %s242 = sphi 0, %s228
    %s246 = sphi 0, %s246
    %s248 = sphi 0, %s246
    %s249 = sphi 0, %s248
    %s263 = sphi 0, %s249
    %s267 = sphi 0, %s267
    %s269 = sphi 0, %s267
    %s270 = sphi 0, %s269
    %s284 = sphi 0, %s270
    %s292 = sphi 0, %s294
    %s295 = sphi 0, %s292
    %s296 = sphi 0, %s295
    %s312 = sphi 0, %s296
  $region4: #{lenet5_forward.3} parent=0 // loop_header_branch
    %18 = sbr.rel (%p16) target = $region8
  $region5: #{lenet5_forward.3} parent=0 // loop_body
    %s20 = ssub.s32 %s15, 1
    %s21 = ssub.s32 %s15, 2
    %s28 = sadd.s32 1, %s23
    %p29 = scmp.ge.s32.totalorder %s28, 14
    %s30 = scalar_select %p29, 0, %s28
    %s31 = sadd.s32 1, %s22
    %s32 = scalar_select %p29, %s31, %s22
    %p33 = scmp.ge.s32.totalorder %s32, 1
    %s34 = scalar_select %p33, 0, %s32
    %s35 = smul.u32 %s23, 2
    %s36 = smul.u32 %s30, 2
    %s37 = ssub.s32 %s35, %s36
    %s38 = ssub.s32 %s22, %s34
    %s39 = sor.u32 %s37, %s38
    %p40 = scmp.eq.s32.totalorder %s39, 0
    %s42 = sadd.s32 %s41, 1
    %s43 = scalar_select %p40, %s41, %s42
    %p46 = pneg %p40
    %p47 = scmp.eq.s32.totalorder %s15, 13
    %p48 = por %p46, %p47
    %p49 = scmp.ne.s32.totalorder %s41, %s44
    %p50 = scmp.eq.s32.totalorder %s15, 0
    %p51 = por %p49, %p50
    %p52 = scmp.ne.s32.totalorder %s41, %s44
    %p53 = scmp.eq.s32.totalorder %s20, 13
    %p54 = por %p52, %p53
    %p55 = scmp.ne.s32.totalorder %s44, %s45
    %p56 = scmp.eq.s32.totalorder %s20, 0
    %p57 = por %p55, %p56
    %p58 = scmp.ne.s32.totalorder %s44, %s45
    %p59 = scmp.eq.s32.totalorder %s21, 13
    %p60 = por %p58, %p59
    %p62 = scmp.ne.s32.totalorder %s45, %s61
    %p63 = scmp.eq.s32.totalorder %s21, 0
    %p64 = por %p62, %p63
    %s65 = smul.u32 %s23, 2
    %s66 = sadd.s32 %s65, 1
    %s67 = smul.u32 %s30, 2
    %s68 = sadd.s32 %s67, 1
    %s69 = ssub.s32 %s66, %s68
    %s70 = ssub.s32 %s22, %s34
    %s71 = sor.u32 %s69, %s70
    %p72 = scmp.eq.s32.totalorder %s71, 0
    %s74 = sadd.s32 %s73, 1
    %s75 = scalar_select %p72, %s73, %s74
    %p78 = pneg %p72
    %p79 = scmp.eq.s32.totalorder %s15, 13
    %p80 = por %p78, %p79
    %p81 = scmp.ne.s32.totalorder %s73, %s76
    %p82 = scmp.eq.s32.totalorder %s15, 0
    %p83 = por %p81, %p82
    %p84 = scmp.ne.s32.totalorder %s73, %s76
    %p85 = scmp.eq.s32.totalorder %s20, 13
    %p86 = por %p84, %p85
    %p87 = scmp.ne.s32.totalorder %s76, %s77
    %p88 = scmp.eq.s32.totalorder %s20, 0
    %p89 = por %p87, %p88
    %p90 = scmp.ne.s32.totalorder %s76, %s77
    %p91 = scmp.eq.s32.totalorder %s21, 13
    %p92 = por %p90, %p91
    %p94 = scmp.ne.s32.totalorder %s77, %s93
    %p95 = scmp.eq.s32.totalorder %s21, 0
    %p96 = por %p94, %p95
    %s97 = smul.u32 %s23, 2
    %s98 = sadd.s32 %s97, 2
    %s99 = smul.u32 %s30, 2
    %s100 = sadd.s32 %s99, 2
    %s101 = ssub.s32 %s98, %s100
    %s102 = ssub.s32 %s22, %s34
    %s103 = sor.u32 %s101, %s102
    %p104 = scmp.eq.s32.totalorder %s103, 0
    %s106 = sadd.s32 %s105, 1
    %s107 = scalar_select %p104, %s105, %s106
    %p110 = pneg %p104
    %p111 = scmp.eq.s32.totalorder %s15, 13
    %p112 = por %p110, %p111
    %p113 = scmp.ne.s32.totalorder %s105, %s108
    %p114 = scmp.eq.s32.totalorder %s15, 0
    %p115 = por %p113, %p114
    %p116 = scmp.ne.s32.totalorder %s105, %s108
    %p117 = scmp.eq.s32.totalorder %s20, 13
    %p118 = por %p116, %p117
    %p119 = scmp.ne.s32.totalorder %s108, %s109
    %p120 = scmp.eq.s32.totalorder %s20, 0
    %p121 = por %p119, %p120
    %p122 = scmp.ne.s32.totalorder %s108, %s109
    %p123 = scmp.eq.s32.totalorder %s21, 13
    %p124 = por %p122, %p123
    %p126 = scmp.ne.s32.totalorder %s109, %s125
    %p127 = scmp.eq.s32.totalorder %s21, 0
    %p128 = por %p126, %p127
    %s129 = smul.u32 %s23, 2
    %s130 = sadd.s32 %s129, 3
    %s131 = smul.u32 %s30, 2
    %s132 = sadd.s32 %s131, 3
    %s133 = ssub.s32 %s130, %s132
    %s134 = ssub.s32 %s22, %s34
    %s135 = sor.u32 %s133, %s134
    %p136 = scmp.eq.s32.totalorder %s135, 0
    %s138 = sadd.s32 %s137, 1
    %s139 = scalar_select %p136, %s137, %s138
    %p142 = pneg %p136
    %p143 = scmp.eq.s32.totalorder %s15, 13
    %p144 = por %p142, %p143
    %p145 = scmp.ne.s32.totalorder %s137, %s140
    %p146 = scmp.eq.s32.totalorder %s15, 0
    %p147 = por %p145, %p146
    %p148 = scmp.ne.s32.totalorder %s137, %s140
    %p149 = scmp.eq.s32.totalorder %s20, 13
    %p150 = por %p148, %p149
    %p151 = scmp.ne.s32.totalorder %s140, %s141
    %p152 = scmp.eq.s32.totalorder %s20, 0
    %p153 = por %p151, %p152
    %p154 = scmp.ne.s32.totalorder %s140, %s141
    %p155 = scmp.eq.s32.totalorder %s21, 13
    %p156 = por %p154, %p155
    %p158 = scmp.ne.s32.totalorder %s141, %s157
    %p159 = scmp.eq.s32.totalorder %s21, 0
    %p160 = por %p158, %p159
    %s161 = smul.u32 %s23, 2
    %s162 = sadd.s32 %s161, 4
    %s163 = smul.u32 %s30, 2
    %s164 = sadd.s32 %s163, 4
    %s165 = ssub.s32 %s162, %s164
    %s166 = ssub.s32 %s22, %s34
    %s167 = sor.u32 %s165, %s166
    %p168 = scmp.eq.s32.totalorder %s167, 0
    %s170 = sadd.s32 %s169, 1
    %s171 = scalar_select %p168, %s169, %s170
    %p174 = pneg %p168
    %p175 = scmp.eq.s32.totalorder %s15, 13
    %p176 = por %p174, %p175
    %p177 = scmp.ne.s32.totalorder %s169, %s172
    %p178 = scmp.eq.s32.totalorder %s15, 0
    %p179 = por %p177, %p178
    %p180 = scmp.ne.s32.totalorder %s169, %s172
    %p181 = scmp.eq.s32.totalorder %s20, 13
    %p182 = por %p180, %p181
    %p183 = scmp.ne.s32.totalorder %s172, %s173
    %p184 = scmp.eq.s32.totalorder %s20, 0
    %p185 = por %p183, %p184
    %p186 = scmp.ne.s32.totalorder %s172, %s173
    %p187 = scmp.eq.s32.totalorder %s21, 13
    %p188 = por %p186, %p187
    %p190 = scmp.ne.s32.totalorder %s173, %s189
    %p191 = scmp.eq.s32.totalorder %s21, 0
    %p192 = por %p190, %p191
    %s193 = smul.u32 %s23, 2
    %s194 = sadd.s32 %s193, 5
    %s195 = smul.u32 %s30, 2
    %s196 = sadd.s32 %s195, 5
    %s197 = ssub.s32 %s194, %s196
    %s198 = ssub.s32 %s22, %s34
    %s199 = sor.u32 %s197, %s198
    %p200 = scmp.eq.s32.totalorder %s199, 0
    %s202 = sadd.s32 %s201, 1
    %s203 = scalar_select %p200, %s201, %s202
    %p206 = pneg %p200
    %p207 = scmp.eq.s32.totalorder %s15, 13
    %p208 = por %p206, %p207
    %p209 = scmp.ne.s32.totalorder %s201, %s204
    %p210 = scmp.eq.s32.totalorder %s15, 0
    %p211 = por %p209, %p210
    %p212 = scmp.ne.s32.totalorder %s201, %s204
    %p213 = scmp.eq.s32.totalorder %s20, 13
    %p214 = por %p212, %p213
    %p215 = scmp.ne.s32.totalorder %s204, %s205
    %p216 = scmp.eq.s32.totalorder %s20, 0
    %p217 = por %p215, %p216
    %p218 = scmp.ne.s32.totalorder %s204, %s205
    %p219 = scmp.eq.s32.totalorder %s21, 13
    %p220 = por %p218, %p219
    %p222 = scmp.ne.s32.totalorder %s205, %s221
    %p223 = scmp.eq.s32.totalorder %s21, 0
    %p224 = por %p222, %p223
    %s226 = sadd.s32 %s225, 1
    %p229 = scmp.eq.s32.totalorder %s15, 13
    %p230 = scmp.ne.s32.totalorder %s225, %s227
    %p231 = scmp.eq.s32.totalorder %s15, 0
    %p232 = por %p230, %p231
    %p233 = scmp.ne.s32.totalorder %s225, %s227
    %p234 = scmp.eq.s32.totalorder %s20, 13
    %p235 = por %p233, %p234
    %p236 = scmp.ne.s32.totalorder %s227, %s228
    %p237 = scmp.eq.s32.totalorder %s20, 0
    %p238 = por %p236, %p237
    %p239 = scmp.ne.s32.totalorder %s227, %s228
    %p240 = scmp.eq.s32.totalorder %s21, 13
    %p241 = por %p239, %p240
    %p243 = scmp.ne.s32.totalorder %s228, %s242
    %p244 = scmp.eq.s32.totalorder %s21, 0
    %p245 = por %p243, %p244
    %s247 = sadd.s32 %s246, 1
    %p250 = scmp.eq.s32.totalorder %s15, 13
    %p251 = scmp.ne.s32.totalorder %s246, %s248
    %p252 = scmp.eq.s32.totalorder %s15, 0
    %p253 = por %p251, %p252
    %p254 = scmp.ne.s32.totalorder %s246, %s248
    %p255 = scmp.eq.s32.totalorder %s20, 13
    %p256 = por %p254, %p255
    %p257 = scmp.ne.s32.totalorder %s248, %s249
    %p258 = scmp.eq.s32.totalorder %s20, 0
    %p259 = por %p257, %p258
    %p260 = scmp.ne.s32.totalorder %s248, %s249
    %p261 = scmp.eq.s32.totalorder %s21, 13
    %p262 = por %p260, %p261
    %p264 = scmp.ne.s32.totalorder %s249, %s263
    %p265 = scmp.eq.s32.totalorder %s21, 0
    %p266 = por %p264, %p265
    %s268 = sadd.s32 %s267, 1
    %p271 = scmp.eq.s32.totalorder %s15, 13
    %p272 = scmp.ne.s32.totalorder %s267, %s269
    %p273 = scmp.eq.s32.totalorder %s15, 0
    %p274 = por %p272, %p273
    %p275 = scmp.ne.s32.totalorder %s267, %s269
    %p276 = scmp.eq.s32.totalorder %s20, 13
    %p277 = por %p275, %p276
    %p278 = scmp.ne.s32.totalorder %s269, %s270
    %p279 = scmp.eq.s32.totalorder %s20, 0
    %p280 = por %p278, %p279
    %p281 = scmp.ne.s32.totalorder %s269, %s270
    %p282 = scmp.eq.s32.totalorder %s21, 13
    %p283 = por %p281, %p282
    %p285 = scmp.ne.s32.totalorder %s270, %s284
    %p286 = scmp.eq.s32.totalorder %s21, 0
    %p287 = por %p285, %p286
    %s288 = ssub.s32 %s23, %s30
    %s289 = ssub.s32 %s22, %s34
    %s290 = sor.u32 %s288, %s289
    %p291 = scmp.eq.s32.totalorder %s290, 0
    %s293 = sadd.s32 %s292, 1
    %s294 = scalar_select %p291, %s292, %s293
    %p297 = pneg %p291
    %p298 = scmp.eq.s32.totalorder %s15, 13
    %p299 = por %p297, %p298
    %p300 = scmp.ne.s32.totalorder %s292, %s295
    %p301 = scmp.eq.s32.totalorder %s15, 0
    %p302 = por %p300, %p301
    %p303 = scmp.ne.s32.totalorder %s292, %s295
    %p304 = scmp.eq.s32.totalorder %s20, 13
    %p305 = por %p303, %p304
    %p306 = scmp.ne.s32.totalorder %s295, %s296
    %p307 = scmp.eq.s32.totalorder %s20, 0
    %p308 = por %p306, %p307
    %p309 = scmp.ne.s32.totalorder %s295, %s296
    %p310 = scmp.eq.s32.totalorder %s21, 13
    %p311 = por %p309, %p310
    %p313 = scmp.ne.s32.totalorder %s296, %s312
    %p314 = scmp.eq.s32.totalorder %s21, 0
    %p315 = por %p313, %p314
    %p316 = scmp.le.s32.totalorder 1, %s15
    %p317 = scmp.lt.s32.totalorder %s15, 15
    %p318 = pnand %p316, %p317
    %p319 = pneg %p318
    // Predicated region
    $region9: #{lenet5_forward.3} parent=5 // pred_check
      _
    $region10: #{lenet5_forward.3} parent=5 // pred_check_branch
      %321 = sbr.rel (%p318) target = $region12
    $region11: #{lenet5_forward.3} parent=5 // pred_region
      %s322 = ssub.s32 %s15, 1
      // Predicated region
      $region13: #{lenet5_forward.3} parent=11 // pred_check
        %p323 = pneg %p238
      $region14: #{lenet5_forward.3} parent=11 // pred_check_branch
        %325 = sbr.rel (%p323) target = $region16
      $region15: #{lenet5_forward.3} parent=11 // pred_region
        _
      $region16: #{lenet5_forward.3} parent=11 // pred_fallthru
        _
      // Predicated region
      $region17: #{lenet5_forward.3} parent=11 // pred_check
        %p326 = pneg %p259
      $region18: #{lenet5_forward.3} parent=11 // pred_check_branch
        %328 = sbr.rel (%p326) target = $region20
      $region19: #{lenet5_forward.3} parent=11 // pred_region
        _
      $region20: #{lenet5_forward.3} parent=11 // pred_fallthru
        _
      // Predicated region
      $region21: #{lenet5_forward.3} parent=11 // pred_check
        %p329 = pneg %p280
      $region22: #{lenet5_forward.3} parent=11 // pred_check_branch
        %331 = sbr.rel (%p329) target = $region24
      $region23: #{lenet5_forward.3} parent=11 // pred_region
        _
      $region24: #{lenet5_forward.3} parent=11 // pred_fallthru
        _
    $region12: #{lenet5_forward.3} parent=5 // pred_fallthru
      _
    %p332 = scmp.lt.s32.totalorder %s15, 14
    // Predicated region
    $region25: #{lenet5_forward.3} parent=5 // pred_check
      %p333 = pneg %p332
    $region26: #{lenet5_forward.3} parent=5 // pred_check_branch
      %335 = sbr.rel (%p333) target = $region28
    $region27: #{lenet5_forward.3} parent=5 // pred_region
      // Predicated region
      $region29: #{lenet5_forward.3} parent=27 // pred_check
        %p336 = pneg %p51
      $region30: #{lenet5_forward.3} parent=27 // pred_check_branch
        %338 = sbr.rel (%p336) target = $region32
      $region31: #{lenet5_forward.3} parent=27 // pred_region
        %s339 = smul.u32 %s23, 2
        %p340 = scmp.lt.s32.totalorder %s339, 31
        %s341 = scalar_select %p340, %s339, 31
        %p342 = scmp.lt.s32.totalorder %s22, 0
        %s343 = scalar_select %p342, %s22, 0
        %s344 = sadd.s32 %s343, %s341
        %s345 = scalar_lea.vmem %s0, %s344
        %s346 = smul.u32 %s23, 2
      $region32: #{lenet5_forward.3} parent=27 // pred_fallthru
        _
      // Predicated region
      $region33: #{lenet5_forward.3} parent=27 // pred_check
        %p347 = pneg %p83
      $region34: #{lenet5_forward.3} parent=27 // pred_check_branch
        %349 = sbr.rel (%p347) target = $region36
      $region35: #{lenet5_forward.3} parent=27 // pred_region
        %s350 = smul.u32 %s23, 2
        %s351 = sadd.s32 %s350, 1
        %p352 = scmp.lt.s32.totalorder %s351, 31
        %s353 = scalar_select %p352, %s351, 31
        %p354 = scmp.lt.s32.totalorder %s22, 0
        %s355 = scalar_select %p354, %s22, 0
        %s356 = sadd.s32 %s355, %s353
        %s357 = scalar_lea.vmem %s1, %s356
        %s358 = smul.u32 %s23, 2
        %s359 = sadd.s32 %s358, 1
      $region36: #{lenet5_forward.3} parent=27 // pred_fallthru
        _
      // Predicated region
      $region37: #{lenet5_forward.3} parent=27 // pred_check
        %p360 = pneg %p115
      $region38: #{lenet5_forward.3} parent=27 // pred_check_branch
        %362 = sbr.rel (%p360) target = $region40
      $region39: #{lenet5_forward.3} parent=27 // pred_region
        %s363 = smul.u32 %s23, 2
        %s364 = sadd.s32 %s363, 2
        %p365 = scmp.lt.s32.totalorder %s364, 31
        %s366 = scalar_select %p365, %s364, 31
        %p367 = scmp.lt.s32.totalorder %s22, 0
        %s368 = scalar_select %p367, %s22, 0
        %s369 = sadd.s32 %s368, %s366
        %s370 = scalar_lea.vmem %s2, %s369
        %s371 = smul.u32 %s23, 2
        %s372 = sadd.s32 %s371, 2
      $region40: #{lenet5_forward.3} parent=27 // pred_fallthru
        _
      // Predicated region
      $region41: #{lenet5_forward.3} parent=27 // pred_check
        %p373 = pneg %p147
      $region42: #{lenet5_forward.3} parent=27 // pred_check_branch
        %375 = sbr.rel (%p373) target = $region44
      $region43: #{lenet5_forward.3} parent=27 // pred_region
        %s376 = smul.u32 %s23, 2
        %s377 = sadd.s32 %s376, 3
        %p378 = scmp.lt.s32.totalorder %s377, 31
        %s379 = scalar_select %p378, %s377, 31
        %p380 = scmp.lt.s32.totalorder %s22, 0
        %s381 = scalar_select %p380, %s22, 0
        %s382 = sadd.s32 %s381, %s379
        %s383 = scalar_lea.vmem %s3, %s382
        %s384 = smul.u32 %s23, 2
        %s385 = sadd.s32 %s384, 3
      $region44: #{lenet5_forward.3} parent=27 // pred_fallthru
        _
      // Predicated region
      $region45: #{lenet5_forward.3} parent=27 // pred_check
        %p386 = pneg %p179
      $region46: #{lenet5_forward.3} parent=27 // pred_check_branch
        %388 = sbr.rel (%p386) target = $region48
      $region47: #{lenet5_forward.3} parent=27 // pred_region
        %s389 = smul.u32 %s23, 2
        %s390 = sadd.s32 %s389, 4
        %p391 = scmp.lt.s32.totalorder %s390, 31
        %s392 = scalar_select %p391, %s390, 31
        %p393 = scmp.lt.s32.totalorder %s22, 0
        %s394 = scalar_select %p393, %s22, 0
        %s395 = sadd.s32 %s394, %s392
        %s396 = scalar_lea.vmem %s4, %s395
        %s397 = smul.u32 %s23, 2
        %s398 = sadd.s32 %s397, 4
      $region48: #{lenet5_forward.3} parent=27 // pred_fallthru
        _
      // Predicated region
      $region49: #{lenet5_forward.3} parent=27 // pred_check
        %p399 = pneg %p211
      $region50: #{lenet5_forward.3} parent=27 // pred_check_branch
        %401 = sbr.rel (%p399) target = $region52
      $region51: #{lenet5_forward.3} parent=27 // pred_region
        %s402 = smul.u32 %s23, 2
        %s403 = sadd.s32 %s402, 5
        %p404 = scmp.lt.s32.totalorder %s403, 31
        %s405 = scalar_select %p404, %s403, 31
        %p406 = scmp.lt.s32.totalorder %s22, 0
        %s407 = scalar_select %p406, %s22, 0
        %s408 = sadd.s32 %s407, %s405
        %s409 = scalar_lea.vmem %s5, %s408
        %s410 = smul.u32 %s23, 2
        %s411 = sadd.s32 %s410, 5
      $region52: #{lenet5_forward.3} parent=27 // pred_fallthru
        _
    $region28: #{lenet5_forward.3} parent=5 // pred_fallthru
      _
    %p412 = scmp.le.s32.totalorder 1, %s15
    %p413 = scmp.lt.s32.totalorder %s15, 15
    %p414 = pnand %p412, %p413
    %p415 = pneg %p414
    // Predicated region
    $region53: #{lenet5_forward.3} parent=5 // pred_check
      _
    $region54: #{lenet5_forward.3} parent=5 // pred_check_branch
      %417 = sbr.rel (%p414) target = $region56
    $region55: #{lenet5_forward.3} parent=5 // pred_region
      %s418 = ssub.s32 %s15, 1
      %s419 = smul.u32 %s25, 2
      %p420 = scmp.lt.s32.totalorder %s419, 31
      %s421 = scalar_select %p420, %s419, 31
      %p422 = scmp.lt.s32.totalorder %s24, 0
      %s423 = scalar_select %p422, %s24, 0
      %s424 = sadd.s32 %s423, %s421
      %s425 = scalar_lea.vmem %s0, %s424
      %p426 = pneg %p57
      %p427 = pneg %p54
      %s428 = smul.u32 %s25, 2
      %s429 = sadd.s32 %s428, 1
      %p430 = scmp.lt.s32.totalorder %s429, 31
      %s431 = scalar_select %p430, %s429, 31
      %p432 = scmp.lt.s32.totalorder %s24, 0
      %s433 = scalar_select %p432, %s24, 0
      %s434 = sadd.s32 %s433, %s431
      %s435 = scalar_lea.vmem %s1, %s434
      %p436 = pneg %p89
      %p437 = pneg %p86
      %s438 = smul.u32 %s25, 2
      %s439 = sadd.s32 %s438, 2
      %p440 = scmp.lt.s32.totalorder %s439, 31
      %s441 = scalar_select %p440, %s439, 31
      %p442 = scmp.lt.s32.totalorder %s24, 0
      %s443 = scalar_select %p442, %s24, 0
      %s444 = sadd.s32 %s443, %s441
      %s445 = scalar_lea.vmem %s2, %s444
      %p446 = pneg %p121
      %p447 = pneg %p118
      %s448 = smul.u32 %s25, 2
      %s449 = sadd.s32 %s448, 3
      %p450 = scmp.lt.s32.totalorder %s449, 31
      %s451 = scalar_select %p450, %s449, 31
      %p452 = scmp.lt.s32.totalorder %s24, 0
      %s453 = scalar_select %p452, %s24, 0
      %s454 = sadd.s32 %s453, %s451
      %s455 = scalar_lea.vmem %s3, %s454
      %p456 = pneg %p153
      %p457 = pneg %p150
      %s458 = smul.u32 %s25, 2
      %s459 = sadd.s32 %s458, 4
      %p460 = scmp.lt.s32.totalorder %s459, 31
      %s461 = scalar_select %p460, %s459, 31
      %p462 = scmp.lt.s32.totalorder %s24, 0
      %s463 = scalar_select %p462, %s24, 0
      %s464 = sadd.s32 %s463, %s461
      %s465 = scalar_lea.vmem %s4, %s464
      %p466 = pneg %p185
      %p467 = pneg %p182
      %s468 = smul.u32 %s25, 2
      %s469 = sadd.s32 %s468, 5
      %p470 = scmp.lt.s32.totalorder %s469, 31
      %s471 = scalar_select %p470, %s469, 31
      %p472 = scmp.lt.s32.totalorder %s24, 0
      %s473 = scalar_select %p472, %s24, 0
      %s474 = sadd.s32 %s473, %s471
      %s475 = scalar_lea.vmem %s5, %s474
      %p476 = pneg %p217
      %p477 = pneg %p214
      %p478 = pneg %p238
      %p479 = pneg %p235
      %p480 = pneg %p259
      %p481 = pneg %p256
      %p482 = pneg %p280
      %p483 = pneg %p277
      %p484 = pneg %p308
      %p485 = pneg %p305
      %p486 = scmp.lt.s32.totalorder %s25, 13
      %s487 = scalar_select %p486, %s25, 13
      %p488 = scmp.lt.s32.totalorder %s24, 0
      %s489 = scalar_select %p488, %s24, 0
      %s490 = sadd.s32 %s489, %s487
      %s491 = scalar_lea.vmem %s9, %s490
      %s492 = smul.u32 %s25, 2
      %p493 = scmp.lt.s32.totalorder %s492, 31
      %s494 = scalar_select %p493, %s492, 31
      %p495 = scmp.lt.s32.totalorder %s24, 0
      %s496 = scalar_select %p495, %s24, 0
      %s497 = sadd.s32 %s496, %s494
      %s498 = scalar_lea.vmem %s0, %s497
      %s499 = smul.u32 %s25, 2
      %s500 = smul.u32 %s25, 2
      %s501 = sadd.s32 %s500, 1
      %p502 = scmp.lt.s32.totalorder %s501, 31
      %s503 = scalar_select %p502, %s501, 31
      %p504 = scmp.lt.s32.totalorder %s24, 0
      %s505 = scalar_select %p504, %s24, 0
      %s506 = sadd.s32 %s505, %s503
      %s507 = scalar_lea.vmem %s1, %s506
      %s508 = smul.u32 %s25, 2
      %s509 = sadd.s32 %s508, 1
      %s510 = smul.u32 %s25, 2
      %s511 = sadd.s32 %s510, 2
      %p512 = scmp.lt.s32.totalorder %s511, 31
      %s513 = scalar_select %p512, %s511, 31
      %p514 = scmp.lt.s32.totalorder %s24, 0
      %s515 = scalar_select %p514, %s24, 0
      %s516 = sadd.s32 %s515, %s513
      %s517 = scalar_lea.vmem %s2, %s516
      %s518 = smul.u32 %s25, 2
      %s519 = sadd.s32 %s518, 2
      %s520 = smul.u32 %s25, 2
      %s521 = sadd.s32 %s520, 3
      %p522 = scmp.lt.s32.totalorder %s521, 31
      %s523 = scalar_select %p522, %s521, 31
      %p524 = scmp.lt.s32.totalorder %s24, 0
      %s525 = scalar_select %p524, %s24, 0
      %s526 = sadd.s32 %s525, %s523
      %s527 = scalar_lea.vmem %s3, %s526
      %s528 = smul.u32 %s25, 2
      %s529 = sadd.s32 %s528, 3
      %s530 = smul.u32 %s25, 2
      %s531 = sadd.s32 %s530, 4
      %p532 = scmp.lt.s32.totalorder %s531, 31
      %s533 = scalar_select %p532, %s531, 31
      %p534 = scmp.lt.s32.totalorder %s24, 0
      %s535 = scalar_select %p534, %s24, 0
      %s536 = sadd.s32 %s535, %s533
      %s537 = scalar_lea.vmem %s4, %s536
      %s538 = smul.u32 %s25, 2
      %s539 = sadd.s32 %s538, 4
      %s540 = smul.u32 %s25, 2
      %s541 = sadd.s32 %s540, 5
      %p542 = scmp.lt.s32.totalorder %s541, 31
      %s543 = scalar_select %p542, %s541, 31
      %p544 = scmp.lt.s32.totalorder %s24, 0
      %s545 = scalar_select %p544, %s24, 0
      %s546 = sadd.s32 %s545, %s543
      %s547 = scalar_lea.vmem %s5, %s546
      %s548 = smul.u32 %s25, 2
      %s549 = sadd.s32 %s548, 5
      %p550 = scmp.lt.s32.totalorder %s25, 13
      %s551 = scalar_select %p550, %s25, 13
      %p552 = scmp.lt.s32.totalorder %s24, 0
      %s553 = scalar_select %p552, %s24, 0
      %s554 = sadd.s32 %s553, %s551
      %s555 = scalar_lea.vmem %s9, %s554
      %v557 = vld [vmem:[%s498] sm:$0x1]
      %v558 = vld [vmem:[%s6] sm:$0xff]
      %v559 = vld [vmem:[%s6 + $0x8] sm:$0xf]
      %v560 = vld [vmem:[%s6 + $0xc] sm:$0xff]
      %v561 = vld [vmem:[%s6 + $0x14] sm:$0xf]
      %v562 = vld [vmem:[%s6 + $0x18] sm:$0xff]
      %v563 = vld [vmem:[%s6 + $0x20] sm:$0xf]
      %v564 = vld [vmem:[%s6 + $0x24] sm:$0xff]
      %v565 = vld [vmem:[%s6 + $0x2c] sm:$0xf]
      %v566 = vld [vmem:[%s507] sm:$0x1]
      %s567 = scalar_lea.vmem %s6, 48
      %v568 = vld [vmem:[%s567] sm:$0xff]
      %v569 = vld [vmem:[%s567 + $0x8] sm:$0xf]
      %v570 = vld [vmem:[%s567 + $0xc] sm:$0xff]
      %v571 = vld [vmem:[%s567 + $0x14] sm:$0xf]
      %v572 = vld [vmem:[%s567 + $0x18] sm:$0xff]
      %v573 = vld [vmem:[%s567 + $0x20] sm:$0xf]
      %v574 = vld [vmem:[%s567 + $0x24] sm:$0xff]
      %v575 = vld [vmem:[%s567 + $0x2c] sm:$0xf]
      %v584 = vunpack.c.l.b16 %v568
      %v585 = vunpack.c.h.b16 %v568
      %v586 = vunpack.c.l.b16 %v569
      %v587 = vunpack.c.l.b16 %v570
      %v588 = vunpack.c.h.b16 %v570
      %v589 = vunpack.c.l.b16 %v571
      %v590 = vunpack.c.l.b16 %v572
      %v591 = vunpack.c.h.b16 %v572
      %v592 = vunpack.c.l.b16 %v573
      %v593 = vunpack.c.l.b16 %v574
      %v594 = vunpack.c.h.b16 %v574
      %v595 = vunpack.c.l.b16 %v575
      %v596 = vpack.c.b16 %v587, %v584
      %v597 = vpack.c.b16 %v588, %v585
      %v598 = vpack.c.b16 %v589, %v586
      %v599 = vpack.c.b16 %v593, %v590
      %v600 = vpack.c.b16 %v594, %v591
      %v601 = vpack.c.b16 %v595, %v592
      %vm608 = vcmask 261120
      %v610 = vsel %vm608, %v566, 0
      %612 = vmatprep.subr.bf16.mxu0 %v597
      %613 = vmatpush1.bf16.msra.mxu0 %v596
      %614 = vmatprep.subr.bf16.mxu0 %v600
      %615 = vmatpush1.bf16.msra.mxu0 %v599
      %616 = vmatprep.subr.bf16.mxu0 0
      %617 = vmatpush1.bf16.msra.mxu0 0
      %618 = vmatprep.subr.bf16.mxu0 0
      %619 = vmatpush1.bf16.msra.mxu0 0
      %620 = vmatprep.subr.bf16.mxu0 0
      %621 = vmatpush1.bf16.msra.mxu0 0
      %622 = vmatprep.subr.bf16.mxu0 0
      %623 = vmatpush1.bf16.msra.mxu0 0
      %624 = vmatprep.subr.bf16.mxu0 0
      %625 = vmatpush1.bf16.msra.mxu0 0
      %626 = vmatprep.subr.bf16.mxu0 0
      %627 = vmatpush1.bf16.msra.mxu0 0
      %628 = vmatprep.subr.bf16.mxu0 0
      %629 = vmatpush1.bf16.msra.mxu0 0
      %630 = vmatprep.subr.bf16.mxu0 0
      %631 = vmatpush1.bf16.msra.mxu0 0
      %632 = vmatprep.subr.bf16.mxu0 0
      %633 = vmatpush1.bf16.msra.mxu0 0
      %634 = vmatprep.subr.bf16.mxu0 0
      %635 = vmatpush1.bf16.msra.mxu0 0
      %636 = vmatprep.subr.bf16.mxu0 0
      %637 = vmatpush1.bf16.msra.mxu0 0
      %638 = vmatprep.subr.bf16.mxu0 0
      %639 = vmatpush1.bf16.msra.mxu0 0
      %640 = vmatprep.subr.bf16.mxu0 0
      %641 = vmatpush1.bf16.msra.mxu0 0
      %642 = vmatprep.subr.bf16.mxu0 0
      %643 = vmatpush1.bf16.msra.mxu0 0
      %644 = vmatprep.mubr.bf16.mxu0 0
      %645 = vmatmul.mubr.bf16.gmra.mrb[0].mxu0 %v610
      %v646 = vpop.f32.mrb[0].mxu0
      %v647 = vadd.f32 0.0, %v646
      %v648 = vpop.f32.mrb[0].mxu0
      %v649 = vadd.f32 0.0, %v648
      %v650 = vpop.f32.mrb[0].mxu0
      %v651 = vpop.f32.mrb[0].mxu0
      %652 = vdwg.mxu0
      %653 = vmatprep.subr.bf16.mxu0 0
      %654 = vmatpush1.bf16.msra.mxu0 %v598
      %655 = vmatprep.subr.bf16.mxu0 0
      %656 = vmatpush1.bf16.msra.mxu0 %v601
      %657 = vmatprep.subr.bf16.mxu0 0
      %658 = vmatpush1.bf16.msra.mxu0 0
      %659 = vmatprep.subr.bf16.mxu0 0
      %660 = vmatpush1.bf16.msra.mxu0 0
      %661 = vmatprep.subr.bf16.mxu0 0
      %662 = vmatpush1.bf16.msra.mxu0 0
      %663 = vmatprep.subr.bf16.mxu0 0
      %664 = vmatpush1.bf16.msra.mxu0 0
      %665 = vmatprep.subr.bf16.mxu0 0
      %666 = vmatpush1.bf16.msra.mxu0 0
      %667 = vmatprep.subr.bf16.mxu0 0
      %668 = vmatpush1.bf16.msra.mxu0 0
      %669 = vmatprep.subr.bf16.mxu0 0
      %670 = vmatpush1.bf16.msra.mxu0 0
      %671 = vmatprep.subr.bf16.mxu0 0
      %672 = vmatpush1.bf16.msra.mxu0 0
      %673 = vmatprep.subr.bf16.mxu0 0
      %674 = vmatpush1.bf16.msra.mxu0 0
      %675 = vmatprep.subr.bf16.mxu0 0
      %676 = vmatpush1.bf16.msra.mxu0 0
      %677 = vmatprep.subr.bf16.mxu0 0
      %678 = vmatpush1.bf16.msra.mxu0 0
      %679 = vmatprep.subr.bf16.mxu0 0
      %680 = vmatpush1.bf16.msra.mxu0 0
      %681 = vmatprep.subr.bf16.mxu0 0
      %682 = vmatpush1.bf16.msra.mxu0 0
      %683 = vmatprep.subr.bf16.mxu0 0
      %684 = vmatpush1.bf16.msra.mxu0 0
      %685 = vmatprep.mubr.bf16.mxu0 0
      %686 = vmatmul.mubr.bf16.gmra.mrb[0].mxu0 %v610
      %v687 = vpop.f32.mrb[0].mxu0
      %v688 = vadd.f32 0.0, %v687
      %v689 = vpop.f32.mrb[0].mxu0
      %v690 = vpop.f32.mrb[0].mxu0
      %v691 = vpop.f32.mrb[0].mxu0
      %692 = vdwg.mxu0
      %v701 = vunpack.c.l.b16 %v558
      %v702 = vunpack.c.h.b16 %v558
      %v703 = vunpack.c.l.b16 %v559
      %v704 = vunpack.c.l.b16 %v560
      %v705 = vunpack.c.h.b16 %v560
      %v706 = vunpack.c.l.b16 %v561
      %v707 = vunpack.c.l.b16 %v562
      %v708 = vunpack.c.h.b16 %v562
      %v709 = vunpack.c.l.b16 %v563
      %v710 = vunpack.c.l.b16 %v564
      %v711 = vunpack.c.h.b16 %v564
      %v712 = vunpack.c.l.b16 %v565
      %v713 = vpack.c.b16 %v704, %v701
      %v714 = vpack.c.b16 %v705, %v702
      %v715 = vpack.c.b16 %v706, %v703
      %v716 = vpack.c.b16 %v710, %v707
      %v717 = vpack.c.b16 %v711, %v708
      %v718 = vpack.c.b16 %v712, %v709
      %v726 = vsel %vm608, %v557, 0
      %728 = vmatprep.subr.bf16.mxu0 %v714
      %729 = vmatpush1.bf16.msra.mxu0 %v713
      %730 = vmatprep.subr.bf16.mxu0 %v717
      %731 = vmatpush1.bf16.msra.mxu0 %v716
      %732 = vmatprep.subr.bf16.mxu0 0
      %733 = vmatpush1.bf16.msra.mxu0 0
      %734 = vmatprep.subr.bf16.mxu0 0
      %735 = vmatpush1.bf16.msra.mxu0 0
      %736 = vmatprep.subr.bf16.mxu0 0
      %737 = vmatpush1.bf16.msra.mxu0 0
      %738 = vmatprep.subr.bf16.mxu0 0
      %739 = vmatpush1.bf16.msra.mxu0 0
      %740 = vmatprep.subr.bf16.mxu0 0
      %741 = vmatpush1.bf16.msra.mxu0 0
      %742 = vmatprep.subr.bf16.mxu0 0
      %743 = vmatpush1.bf16.msra.mxu0 0
      %744 = vmatprep.subr.bf16.mxu0 0
      %745 = vmatpush1.bf16.msra.mxu0 0
      %746 = vmatprep.subr.bf16.mxu0 0
      %747 = vmatpush1.bf16.msra.mxu0 0
      %748 = vmatprep.subr.bf16.mxu0 0
      %749 = vmatpush1.bf16.msra.mxu0 0
      %750 = vmatprep.subr.bf16.mxu0 0
      %751 = vmatpush1.bf16.msra.mxu0 0
      %752 = vmatprep.subr.bf16.mxu0 0
      %753 = vmatpush1.bf16.msra.mxu0 0
      %754 = vmatprep.subr.bf16.mxu0 0
      %755 = vmatpush1.bf16.msra.mxu0 0
      %756 = vmatprep.subr.bf16.mxu0 0
      %757 = vmatpush1.bf16.msra.mxu0 0
      %758 = vmatprep.subr.bf16.mxu0 0
      %759 = vmatpush1.bf16.msra.mxu0 0
      %760 = vmatprep.mubr.bf16.mxu0 0
      %761 = vmatmul.mubr.bf16.gmra.mrb[0].mxu0 %v726
      %v762 = vpop.f32.mrb[0].mxu0
      %v763 = vadd.f32 %v647, %v762
      %v764 = vpop.f32.mrb[0].mxu0
      %v765 = vadd.f32 %v649, %v764
      %v766 = vpop.f32.mrb[0].mxu0
      %v767 = vpop.f32.mrb[0].mxu0
      %768 = vdwg.mxu0
      %769 = vmatprep.subr.bf16.mxu0 0
      %770 = vmatpush1.bf16.msra.mxu0 %v715
      %771 = vmatprep.subr.bf16.mxu0 0
      %772 = vmatpush1.bf16.msra.mxu0 %v718
      %773 = vmatprep.subr.bf16.mxu0 0
      %774 = vmatpush1.bf16.msra.mxu0 0
      %775 = vmatprep.subr.bf16.mxu0 0
      %776 = vmatpush1.bf16.msra.mxu0 0
      %777 = vmatprep.subr.bf16.mxu0 0
      %778 = vmatpush1.bf16.msra.mxu0 0
      %779 = vmatprep.subr.bf16.mxu0 0
      %780 = vmatpush1.bf16.msra.mxu0 0
      %781 = vmatprep.subr.bf16.mxu0 0
      %782 = vmatpush1.bf16.msra.mxu0 0
      %783 = vmatprep.subr.bf16.mxu0 0
      %784 = vmatpush1.bf16.msra.mxu0 0
      %785 = vmatprep.subr.bf16.mxu0 0
      %786 = vmatpush1.bf16.msra.mxu0 0
      %787 = vmatprep.subr.bf16.mxu0 0
      %788 = vmatpush1.bf16.msra.mxu0 0
      %789 = vmatprep.subr.bf16.mxu0 0
      %790 = vmatpush1.bf16.msra.mxu0 0
      %791 = vmatprep.subr.bf16.mxu0 0
      %792 = vmatpush1.bf16.msra.mxu0 0
      %793 = vmatprep.subr.bf16.mxu0 0
      %794 = vmatpush1.bf16.msra.mxu0 0
      %795 = vmatprep.subr.bf16.mxu0 0
      %796 = vmatpush1.bf16.msra.mxu0 0
      %797 = vmatprep.subr.bf16.mxu0 0
      %798 = vmatpush1.bf16.msra.mxu0 0
      %799 = vmatprep.subr.bf16.mxu0 0
      %800 = vmatpush1.bf16.msra.mxu0 0
      %801 = vmatprep.mubr.bf16.mxu0 0
      %802 = vmatmul.mubr.bf16.gmra.mrb[0].mxu0 %v726
      %v803 = vpop.f32.mrb[0].mxu0
      %v804 = vadd.f32 %v688, %v803
      %v805 = vpop.f32.mrb[0].mxu0
      %v806 = vpop.f32.mrb[0].mxu0
      %v807 = vpop.f32.mrb[0].mxu0
      %808 = vdwg.mxu0
      %v809 = vld [vmem:[%s517] sm:$0x1]
      %s810 = scalar_lea.vmem %s6, 96
      %v811 = vld [vmem:[%s810] sm:$0xff]
      %v812 = vld [vmem:[%s810 + $0x8] sm:$0xf]
      %v813 = vld [vmem:[%s810 + $0xc] sm:$0xff]
      %v814 = vld [vmem:[%s810 + $0x14] sm:$0xf]
      %v815 = vld [vmem:[%s810 + $0x18] sm:$0xff]
      %v816 = vld [vmem:[%s810 + $0x20] sm:$0xf]
      %v817 = vld [vmem:[%s810 + $0x24] sm:$0xff]
      %v818 = vld [vmem:[%s810 + $0x2c] sm:$0xf]
      %v827 = vunpack.c.l.b16 %v811
      %v828 = vunpack.c.h.b16 %v811
      %v829 = vunpack.c.l.b16 %v812
      %v830 = vunpack.c.l.b16 %v813
      %v831 = vunpack.c.h.b16 %v813
      %v832 = vunpack.c.l.b16 %v814
      %v833 = vunpack.c.l.b16 %v815
      %v834 = vunpack.c.h.b16 %v815
      %v835 = vunpack.c.l.b16 %v816
      %v836 = vunpack.c.l.b16 %v817
      %v837 = vunpack.c.h.b16 %v817
      %v838 = vunpack.c.l.b16 %v818
      %v839 = vpack.c.b16 %v830, %v827
      %v840 = vpack.c.b16 %v831, %v828
      %v841 = vpack.c.b16 %v832, %v829
      %v842 = vpack.c.b16 %v836, %v833
      %v843 = vpack.c.b16 %v837, %v834
      %v844 = vpack.c.b16 %v838, %v835
      %v852 = vsel %vm608, %v809, 0
      %854 = vmatprep.subr.bf16.mxu0 %v840
      %855 = vmatpush1.bf16.msra.mxu0 %v839
      %856 = vmatprep.subr.bf16.mxu0 %v843
      %857 = vmatpush1.bf16.msra.mxu0 %v842
      %858 = vmatprep.subr.bf16.mxu0 0
      %859 = vmatpush1.bf16.msra.mxu0 0
      %860 = vmatprep.subr.bf16.mxu0 0
      %861 = vmatpush1.bf16.msra.mxu0 0
      %862 = vmatprep.subr.bf16.mxu0 0
      %863 = vmatpush1.bf16.msra.mxu0 0
      %864 = vmatprep.subr.bf16.mxu0 0
      %865 = vmatpush1.bf16.msra.mxu0 0
      %866 = vmatprep.subr.bf16.mxu0 0
      %867 = vmatpush1.bf16.msra.mxu0 0
      %868 = vmatprep.subr.bf16.mxu0 0
      %869 = vmatpush1.bf16.msra.mxu0 0
      %870 = vmatprep.subr.bf16.mxu0 0
      %871 = vmatpush1.bf16.msra.mxu0 0
      %872 = vmatprep.subr.bf16.mxu0 0
      %873 = vmatpush1.bf16.msra.mxu0 0
      %874 = vmatprep.subr.bf16.mxu0 0
      %875 = vmatpush1.bf16.msra.mxu0 0
      %876 = vmatprep.subr.bf16.mxu0 0
      %877 = vmatpush1.bf16.msra.mxu0 0
      %878 = vmatprep.subr.bf16.mxu0 0
      %879 = vmatpush1.bf16.msra.mxu0 0
      %880 = vmatprep.subr.bf16.mxu0 0
      %881 = vmatpush1.bf16.msra.mxu0 0
      %882 = vmatprep.subr.bf16.mxu0 0
      %883 = vmatpush1.bf16.msra.mxu0 0
      %884 = vmatprep.subr.bf16.mxu0 0
      %885 = vmatpush1.bf16.msra.mxu0 0
      %886 = vmatprep.mubr.bf16.mxu0 0
      %887 = vmatmul.mubr.bf16.gmra.mrb[0].mxu0 %v852
      %v888 = vpop.f32.mrb[0].mxu0
      %v889 = vadd.f32 0.0, %v888
      %v890 = vpop.f32.mrb[0].mxu0
      %v891 = vadd.f32 0.0, %v890
      %v892 = vpop.f32.mrb[0].mxu0
      %v893 = vpop.f32.mrb[0].mxu0
      %894 = vdwg.mxu0
      %895 = vmatprep.subr.bf16.mxu0 0
      %896 = vmatpush1.bf16.msra.mxu0 %v841
      %897 = vmatprep.subr.bf16.mxu0 0
      %898 = vmatpush1.bf16.msra.mxu0 %v844
      %899 = vmatprep.subr.bf16.mxu0 0
      %900 = vmatpush1.bf16.msra.mxu0 0
      %901 = vmatprep.subr.bf16.mxu0 0
      %902 = vmatpush1.bf16.msra.mxu0 0
      %903 = vmatprep.subr.bf16.mxu0 0
      %904 = vmatpush1.bf16.msra.mxu0 0
      %905 = vmatprep.subr.bf16.mxu0 0
      %906 = vmatpush1.bf16.msra.mxu0 0
      %907 = vmatprep.subr.bf16.mxu0 0
      %908 = vmatpush1.bf16.msra.mxu0 0
      %909 = vmatprep.subr.bf16.mxu0 0
      %910 = vmatpush1.bf16.msra.mxu0 0
      %911 = vmatprep.subr.bf16.mxu0 0
      %912 = vmatpush1.bf16.msra.mxu0 0
      %913 = vmatprep.subr.bf16.mxu0 0
      %914 = vmatpush1.bf16.msra.mxu0 0
      %915 = vmatprep.subr.bf16.mxu0 0
      %916 = vmatpush1.bf16.msra.mxu0 0
      %917 = vmatprep.subr.bf16.mxu0 0
      %918 = vmatpush1.bf16.msra.mxu0 0
      %919 = vmatprep.subr.bf16.mxu0 0
      %920 = vmatpush1.bf16.msra.mxu0 0
      %921 = vmatprep.subr.bf16.mxu0 0
      %922 = vmatpush1.bf16.msra.mxu0 0
      %923 = vmatprep.subr.bf16.mxu0 0
      %924 = vmatpush1.bf16.msra.mxu0 0
      %925 = vmatprep.subr.bf16.mxu0 0
      %926 = vmatpush1.bf16.msra.mxu0 0
      %927 = vmatprep.mubr.bf16.mxu0 0
      %928 = vmatmul.mubr.bf16.gmra.mrb[0].mxu0 %v852
      %v929 = vpop.f32.mrb[0].mxu0
      %v930 = vadd.f32 0.0, %v929
      %v931 = vpop.f32.mrb[0].mxu0
      %v932 = vpop.f32.mrb[0].mxu0
      %v933 = vpop.f32.mrb[0].mxu0
      %934 = vdwg.mxu0
      %v935 = vadd.f32 %v763, %v889
      %v936 = vadd.f32 %v765, %v891
      %v937 = vadd.f32 %v804, %v930
      %v938 = vld [vmem:[%s527] sm:$0x1]
      %s939 = scalar_lea.vmem %s6, 144
      %v940 = vld [vmem:[%s939] sm:$0xff]
      %v941 = vld [vmem:[%s939 + $0x8] sm:$0xf]
      %v942 = vld [vmem:[%s939 + $0xc] sm:$0xff]
      %v943 = vld [vmem:[%s939 + $0x14] sm:$0xf]
      %v944 = vld [vmem:[%s939 + $0x18] sm:$0xff]
      %v945 = vld [vmem:[%s939 + $0x20] sm:$0xf]
      %v946 = vld [vmem:[%s939 + $0x24] sm:$0xff]
      %v947 = vld [vmem:[%s939 + $0x2c] sm:$0xf]
      %v956 = vunpack.c.l.b16 %v940
      %v957 = vunpack.c.h.b16 %v940
      %v958 = vunpack.c.l.b16 %v941
      %v959 = vunpack.c.l.b16 %v942
      %v960 = vunpack.c.h.b16 %v942
      %v961 = vunpack.c.l.b16 %v943
      %v962 = vunpack.c.l.b16 %v944
      %v963 = vunpack.c.h.b16 %v944
      %v964 = vunpack.c.l.b16 %v945
      %v965 = vunpack.c.l.b16 %v946
      %v966 = vunpack.c.h.b16 %v946
      %v967 = vunpack.c.l.b16 %v947
      %v968 = vpack.c.b16 %v959, %v956
      %v969 = vpack.c.b16 %v960, %v957
      %v970 = vpack.c.b16 %v961, %v958
      %v971 = vpack.c.b16 %v965, %v962
      %v972 = vpack.c.b16 %v966, %v963
      %v973 = vpack.c.b16 %v967, %v964
      %v981 = vsel %vm608, %v938, 0
      %983 = vmatprep.subr.bf16.mxu0 %v969
      %984 = vmatpush1.bf16.msra.mxu0 %v968
      %985 = vmatprep.subr.bf16.mxu0 %v972
      %986 = vmatpush1.bf16.msra.mxu0 %v971
      %987 = vmatprep.subr.bf16.mxu0 0
      %988 = vmatpush1.bf16.msra.mxu0 0
      %989 = vmatprep.subr.bf16.mxu0 0
      %990 = vmatpush1.bf16.msra.mxu0 0
      %991 = vmatprep.subr.bf16.mxu0 0
      %992 = vmatpush1.bf16.msra.mxu0 0
      %993 = vmatprep.subr.bf16.mxu0 0
      %994 = vmatpush1.bf16.msra.mxu0 0
      %995 = vmatprep.subr.bf16.mxu0 0
      %996 = vmatpush1.bf16.msra.mxu0 0
      %997 = vmatprep.subr.bf16.mxu0 0
      %998 = vmatpush1.bf16.msra.mxu0 0
      %999 = vmatprep.subr.bf16.mxu0 0
      %1000 = vmatpush1.bf16.msra.mxu0 0
      %1001 = vmatprep.subr.bf16.mxu0 0
      %1002 = vmatpush1.bf16.msra.mxu0 0
      %1003 = vmatprep.subr.bf16.mxu0 0
      %1004 = vmatpush1.bf16.msra.mxu0 0
      %1005 = vmatprep.subr.bf16.mxu0 0
      %1006 = vmatpush1.bf16.msra.mxu0 0
      %1007 = vmatprep.subr.bf16.mxu0 0
      %1008 = vmatpush1.bf16.msra.mxu0 0
      %1009 = vmatprep.subr.bf16.mxu0 0
      %1010 = vmatpush1.bf16.msra.mxu0 0
      %1011 = vmatprep.subr.bf16.mxu0 0
      %1012 = vmatpush1.bf16.msra.mxu0 0
      %1013 = vmatprep.subr.bf16.mxu0 0
      %1014 = vmatpush1.bf16.msra.mxu0 0
      %1015 = vmatprep.mubr.bf16.mxu0 0
      %1016 = vmatmul.mubr.bf16.gmra.mrb[0].mxu0 %v981
      %v1017 = vpop.f32.mrb[0].mxu0
      %v1018 = vadd.f32 0.0, %v1017
      %v1019 = vpop.f32.mrb[0].mxu0
      %v1020 = vadd.f32 0.0, %v1019
      %v1021 = vpop.f32.mrb[0].mxu0
      %v1022 = vpop.f32.mrb[0].mxu0
      %1023 = vdwg.mxu0
      %1024 = vmatprep.subr.bf16.mxu0 0
      %1025 = vmatpush1.bf16.msra.mxu0 %v970
      %1026 = vmatprep.subr.bf16.mxu0 0
      %1027 = vmatpush1.bf16.msra.mxu0 %v973
      %1028 = vmatprep.subr.bf16.mxu0 0
      %1029 = vmatpush1.bf16.msra.mxu0 0
      %1030 = vmatprep.subr.bf16.mxu0 0
      %1031 = vmatpush1.bf16.msra.mxu0 0
      %1032 = vmatprep.subr.bf16.mxu0 0
      %1033 = vmatpush1.bf16.msra.mxu0 0
      %1034 = vmatprep.subr.bf16.mxu0 0
      %1035 = vmatpush1.bf16.msra.mxu0 0
      %1036 = vmatprep.subr.bf16.mxu0 0
      %1037 = vmatpush1.bf16.msra.mxu0 0
      %1038 = vmatprep.subr.bf16.mxu0 0
      %1039 = vmatpush1.bf16.msra.mxu0 0
      %1040 = vmatprep.subr.bf16.mxu0 0
      %1041 = vmatpush1.bf16.msra.mxu0 0
      %1042 = vmatprep.subr.bf16.mxu0 0
      %1043 = vmatpush1.bf16.msra.mxu0 0
      %1044 = vmatprep.subr.bf16.mxu0 0
      %1045 = vmatpush1.bf16.msra.mxu0 0
      %1046 = vmatprep.subr.bf16.mxu0 0
      %1047 = vmatpush1.bf16.msra.mxu0 0
      %1048 = vmatprep.subr.bf16.mxu0 0
      %1049 = vmatpush1.bf16.msra.mxu0 0
      %1050 = vmatprep.subr.bf16.mxu0 0
      %1051 = vmatpush1.bf16.msra.mxu0 0
      %1052 = vmatprep.subr.bf16.mxu0 0
      %1053 = vmatpush1.bf16.msra.mxu0 0
      %1054 = vmatprep.subr.bf16.mxu0 0
      %1055 = vmatpush1.bf16.msra.mxu0 0
      %1056 = vmatprep.mubr.bf16.mxu0 0
      %1057 = vmatmul.mubr.bf16.gmra.mrb[0].mxu0 %v981
      %v1058 = vpop.f32.mrb[0].mxu0
      %v1059 = vadd.f32 0.0, %v1058
      %v1060 = vpop.f32.mrb[0].mxu0
      %v1061 = vpop.f32.mrb[0].mxu0
      %v1062 = vpop.f32.mrb[0].mxu0
      %1063 = vdwg.mxu0
      %v1064 = vadd.f32 %v935, %v1018
      %v1065 = vadd.f32 %v936, %v1020
      %v1066 = vadd.f32 %v937, %v1059
      %v1067 = vld [vmem:[%s537] sm:$0x1]
      %s1068 = scalar_lea.vmem %s6, 192
      %v1069 = vld [vmem:[%s1068] sm:$0xff]
      %v1070 = vld [vmem:[%s1068 + $0x8] sm:$0xf]
      %v1071 = vld [vmem:[%s1068 + $0xc] sm:$0xff]
      %v1072 = vld [vmem:[%s1068 + $0x14] sm:$0xf]
      %v1073 = vld [vmem:[%s1068 + $0x18] sm:$0xff]
      %v1074 = vld [vmem:[%s1068 + $0x20] sm:$0xf]
      %v1075 = vld [vmem:[%s1068 + $0x24] sm:$0xff]
      %v1076 = vld [vmem:[%s1068 + $0x2c] sm:$0xf]
      %v1085 = vunpack.c.l.b16 %v1069
      %v1086 = vunpack.c.h.b16 %v1069
      %v1087 = vunpack.c.l.b16 %v1070
      %v1088 = vunpack.c.l.b16 %v1071
      %v1089 = vunpack.c.h.b16 %v1071
      %v1090 = vunpack.c.l.b16 %v1072
      %v1091 = vunpack.c.l.b16 %v1073
      %v1092 = vunpack.c.h.b16 %v1073
      %v1093 = vunpack.c.l.b16 %v1074
      %v1094 = vunpack.c.l.b16 %v1075
      %v1095 = vunpack.c.h.b16 %v1075
      %v1096 = vunpack.c.l.b16 %v1076
      %v1097 = vpack.c.b16 %v1088, %v1085
      %v1098 = vpack.c.b16 %v1089, %v1086
      %v1099 = vpack.c.b16 %v1090, %v1087
      %v1100 = vpack.c.b16 %v1094, %v1091
      %v1101 = vpack.c.b16 %v1095, %v1092
      %v1102 = vpack.c.b16 %v1096, %v1093
      %v1110 = vsel %vm608, %v1067, 0
      %1112 = vmatprep.subr.bf16.mxu0 %v1098
      %1113 = vmatpush1.bf16.msra.mxu0 %v1097
      %1114 = vmatprep.subr.bf16.mxu0 %v1101
      %1115 = vmatpush1.bf16.msra.mxu0 %v1100
      %1116 = vmatprep.subr.bf16.mxu0 0
      %1117 = vmatpush1.bf16.msra.mxu0 0
      %1118 = vmatprep.subr.bf16.mxu0 0
      %1119 = vmatpush1.bf16.msra.mxu0 0
      %1120 = vmatprep.subr.bf16.mxu0 0
      %1121 = vmatpush1.bf16.msra.mxu0 0
      %1122 = vmatprep.subr.bf16.mxu0 0
      %1123 = vmatpush1.bf16.msra.mxu0 0
      %1124 = vmatprep.subr.bf16.mxu0 0
      %1125 = vmatpush1.bf16.msra.mxu0 0
      %1126 = vmatprep.subr.bf16.mxu0 0
      %1127 = vmatpush1.bf16.msra.mxu0 0
      %1128 = vmatprep.subr.bf16.mxu0 0
      %1129 = vmatpush1.bf16.msra.mxu0 0
      %1130 = vmatprep.subr.bf16.mxu0 0
      %1131 = vmatpush1.bf16.msra.mxu0 0
      %1132 = vmatprep.subr.bf16.mxu0 0
      %1133 = vmatpush1.bf16.msra.mxu0 0
      %1134 = vmatprep.subr.bf16.mxu0 0
      %1135 = vmatpush1.bf16.msra.mxu0 0
      %1136 = vmatprep.subr.bf16.mxu0 0
      %1137 = vmatpush1.bf16.msra.mxu0 0
      %1138 = vmatprep.subr.bf16.mxu0 0
      %1139 = vmatpush1.bf16.msra.mxu0 0
      %1140 = vmatprep.subr.bf16.mxu0 0
      %1141 = vmatpush1.bf16.msra.mxu0 0
      %1142 = vmatprep.subr.bf16.mxu0 0
      %1143 = vmatpush1.bf16.msra.mxu0 0
      %1144 = vmatprep.mubr.bf16.mxu0 0
      %1145 = vmatmul.mubr.bf16.gmra.mrb[0].mxu0 %v1110
      %v1146 = vpop.f32.mrb[0].mxu0
      %v1147 = vadd.f32 0.0, %v1146
      %v1148 = vpop.f32.mrb[0].mxu0
      %v1149 = vadd.f32 0.0, %v1148
      %v1150 = vpop.f32.mrb[0].mxu0
      %v1151 = vpop.f32.mrb[0].mxu0
      %1152 = vdwg.mxu0
      %1153 = vmatprep.subr.bf16.mxu0 0
      %1154 = vmatpush1.bf16.msra.mxu0 %v1099
      %1155 = vmatprep.subr.bf16.mxu0 0
      %1156 = vmatpush1.bf16.msra.mxu0 %v1102
      %1157 = vmatprep.subr.bf16.mxu0 0
      %1158 = vmatpush1.bf16.msra.mxu0 0
      %1159 = vmatprep.subr.bf16.mxu0 0
      %1160 = vmatpush1.bf16.msra.mxu0 0
      %1161 = vmatprep.subr.bf16.mxu0 0
      %1162 = vmatpush1.bf16.msra.mxu0 0
      %1163 = vmatprep.subr.bf16.mxu0 0
      %1164 = vmatpush1.bf16.msra.mxu0 0
      %1165 = vmatprep.subr.bf16.mxu0 0
      %1166 = vmatpush1.bf16.msra.mxu0 0
      %1167 = vmatprep.subr.bf16.mxu0 0
      %1168 = vmatpush1.bf16.msra.mxu0 0
      %1169 = vmatprep.subr.bf16.mxu0 0
      %1170 = vmatpush1.bf16.msra.mxu0 0
      %1171 = vmatprep.subr.bf16.mxu0 0
      %1172 = vmatpush1.bf16.msra.mxu0 0
      %1173 = vmatprep.subr.bf16.mxu0 0
      %1174 = vmatpush1.bf16.msra.mxu0 0
      %1175 = vmatprep.subr.bf16.mxu0 0
      %1176 = vmatpush1.bf16.msra.mxu0 0
      %1177 = vmatprep.subr.bf16.mxu0 0
      %1178 = vmatpush1.bf16.msra.mxu0 0
      %1179 = vmatprep.subr.bf16.mxu0 0
      %1180 = vmatpush1.bf16.msra.mxu0 0
      %1181 = vmatprep.subr.bf16.mxu0 0
      %1182 = vmatpush1.bf16.msra.mxu0 0
      %1183 = vmatprep.subr.bf16.mxu0 0
      %1184 = vmatpush1.bf16.msra.mxu0 0
      %1185 = vmatprep.mubr.bf16.mxu0 0
      %1186 = vmatmul.mubr.bf16.gmra.mrb[0].mxu0 %v1110
      %v1187 = vpop.f32.mrb[0].mxu0
      %v1188 = vadd.f32 0.0, %v1187
      %v1189 = vpop.f32.mrb[0].mxu0
      %v1190 = vpop.f32.mrb[0].mxu0
      %v1191 = vpop.f32.mrb[0].mxu0
      %1192 = vdwg.mxu0
      %v1193 = vadd.f32 %v1064, %v1147
      %v1194 = vadd.f32 %v1065, %v1149
      %v1195 = vadd.f32 %v1066, %v1188
      %v1196 = vld [vmem:[%s547] sm:$0x1]
      %s1197 = scalar_lea.vmem %s6, 240
      %v1198 = vld [vmem:[%s1197] sm:$0xff]
      %v1199 = vld [vmem:[%s1197 + $0x8] sm:$0xf]
      %v1200 = vld [vmem:[%s1197 + $0xc] sm:$0xff]
      %v1201 = vld [vmem:[%s1197 + $0x14] sm:$0xf]
      %v1202 = vld [vmem:[%s1197 + $0x18] sm:$0xff]
      %v1203 = vld [vmem:[%s1197 + $0x20] sm:$0xf]
      %v1204 = vld [vmem:[%s1197 + $0x24] sm:$0xff]
      %v1205 = vld [vmem:[%s1197 + $0x2c] sm:$0xf]
      %v1214 = vunpack.c.l.b16 %v1198
      %v1215 = vunpack.c.h.b16 %v1198
      %v1216 = vunpack.c.l.b16 %v1199
      %v1217 = vunpack.c.l.b16 %v1200
      %v1218 = vunpack.c.h.b16 %v1200
      %v1219 = vunpack.c.l.b16 %v1201
      %v1220 = vunpack.c.l.b16 %v1202
      %v1221 = vunpack.c.h.b16 %v1202
      %v1222 = vunpack.c.l.b16 %v1203
      %v1223 = vunpack.c.l.b16 %v1204
      %v1224 = vunpack.c.h.b16 %v1204
      %v1225 = vunpack.c.l.b16 %v1205
      %v1226 = vpack.c.b16 %v1217, %v1214
      %v1227 = vpack.c.b16 %v1218, %v1215
      %v1228 = vpack.c.b16 %v1219, %v1216
      %v1229 = vpack.c.b16 %v1223, %v1220
      %v1230 = vpack.c.b16 %v1224, %v1221
      %v1231 = vpack.c.b16 %v1225, %v1222
      %v1239 = vsel %vm608, %v1196, 0
      %1241 = vmatprep.subr.bf16.mxu0 %v1227
      %1242 = vmatpush1.bf16.msra.mxu0 %v1226
      %1243 = vmatprep.subr.bf16.mxu0 %v1230
      %1244 = vmatpush1.bf16.msra.mxu0 %v1229
      %1245 = vmatprep.subr.bf16.mxu0 0
      %1246 = vmatpush1.bf16.msra.mxu0 0
      %1247 = vmatprep.subr.bf16.mxu0 0
      %1248 = vmatpush1.bf16.msra.mxu0 0
      %1249 = vmatprep.subr.bf16.mxu0 0
      %1250 = vmatpush1.bf16.msra.mxu0 0
      %1251 = vmatprep.subr.bf16.mxu0 0
      %1252 = vmatpush1.bf16.msra.mxu0 0
      %1253 = vmatprep.subr.bf16.mxu0 0
      %1254 = vmatpush1.bf16.msra.mxu0 0
      %1255 = vmatprep.subr.bf16.mxu0 0
      %1256 = vmatpush1.bf16.msra.mxu0 0
      %1257 = vmatprep.subr.bf16.mxu0 0
      %1258 = vmatpush1.bf16.msra.mxu0 0
      %1259 = vmatprep.subr.bf16.mxu0 0
      %1260 = vmatpush1.bf16.msra.mxu0 0
      %1261 = vmatprep.subr.bf16.mxu0 0
      %1262 = vmatpush1.bf16.msra.mxu0 0
      %1263 = vmatprep.subr.bf16.mxu0 0
      %1264 = vmatpush1.bf16.msra.mxu0 0
      %1265 = vmatprep.subr.bf16.mxu0 0
      %1266 = vmatpush1.bf16.msra.mxu0 0
      %1267 = vmatprep.subr.bf16.mxu0 0
      %1268 = vmatpush1.bf16.msra.mxu0 0
      %1269 = vmatprep.subr.bf16.mxu0 0
      %1270 = vmatpush1.bf16.msra.mxu0 0
      %1271 = vmatprep.subr.bf16.mxu0 0
      %1272 = vmatpush1.bf16.msra.mxu0 0
      %1273 = vmatprep.mubr.bf16.mxu0 0
      %1274 = vmatmul.mubr.bf16.gmra.mrb[0].mxu0 %v1239
      %v1275 = vpop.f32.mrb[0].mxu0
      %v1276 = vadd.f32 0.0, %v1275
      %v1277 = vpop.f32.mrb[0].mxu0
      %v1278 = vadd.f32 0.0, %v1277
      %v1279 = vpop.f32.mrb[0].mxu0
      %v1280 = vpop.f32.mrb[0].mxu0
      %1281 = vdwg.mxu0
      %1282 = vmatprep.subr.bf16.mxu0 0
      %1283 = vmatpush1.bf16.msra.mxu0 %v1228
      %1284 = vmatprep.subr.bf16.mxu0 0
      %1285 = vmatpush1.bf16.msra.mxu0 %v1231
      %1286 = vmatprep.subr.bf16.mxu0 0
      %1287 = vmatpush1.bf16.msra.mxu0 0
      %1288 = vmatprep.subr.bf16.mxu0 0
      %1289 = vmatpush1.bf16.msra.mxu0 0
      %1290 = vmatprep.subr.bf16.mxu0 0
      %1291 = vmatpush1.bf16.msra.mxu0 0
      %1292 = vmatprep.subr.bf16.mxu0 0
      %1293 = vmatpush1.bf16.msra.mxu0 0
      %1294 = vmatprep.subr.bf16.mxu0 0
      %1295 = vmatpush1.bf16.msra.mxu0 0
      %1296 = vmatprep.subr.bf16.mxu0 0
      %1297 = vmatpush1.bf16.msra.mxu0 0
      %1298 = vmatprep.subr.bf16.mxu0 0
      %1299 = vmatpush1.bf16.msra.mxu0 0
      %1300 = vmatprep.subr.bf16.mxu0 0
      %1301 = vmatpush1.bf16.msra.mxu0 0
      %1302 = vmatprep.subr.bf16.mxu0 0
      %1303 = vmatpush1.bf16.msra.mxu0 0
      %1304 = vmatprep.subr.bf16.mxu0 0
      %1305 = vmatpush1.bf16.msra.mxu0 0
      %1306 = vmatprep.subr.bf16.mxu0 0
      %1307 = vmatpush1.bf16.msra.mxu0 0
      %1308 = vmatprep.subr.bf16.mxu0 0
      %1309 = vmatpush1.bf16.msra.mxu0 0
      %1310 = vmatprep.subr.bf16.mxu0 0
      %1311 = vmatpush1.bf16.msra.mxu0 0
      %1312 = vmatprep.subr.bf16.mxu0 0
      %1313 = vmatpush1.bf16.msra.mxu0 0
      %1314 = vmatprep.mubr.bf16.mxu0 0
      %1315 = vmatmul.mubr.bf16.gmra.mrb[0].mxu0 %v1239
      %v1316 = vpop.f32.mrb[0].mxu0
      %v1317 = vadd.f32 0.0, %v1316
      %v1318 = vpop.f32.mrb[0].mxu0
      %v1319 = vpop.f32.mrb[0].mxu0
      %v1320 = vpop.f32.mrb[0].mxu0
      %1321 = vdwg.mxu0
      %v1322 = vadd.f32 %v1193, %v1276
      %v1323 = vadd.f32 %v1194, %v1278
      %v1324 = vadd.f32 %v1195, %v1317
      %v1325 = vld [vmem:[%s7] sm:$0x7]
      %v1327 = vlaneseq
      %v1328 = vshrl.u32 %v1327, 7
      %v1329 = vsub.s32 0, %v1328
      %v1330 = vrot.slane %v1325, %v1329
      %v1331 = vlaneseq
      %v1332 = vshrl.u32 %v1331, 7
      %v1333 = vsub.s32 1, %v1332
      %v1334 = vrot.slane %v1325, %v1333
      %v1335 = vlaneseq
      %v1336 = vshrl.u32 %v1335, 7
      %v1337 = vsub.s32 2, %v1336
      %v1338 = vrot.slane %v1325, %v1337
      %v1342 = vadd.f32 %v1322, %v1330
      %v1343 = vadd.f32 %v1323, %v1334
      %v1344 = vadd.f32 %v1324, %v1338
      %v1345 = vtanh.pop %v1342
      %v1346 = vtanh.pop %v1343
      %v1347 = vtanh.pop %v1344
      %v1348 = vpack.c.bf16 %v1345, %v1345
      %v1349 = vpack.c.bf16 %v1346, %v1346
      %v1350 = vpack.c.bf16 %v1347, %v1347
      %v1351 = vld [vmem:[%s8] sm:$0xf]
      %v1352 = vld [vmem:[%s8 + $0x4] sm:$0xf]
      %v1353 = vld [vmem:[%s8 + $0x8] sm:$0xf]
      %v1354 = vld [vmem:[%s8 + $0xc] sm:$0xf]
      %v1355 = vld [vmem:[%s8 + $0x10] sm:$0xf]
      %v1356 = vld [vmem:[%s8 + $0x14] sm:$0xf]
      %v1357 = vld [vmem:[%s8 + $0x18] sm:$0xf]
      %v1358 = vld [vmem:[%s8 + $0x1c] sm:$0xf]
      %v1359 = vld [vmem:[%s8 + $0x20] sm:$0xf]
      %v1360 = vld [vmem:[%s8 + $0x24] sm:$0xf]
      %v1361 = vld [vmem:[%s8 + $0x28] sm:$0xf]
      %v1362 = vld [vmem:[%s8 + $0x2c] sm:$0xf]
      %v1363 = vld [vmem:[%s8 + $0x30] sm:$0xf]
      %v1364 = vld [vmem:[%s8 + $0x34] sm:$0xf]
      %v1365 = vld [vmem:[%s8 + $0x38] sm:$0xf]
      %v1366 = vld [vmem:[%s8 + $0x3c] sm:$0xf]
      %v1367 = vld [vmem:[%s8 + $0x40] sm:$0xf]
      %v1368 = vld [vmem:[%s8 + $0x44] sm:$0xf]
      %v1369 = vld [vmem:[%s8 + $0x48] sm:$0xf]
      %v1370 = vld [vmem:[%s8 + $0x4c] sm:$0xf]
      %v1371 = vld [vmem:[%s8 + $0x50] sm:$0xf]
      %v1372 = vld [vmem:[%s8 + $0x54] sm:$0xf]
      %v1373 = vld [vmem:[%s8 + $0x58] sm:$0xf]
      %v1374 = vld [vmem:[%s8 + $0x5c] sm:$0xf]
      %v1375 = vld [vmem:[%s8 + $0x60] sm:$0xf]
      %v1376 = vld [vmem:[%s8 + $0x64] sm:$0xf]
      %v1377 = vld [vmem:[%s8 + $0x68] sm:$0xf]
      %v1378 = vld [vmem:[%s8 + $0x6c] sm:$0xf]
      %v1379 = vld [vmem:[%s8 + $0x70] sm:$0xf]
      %v1380 = vld [vmem:[%s8 + $0x74] sm:$0xf]
      %v1381 = vld [vmem:[%s8 + $0x78] sm:$0xf]
      %v1382 = vld [vmem:[%s8 + $0x7c] sm:$0xf]
      %v1383 = vld [vmem:[%s8 + $0x80] sm:$0xf]
      %v1384 = vld [vmem:[%s8 + $0x84] sm:$0xf]
      %v1385 = vld [vmem:[%s8 + $0x88] sm:$0xf]
      %v1386 = vld [vmem:[%s8 + $0x8c] sm:$0xf]
      %v1387 = vld [vmem:[%s8 + $0x90] sm:$0xf]
      %v1388 = vld [vmem:[%s8 + $0x94] sm:$0xf]
      %v1389 = vld [vmem:[%s8 + $0x98] sm:$0xf]
      %v1390 = vld [vmem:[%s8 + $0x9c] sm:$0xf]
      %v1391 = vld [vmem:[%s8 + $0xa0] sm:$0xf]
      %v1392 = vld [vmem:[%s8 + $0xa4] sm:$0xf]
      %v1435 = vunpack.c.l.b16 %v1351
      %v1436 = vunpack.c.l.b16 %v1352
      %v1437 = vunpack.c.l.b16 %v1353
      %v1438 = vunpack.c.l.b16 %v1354
      %v1439 = vunpack.c.l.b16 %v1355
      %v1440 = vunpack.c.l.b16 %v1356
      %v1441 = vunpack.c.l.b16 %v1357
      %v1442 = vunpack.c.l.b16 %v1358
      %v1443 = vunpack.c.l.b16 %v1359
      %v1444 = vunpack.c.l.b16 %v1360
      %v1445 = vunpack.c.l.b16 %v1361
      %v1446 = vunpack.c.l.b16 %v1362
      %v1447 = vunpack.c.l.b16 %v1363
      %v1448 = vunpack.c.l.b16 %v1364
      %v1449 = vunpack.c.l.b16 %v1365
      %v1450 = vunpack.c.l.b16 %v1366
      %v1451 = vunpack.c.l.b16 %v1367
      %v1452 = vunpack.c.l.b16 %v1368
      %v1453 = vunpack.c.l.b16 %v1369
      %v1454 = vunpack.c.l.b16 %v1370
      %v1455 = vunpack.c.l.b16 %v1371
      %v1456 = vunpack.c.l.b16 %v1372
      %v1457 = vunpack.c.l.b16 %v1373
      %v1458 = vunpack.c.l.b16 %v1374
      %v1459 = vunpack.c.l.b16 %v1375
      %v1460 = vunpack.c.l.b16 %v1376
      %v1461 = vunpack.c.l.b16 %v1377
      %v1462 = vunpack.c.l.b16 %v1378
      %v1463 = vunpack.c.l.b16 %v1379
      %v1464 = vunpack.c.l.b16 %v1380
      %v1465 = vunpack.c.l.b16 %v1381
      %v1466 = vunpack.c.l.b16 %v1382
      %v1467 = vunpack.c.l.b16 %v1383
      %v1468 = vunpack.c.l.b16 %v1384
      %v1469 = vunpack.c.l.b16 %v1385
      %v1470 = vunpack.c.l.b16 %v1386
      %v1471 = vunpack.c.l.b16 %v1387
      %v1472 = vunpack.c.l.b16 %v1388
      %v1473 = vunpack.c.l.b16 %v1389
      %v1474 = vunpack.c.l.b16 %v1390
      %v1475 = vunpack.c.l.b16 %v1391
      %v1476 = vunpack.c.l.b16 %v1392
      %v1477 = vpack.c.b16 %v1436, %v1435
      %v1478 = vpack.c.b16 %v1438, %v1437
      %v1479 = vpack.c.b16 %v1440, %v1439
      %v1480 = vpack.c.b16 %v1442, %v1441
      %v1481 = vpack.c.b16 %v1444, %v1443
      %v1482 = vpack.c.b16 %v1446, %v1445
      %v1483 = vpack.c.b16 %v1448, %v1447
      %v1484 = vpack.c.b16 %v1450, %v1449
      %v1485 = vpack.c.b16 %v1452, %v1451
      %v1486 = vpack.c.b16 %v1454, %v1453
      %v1487 = vpack.c.b16 %v1456, %v1455
      %v1488 = vpack.c.b16 %v1458, %v1457
      %v1489 = vpack.c.b16 %v1460, %v1459
      %v1490 = vpack.c.b16 %v1462, %v1461
      %v1491 = vpack.c.b16 %v1464, %v1463
      %v1492 = vpack.c.b16 %v1466, %v1465
      %v1493 = vpack.c.b16 %v1468, %v1467
      %v1494 = vpack.c.b16 %v1470, %v1469
      %v1495 = vpack.c.b16 %v1472, %v1471
      %v1496 = vpack.c.b16 %v1474, %v1473
      %v1497 = vpack.c.b16 %v1476, %v1475
      %vm1519 = vcmask 654336
      %v1521 = vsel %vm1519, %v1350, 0
      %1523 = vmatprep.subr.bf16.mxu0 0
      %1524 = vmatpush1.bf16.msra.mxu0 %v1477
      %1525 = vmatprep.subr.bf16.mxu0 0
      %1526 = vmatpush1.bf16.msra.mxu0 %v1478
      %1527 = vmatprep.subr.bf16.mxu0 0
      %1528 = vmatpush1.bf16.msra.mxu0 %v1479
      %1529 = vmatprep.subr.bf16.mxu0 0
      %1530 = vmatpush1.bf16.msra.mxu0 %v1480
      %1531 = vmatprep.subr.bf16.mxu0 0
      %1532 = vmatpush1.bf16.msra.mxu0 %v1481
      %1533 = vmatprep.subr.bf16.mxu0 0
      %1534 = vmatpush1.bf16.msra.mxu0 %v1482
      %1535 = vmatprep.subr.bf16.mxu0 0
      %1536 = vmatpush1.bf16.msra.mxu0 %v1483
      %1537 = vmatprep.subr.bf16.mxu0 0
      %1538 = vmatpush1.bf16.msra.mxu0 %v1484
      %1539 = vmatprep.subr.bf16.mxu0 0
      %1540 = vmatpush1.bf16.msra.mxu0 %v1485
      %1541 = vmatprep.subr.bf16.mxu0 0
      %1542 = vmatpush1.bf16.msra.mxu0 %v1486
      %1543 = vmatprep.subr.bf16.mxu0 0
      %1544 = vmatpush1.bf16.msra.mxu0 %v1487
      %1545 = vmatprep.subr.bf16.mxu0 0
      %1546 = vmatpush1.bf16.msra.mxu0 %v1488
      %1547 = vmatprep.subr.bf16.mxu0 0
      %1548 = vmatpush1.bf16.msra.mxu0 %v1489
      %1549 = vmatprep.subr.bf16.mxu0 0
      %1550 = vmatpush1.bf16.msra.mxu0 %v1490
      %1551 = vmatprep.subr.bf16.mxu0 0
      %1552 = vmatpush1.bf16.msra.mxu0 %v1491
      %1553 = vmatprep.subr.bf16.mxu0 0
      %1554 = vmatpush1.bf16.msra.mxu0 %v1492
      %1555 = vmatprep.mubr.bf16.mxu0 %v1349
      %1556 = vmatmul.mubr.bf16.gmra.mrb[0].mxu0 %v1348
      %v1557 = vpop.f32.mrb[0].mxu0
      %v1558 = vadd.f32 0.0, %v1557
      %v1559 = vpop.f32.mrb[0].mxu0
      %v1560 = vpop.f32.mrb[0].mxu0
      %v1561 = vpop.f32.mrb[0].mxu0
      %1562 = vdwg.mxu0
      %1563 = vmatprep.subr.bf16.mxu0 0
      %1564 = vmatpush1.bf16.msra.mxu0 %v1493
      %1565 = vmatprep.subr.bf16.mxu0 0
      %1566 = vmatpush1.bf16.msra.mxu0 %v1494
      %1567 = vmatprep.subr.bf16.mxu0 0
      %1568 = vmatpush1.bf16.msra.mxu0 %v1495
      %1569 = vmatprep.subr.bf16.mxu0 0
      %1570 = vmatpush1.bf16.msra.mxu0 %v1496
      %1571 = vmatprep.subr.bf16.mxu0 0
      %1572 = vmatpush1.bf16.msra.mxu0 %v1497
      %1573 = vmatprep.subr.bf16.mxu0 0
      %1574 = vmatpush1.bf16.msra.mxu0 0
      %1575 = vmatprep.subr.bf16.mxu0 0
      %1576 = vmatpush1.bf16.msra.mxu0 0
      %1577 = vmatprep.subr.bf16.mxu0 0
      %1578 = vmatpush1.bf16.msra.mxu0 0
      %1579 = vmatprep.subr.bf16.mxu0 0
      %1580 = vmatpush1.bf16.msra.mxu0 0
      %1581 = vmatprep.subr.bf16.mxu0 0
      %1582 = vmatpush1.bf16.msra.mxu0 0
      %1583 = vmatprep.subr.bf16.mxu0 0
      %1584 = vmatpush1.bf16.msra.mxu0 0
      %1585 = vmatprep.subr.bf16.mxu0 0
      %1586 = vmatpush1.bf16.msra.mxu0 0
      %1587 = vmatprep.subr.bf16.mxu0 0
      %1588 = vmatpush1.bf16.msra.mxu0 0
      %1589 = vmatprep.subr.bf16.mxu0 0
      %1590 = vmatpush1.bf16.msra.mxu0 0
      %1591 = vmatprep.subr.bf16.mxu0 0
      %1592 = vmatpush1.bf16.msra.mxu0 0
      %1593 = vmatprep.subr.bf16.mxu0 0
      %1594 = vmatpush1.bf16.msra.mxu0 0
      %1595 = vmatprep.mubr.bf16.mxu0 0
      %1596 = vmatmul.mubr.bf16.gmra.mrb[0].mxu0 %v1521
      %v1597 = vpop.f32.mrb[0].mxu0
      %v1598 = vadd.f32 %v1558, %v1597
      %v1599 = vpop.f32.mrb[0].mxu0
      %v1600 = vpop.f32.mrb[0].mxu0
      %v1601 = vpop.f32.mrb[0].mxu0
      %1602 = vdwg.mxu0
      %v1603 = vpack.c.bf16 %v1598, %v1598
      %vm1604 = vcmask 679936
      %1605 = vst.msk [vmem:[%s555] sm:$0x1] %vm1604, %v1603
      %p1606 = scmp.lt.s32.totalorder %s25, 13
      %s1607 = scalar_select %p1606, %s25, 13
      %p1608 = scmp.lt.s32.totalorder %s24, 0
      %s1609 = scalar_select %p1608, %s24, 0
      %s1610 = sadd.s32 %s1609, %s1607
      %s1611 = scalar_lea.vmem %s9, %s1610
      // Predicated region
      $region57: #{lenet5_forward.3} parent=55 // pred_check
        %p1612 = pneg %p305
      $region58: #{lenet5_forward.3} parent=55 // pred_check_branch
        %1614 = sbr.rel (%p1612) target = $region60
      $region59: #{lenet5_forward.3} parent=55 // pred_region
        _
      $region60: #{lenet5_forward.3} parent=55 // pred_fallthru
        _
    $region56: #{lenet5_forward.3} parent=5 // pred_fallthru
      _
    %p1615 = scmp.le.s32.totalorder 2, %s15
    // Predicated region
    $region61: #{lenet5_forward.3} parent=5 // pred_check
      %p1616 = pneg %p1615
    $region62: #{lenet5_forward.3} parent=5 // pred_check_branch
      %1618 = sbr.rel (%p1616) target = $region64
    $region63: #{lenet5_forward.3} parent=5 // pred_region
      %s1619 = ssub.s32 %s15, 2
      // Predicated region
      $region65: #{lenet5_forward.3} parent=63 // pred_check
        %p1620 = pneg %p311
      $region66: #{lenet5_forward.3} parent=63 // pred_check_branch
        %1622 = sbr.rel (%p1620) target = $region68
      $region67: #{lenet5_forward.3} parent=63 // pred_region
        %p1623 = scmp.lt.s32.totalorder %s27, 13
        %s1624 = scalar_select %p1623, %s27, 13
        %p1625 = scmp.lt.s32.totalorder %s26, 0
        %s1626 = scalar_select %p1625, %s26, 0
        %s1627 = sadd.s32 %s1626, %s1624
        %s1628 = scalar_lea.vmem %s9, %s1627
      $region68: #{lenet5_forward.3} parent=63 // pred_fallthru
        _
    $region64: #{lenet5_forward.3} parent=5 // pred_fallthru
      _
  $region6: #{lenet5_forward.3} parent=0 // loop_footer
    %s19 = sadd.s32 1, %s15
  $region7: #{lenet5_forward.3} parent=0 // loop_footer_branch
    %14 = sbr.rel target = $region3
  $region8: #{lenet5_forward.3} parent=0 // loop_exit
    _

// kernel: lenet5_forward.5
$region0: #{lenet5_forward.5}
  #allocation0 [shape = 'u32[]', space=smem, size = 0x4, offset = 0x4, fixed_abs, tag = 'smem constant byte address 0x4 - core index']
  #allocation1 [shape = 'u32[144,128]{1,0:T(1,128)}', space=vmem, size = 0x12000, scoped, tag = 'internal scratch']
  %s0 = inlined_call_operand.vmem [shape: bf16[5,2,80], index: 0, kind: input, shape index: {}]
  %s1 = inlined_call_operand.vmem [shape: bf16[5,80,128], index: 1, kind: input, shape index: {}]
  %s2 = inlined_call_operand.vmem [shape: f32[1,128], index: 2, kind: input, shape index: {}]
  %s3 = inlined_call_operand.vmem [shape: bf16[128,128], index: 3, kind: input, shape index: {}]
  %s4 = inlined_call_operand.vmem [shape: f32[1,128], index: 4, kind: input, shape index: {}]
  %s5 = inlined_call_operand.vmem [shape: bf16[128,10], index: 5, kind: input, shape index: {}]
  %s6 = inlined_call_operand.vmem [shape: f32[1,10], index: 6, kind: input, shape index: {}]
  %s7 = inlined_call_operand.hbm [shape: f32[2,10], index: 7, kind: output, shape index: {0}]
  %s8 = inlined_call_operand.hbm [shape: f32[2,10], index: 8, kind: output, shape index: {1}]
  %9 = xla_tuple %s7, %s8
  %s10 = sld [smem:[#allocation0]]
  $region46: #{lenet5_forward.5} parent=0
    _
  %s12 = ssub.s32 1, %s10
  %s13 = scalar_select 0, %s12, %s10
  $region1: #{lenet5_forward.5} parent=0
    #allocation2 [shape = 'u8[1024]{0}', space=vmem, size = 0x400, scoped, tag = 'output window, operand 0, single buffered']
    #allocation3 [shape = 's32[1]{0}', space=sflag, size = 0x4, scoped, tag = 'scoped memory for lenet5_forward.5']
    #allocation4 [shape = 'u8[1024]{0}', space=vmem, size = 0x400, scoped, tag = 'output window, operand 1, single buffered']
    #allocation5 [shape = 's32[1]{0}', space=sflag, size = 0x4, scoped, tag = 'scoped memory for lenet5_forward.5']
    %14 = vsyncpa [#allocation3], 0
    %15 = vsyncpa [#allocation5], 0
    // Predicated region
    $region2: #{lenet5_forward.5} parent=1 // pred_check
      _
    $region3: #{lenet5_forward.5} parent=1 // pred_check_branch
      %17 = sbr.rel (0) target = $region5
    $region4: #{lenet5_forward.5} parent=1 // pred_region
      _
    $region5: #{lenet5_forward.5} parent=1 // pred_fallthru
      _
    // Predicated region
    $region6: #{lenet5_forward.5} parent=1 // pred_check
      _
    $region7: #{lenet5_forward.5} parent=1 // pred_check_branch
      %19 = sbr.rel (0) target = $region9
    $region8: #{lenet5_forward.5} parent=1 // pred_region
      _
    $region9: #{lenet5_forward.5} parent=1 // pred_fallthru
      _
    // Predicated region
    $region10: #{lenet5_forward.5} parent=1 // pred_check
      _
    $region11: #{lenet5_forward.5} parent=1 // pred_check_branch
      %21 = sbr.rel (0) target = $region13
    $region12: #{lenet5_forward.5} parent=1 // pred_region
      _
    $region13: #{lenet5_forward.5} parent=1 // pred_fallthru
      _
    // Predicated region
    $region14: #{lenet5_forward.5} parent=1 // pred_check
      _
    $region15: #{lenet5_forward.5} parent=1 // pred_check_branch
      %23 = sbr.rel (0) target = $region17
    $region16: #{lenet5_forward.5} parent=1 // pred_region
      _
    $region17: #{lenet5_forward.5} parent=1 // pred_fallthru
      _
    // Predicated region
    $region18: #{lenet5_forward.5} parent=1 // pred_check
      _
    $region19: #{lenet5_forward.5} parent=1 // pred_check_branch
      %25 = sbr.rel (0) target = $region21
    $region20: #{lenet5_forward.5} parent=1 // pred_region
      _
    $region21: #{lenet5_forward.5} parent=1 // pred_fallthru
      _
    // Predicated region
    $region22: #{lenet5_forward.5} parent=1 // pred_check
      _
    $region23: #{lenet5_forward.5} parent=1 // pred_check_branch
      %27 = sbr.rel (0) target = $region25
    $region24: #{lenet5_forward.5} parent=1 // pred_region
      _
    $region25: #{lenet5_forward.5} parent=1 // pred_fallthru
      _
    // Predicated region
    $region26: #{lenet5_forward.5} parent=1 // pred_check
      _
    $region27: #{lenet5_forward.5} parent=1 // pred_check_branch
      %29 = sbr.rel (0) target = $region29
    $region28: #{lenet5_forward.5} parent=1 // pred_region
      _
    $region29: #{lenet5_forward.5} parent=1 // pred_fallthru
      _
    %v31 = vld [vmem:[%s0] sm:$0x1]
    %v32 = vld [vmem:[%s1] sm:$0xf]
    %v33 = vld [vmem:[%s1 + $0x4] sm:$0xf]
    %v34 = vld [vmem:[%s1 + $0x8] sm:$0xf]
    %v35 = vld [vmem:[%s1 + $0xc] sm:$0xf]
    %v36 = vld [vmem:[%s1 + $0x10] sm:$0xf]
    %v37 = vld [vmem:[%s1 + $0x14] sm:$0xf]
    %v38 = vld [vmem:[%s1 + $0x18] sm:$0xf]
    %v39 = vld [vmem:[%s1 + $0x1c] sm:$0xf]
    %v40 = vld [vmem:[%s1 + $0x20] sm:$0xf]
    %v41 = vld [vmem:[%s1 + $0x24] sm:$0xf]
    %s42 = scalar_lea.vmem %s0, 1
    %v43 = vld [vmem:[%s42] sm:$0x1]
    %s44 = scalar_lea.vmem %s1, 40
    %v45 = vld [vmem:[%s44] sm:$0xf]
    %v46 = vld [vmem:[%s44 + $0x4] sm:$0xf]
    %v47 = vld [vmem:[%s44 + $0x8] sm:$0xf]
    %v48 = vld [vmem:[%s44 + $0xc] sm:$0xf]
    %v49 = vld [vmem:[%s44 + $0x10] sm:$0xf]
    %v50 = vld [vmem:[%s44 + $0x14] sm:$0xf]
    %v51 = vld [vmem:[%s44 + $0x18] sm:$0xf]
    %v52 = vld [vmem:[%s44 + $0x1c] sm:$0xf]
    %v53 = vld [vmem:[%s44 + $0x20] sm:$0xf]
    %v54 = vld [vmem:[%s44 + $0x24] sm:$0xf]
    %v65 = vunpack.c.l.b16 %v45
    %v66 = vunpack.c.l.b16 %v46
    %v67 = vunpack.c.l.b16 %v47
    %v68 = vunpack.c.l.b16 %v48
    %v69 = vunpack.c.l.b16 %v49
    %v70 = vunpack.c.l.b16 %v50
    %v71 = vunpack.c.l.b16 %v51
    %v72 = vunpack.c.l.b16 %v52
    %v73 = vunpack.c.l.b16 %v53
    %v74 = vunpack.c.l.b16 %v54
    %v75 = vpack.c.b16 %v66, %v65
    %v76 = vpack.c.b16 %v68, %v67
    %v77 = vpack.c.b16 %v70, %v69
    %v78 = vpack.c.b16 %v72, %v71
    %v79 = vpack.c.b16 %v74, %v73
    %vm85 = vcmask 654336
    %v87 = vsel %vm85, %v43, 0
    %89 = vmatprep.subr.bf16.mxu0 0
    %90 = vmatpush1.bf16.msra.mxu0 %v75
    %91 = vmatprep.subr.bf16.mxu0 0
    %92 = vmatpush1.bf16.msra.mxu0 %v76
    %93 = vmatprep.subr.bf16.mxu0 0
    %94 = vmatpush1.bf16.msra.mxu0 %v77
    %95 = vmatprep.subr.bf16.mxu0 0
    %96 = vmatpush1.bf16.msra.mxu0 %v78
    %97 = vmatprep.subr.bf16.mxu0 0
    %98 = vmatpush1.bf16.msra.mxu0 %v79
    %99 = vmatprep.subr.bf16.mxu0 0
    %100 = vmatpush1.bf16.msra.mxu0 0
    %101 = vmatprep.subr.bf16.mxu0 0
    %102 = vmatpush1.bf16.msra.mxu0 0
    %103 = vmatprep.subr.bf16.mxu0 0
    %104 = vmatpush1.bf16.msra.mxu0 0
    %105 = vmatprep.subr.bf16.mxu0 0
    %106 = vmatpush1.bf16.msra.mxu0 0
    %107 = vmatprep.subr.bf16.mxu0 0
    %108 = vmatpush1.bf16.msra.mxu0 0
    %109 = vmatprep.subr.bf16.mxu0 0
    %110 = vmatpush1.bf16.msra.mxu0 0
    %111 = vmatprep.subr.bf16.mxu0 0
    %112 = vmatpush1.bf16.msra.mxu0 0
    %113 = vmatprep.subr.bf16.mxu0 0
    %114 = vmatpush1.bf16.msra.mxu0 0
    %115 = vmatprep.subr.bf16.mxu0 0
    %116 = vmatpush1.bf16.msra.mxu0 0
    %117 = vmatprep.subr.bf16.mxu0 0
    %118 = vmatpush1.bf16.msra.mxu0 0
    %119 = vmatprep.subr.bf16.mxu0 0
    %120 = vmatpush1.bf16.msra.mxu0 0
    %121 = vmatprep.mubr.bf16.mxu0 0
    %122 = vmatmul.mubr.bf16.gmra.mrb[0].mxu0 %v87
    %v123 = vpop.f32.mrb[0].mxu0
    %v124 = vadd.f32 0.0, %v123
    %v125 = vpop.f32.mrb[0].mxu0
    %v126 = vpop.f32.mrb[0].mxu0
    %v127 = vpop.f32.mrb[0].mxu0
    %128 = vdwg.mxu0
    %v139 = vunpack.c.l.b16 %v32
    %v140 = vunpack.c.l.b16 %v33
    %v141 = vunpack.c.l.b16 %v34
    %v142 = vunpack.c.l.b16 %v35
    %v143 = vunpack.c.l.b16 %v36
    %v144 = vunpack.c.l.b16 %v37
    %v145 = vunpack.c.l.b16 %v38
    %v146 = vunpack.c.l.b16 %v39
    %v147 = vunpack.c.l.b16 %v40
    %v148 = vunpack.c.l.b16 %v41
    %v149 = vpack.c.b16 %v140, %v139
    %v150 = vpack.c.b16 %v142, %v141
    %v151 = vpack.c.b16 %v144, %v143
    %v152 = vpack.c.b16 %v146, %v145
    %v153 = vpack.c.b16 %v148, %v147
    %v160 = vsel %vm85, %v31, 0
    %162 = vmatprep.subr.bf16.mxu0 0
    %163 = vmatpush1.bf16.msra.mxu0 %v149
    %164 = vmatprep.subr.bf16.mxu0 0
    %165 = vmatpush1.bf16.msra.mxu0 %v150
    %166 = vmatprep.subr.bf16.mxu0 0
    %167 = vmatpush1.bf16.msra.mxu0 %v151
    %168 = vmatprep.subr.bf16.mxu0 0
    %169 = vmatpush1.bf16.msra.mxu0 %v152
    %170 = vmatprep.subr.bf16.mxu0 0
    %171 = vmatpush1.bf16.msra.mxu0 %v153
    %172 = vmatprep.subr.bf16.mxu0 0
    %173 = vmatpush1.bf16.msra.mxu0 0
    %174 = vmatprep.subr.bf16.mxu0 0
    %175 = vmatpush1.bf16.msra.mxu0 0
    %176 = vmatprep.subr.bf16.mxu0 0
    %177 = vmatpush1.bf16.msra.mxu0 0
    %178 = vmatprep.subr.bf16.mxu0 0
    %179 = vmatpush1.bf16.msra.mxu0 0
    %180 = vmatprep.subr.bf16.mxu0 0
    %181 = vmatpush1.bf16.msra.mxu0 0
    %182 = vmatprep.subr.bf16.mxu0 0
    %183 = vmatpush1.bf16.msra.mxu0 0
    %184 = vmatprep.subr.bf16.mxu0 0
    %185 = vmatpush1.bf16.msra.mxu0 0
    %186 = vmatprep.subr.bf16.mxu0 0
    %187 = vmatpush1.bf16.msra.mxu0 0
    %188 = vmatprep.subr.bf16.mxu0 0
    %189 = vmatpush1.bf16.msra.mxu0 0
    %190 = vmatprep.subr.bf16.mxu0 0
    %191 = vmatpush1.bf16.msra.mxu0 0
    %192 = vmatprep.subr.bf16.mxu0 0
    %193 = vmatpush1.bf16.msra.mxu0 0
    %194 = vmatprep.mubr.bf16.mxu0 0
    %195 = vmatmul.mubr.bf16.gmra.mrb[0].mxu0 %v160
    %v196 = vpop.f32.mrb[0].mxu0
    %v197 = vadd.f32 %v124, %v196
    %v198 = vpop.f32.mrb[0].mxu0
    %v199 = vpop.f32.mrb[0].mxu0
    %v200 = vpop.f32.mrb[0].mxu0
    %201 = vdwg.mxu0
    %s202 = scalar_lea.vmem %s0, 2
    %v203 = vld [vmem:[%s202] sm:$0x1]
    %s204 = scalar_lea.vmem %s1, 80
    %v205 = vld [vmem:[%s204] sm:$0xf]
    %v206 = vld [vmem:[%s204 + $0x4] sm:$0xf]
    %v207 = vld [vmem:[%s204 + $0x8] sm:$0xf]
    %v208 = vld [vmem:[%s204 + $0xc] sm:$0xf]
    %v209 = vld [vmem:[%s204 + $0x10] sm:$0xf]
    %v210 = vld [vmem:[%s204 + $0x14] sm:$0xf]
    %v211 = vld [vmem:[%s204 + $0x18] sm:$0xf]
    %v212 = vld [vmem:[%s204 + $0x1c] sm:$0xf]
    %v213 = vld [vmem:[%s204 + $0x20] sm:$0xf]
    %v214 = vld [vmem:[%s204 + $0x24] sm:$0xf]
    %v225 = vunpack.c.l.b16 %v205
    %v226 = vunpack.c.l.b16 %v206
    %v227 = vunpack.c.l.b16 %v207
    %v228 = vunpack.c.l.b16 %v208
    %v229 = vunpack.c.l.b16 %v209
    %v230 = vunpack.c.l.b16 %v210
    %v231 = vunpack.c.l.b16 %v211
    %v232 = vunpack.c.l.b16 %v212
    %v233 = vunpack.c.l.b16 %v213
    %v234 = vunpack.c.l.b16 %v214
    %v235 = vpack.c.b16 %v226, %v225
    %v236 = vpack.c.b16 %v228, %v227
    %v237 = vpack.c.b16 %v230, %v229
    %v238 = vpack.c.b16 %v232, %v231
    %v239 = vpack.c.b16 %v234, %v233
    %v246 = vsel %vm85, %v203, 0
    %248 = vmatprep.subr.bf16.mxu0 0
    %249 = vmatpush1.bf16.msra.mxu0 %v235
    %250 = vmatprep.subr.bf16.mxu0 0
    %251 = vmatpush1.bf16.msra.mxu0 %v236
    %252 = vmatprep.subr.bf16.mxu0 0
    %253 = vmatpush1.bf16.msra.mxu0 %v237
    %254 = vmatprep.subr.bf16.mxu0 0
    %255 = vmatpush1.bf16.msra.mxu0 %v238
    %256 = vmatprep.subr.bf16.mxu0 0
    %257 = vmatpush1.bf16.msra.mxu0 %v239
    %258 = vmatprep.subr.bf16.mxu0 0
    %259 = vmatpush1.bf16.msra.mxu0 0
    %260 = vmatprep.subr.bf16.mxu0 0
    %261 = vmatpush1.bf16.msra.mxu0 0
    %262 = vmatprep.subr.bf16.mxu0 0
    %263 = vmatpush1.bf16.msra.mxu0 0
    %264 = vmatprep.subr.bf16.mxu0 0
    %265 = vmatpush1.bf16.msra.mxu0 0
    %266 = vmatprep.subr.bf16.mxu0 0
    %267 = vmatpush1.bf16.msra.mxu0 0
    %268 = vmatprep.subr.bf16.mxu0 0
    %269 = vmatpush1.bf16.msra.mxu0 0
    %270 = vmatprep.subr.bf16.mxu0 0
    %271 = vmatpush1.bf16.msra.mxu0 0
    %272 = vmatprep.subr.bf16.mxu0 0
    %273 = vmatpush1.bf16.msra.mxu0 0
    %274 = vmatprep.subr.bf16.mxu0 0
    %275 = vmatpush1.bf16.msra.mxu0 0
    %276 = vmatprep.subr.bf16.mxu0 0
    %277 = vmatpush1.bf16.msra.mxu0 0
    %278 = vmatprep.subr.bf16.mxu0 0
    %279 = vmatpush1.bf16.msra.mxu0 0
    %280 = vmatprep.mubr.bf16.mxu0 0
    %281 = vmatmul.mubr.bf16.gmra.mrb[0].mxu0 %v246
    %v282 = vpop.f32.mrb[0].mxu0
    %v283 = vadd.f32 0.0, %v282
    %v284 = vpop.f32.mrb[0].mxu0
    %v285 = vpop.f32.mrb[0].mxu0
    %v286 = vpop.f32.mrb[0].mxu0
    %287 = vdwg.mxu0
    %v288 = vadd.f32 %v197, %v283
    %s289 = scalar_lea.vmem %s0, 3
    %v290 = vld [vmem:[%s289] sm:$0x1]
    %s291 = scalar_lea.vmem %s1, 120
    %v292 = vld [vmem:[%s291] sm:$0xf]
    %v293 = vld [vmem:[%s291 + $0x4] sm:$0xf]
    %v294 = vld [vmem:[%s291 + $0x8] sm:$0xf]
    %v295 = vld [vmem:[%s291 + $0xc] sm:$0xf]
    %v296 = vld [vmem:[%s291 + $0x10] sm:$0xf]
    %v297 = vld [vmem:[%s291 + $0x14] sm:$0xf]
    %v298 = vld [vmem:[%s291 + $0x18] sm:$0xf]
    %v299 = vld [vmem:[%s291 + $0x1c] sm:$0xf]
    %v300 = vld [vmem:[%s291 + $0x20] sm:$0xf]
    %v301 = vld [vmem:[%s291 + $0x24] sm:$0xf]
    %v312 = vunpack.c.l.b16 %v292
    %v313 = vunpack.c.l.b16 %v293
    %v314 = vunpack.c.l.b16 %v294
    %v315 = vunpack.c.l.b16 %v295
    %v316 = vunpack.c.l.b16 %v296
    %v317 = vunpack.c.l.b16 %v297
    %v318 = vunpack.c.l.b16 %v298
    %v319 = vunpack.c.l.b16 %v299
    %v320 = vunpack.c.l.b16 %v300
    %v321 = vunpack.c.l.b16 %v301
    %v322 = vpack.c.b16 %v313, %v312
    %v323 = vpack.c.b16 %v315, %v314
    %v324 = vpack.c.b16 %v317, %v316
    %v325 = vpack.c.b16 %v319, %v318
    %v326 = vpack.c.b16 %v321, %v320
    %v333 = vsel %vm85, %v290, 0
    %335 = vmatprep.subr.bf16.mxu0 0
    %336 = vmatpush1.bf16.msra.mxu0 %v322
    %337 = vmatprep.subr.bf16.mxu0 0
    %338 = vmatpush1.bf16.msra.mxu0 %v323
    %339 = vmatprep.subr.bf16.mxu0 0
    %340 = vmatpush1.bf16.msra.mxu0 %v324
    %341 = vmatprep.subr.bf16.mxu0 0
    %342 = vmatpush1.bf16.msra.mxu0 %v325
    %343 = vmatprep.subr.bf16.mxu0 0
    %344 = vmatpush1.bf16.msra.mxu0 %v326
    %345 = vmatprep.subr.bf16.mxu0 0
    %346 = vmatpush1.bf16.msra.mxu0 0
    %347 = vmatprep.subr.bf16.mxu0 0
    %348 = vmatpush1.bf16.msra.mxu0 0
    %349 = vmatprep.subr.bf16.mxu0 0
    %350 = vmatpush1.bf16.msra.mxu0 0
    %351 = vmatprep.subr.bf16.mxu0 0
    %352 = vmatpush1.bf16.msra.mxu0 0
    %353 = vmatprep.subr.bf16.mxu0 0
    %354 = vmatpush1.bf16.msra.mxu0 0
    %355 = vmatprep.subr.bf16.mxu0 0
    %356 = vmatpush1.bf16.msra.mxu0 0
    %357 = vmatprep.subr.bf16.mxu0 0
    %358 = vmatpush1.bf16.msra.mxu0 0
    %359 = vmatprep.subr.bf16.mxu0 0
    %360 = vmatpush1.bf16.msra.mxu0 0
    %361 = vmatprep.subr.bf16.mxu0 0
    %362 = vmatpush1.bf16.msra.mxu0 0
    %363 = vmatprep.subr.bf16.mxu0 0
    %364 = vmatpush1.bf16.msra.mxu0 0
    %365 = vmatprep.subr.bf16.mxu0 0
    %366 = vmatpush1.bf16.msra.mxu0 0
    %367 = vmatprep.mubr.bf16.mxu0 0
    %368 = vmatmul.mubr.bf16.gmra.mrb[0].mxu0 %v333
    %v369 = vpop.f32.mrb[0].mxu0
    %v370 = vadd.f32 0.0, %v369
    %v371 = vpop.f32.mrb[0].mxu0
    %v372 = vpop.f32.mrb[0].mxu0
    %v373 = vpop.f32.mrb[0].mxu0
    %374 = vdwg.mxu0
    %v375 = vadd.f32 %v288, %v370
    %s376 = scalar_lea.vmem %s0, 4
    %v377 = vld [vmem:[%s376] sm:$0x1]
    %s378 = scalar_lea.vmem %s1, 160
    %v379 = vld [vmem:[%s378] sm:$0xf]
    %v380 = vld [vmem:[%s378 + $0x4] sm:$0xf]
    %v381 = vld [vmem:[%s378 + $0x8] sm:$0xf]
    %v382 = vld [vmem:[%s378 + $0xc] sm:$0xf]
    %v383 = vld [vmem:[%s378 + $0x10] sm:$0xf]
    %v384 = vld [vmem:[%s378 + $0x14] sm:$0xf]
    %v385 = vld [vmem:[%s378 + $0x18] sm:$0xf]
    %v386 = vld [vmem:[%s378 + $0x1c] sm:$0xf]
    %v387 = vld [vmem:[%s378 + $0x20] sm:$0xf]
    %v388 = vld [vmem:[%s378 + $0x24] sm:$0xf]
    %v399 = vunpack.c.l.b16 %v379
    %v400 = vunpack.c.l.b16 %v380
    %v401 = vunpack.c.l.b16 %v381
    %v402 = vunpack.c.l.b16 %v382
    %v403 = vunpack.c.l.b16 %v383
    %v404 = vunpack.c.l.b16 %v384
    %v405 = vunpack.c.l.b16 %v385
    %v406 = vunpack.c.l.b16 %v386
    %v407 = vunpack.c.l.b16 %v387
    %v408 = vunpack.c.l.b16 %v388
    %v409 = vpack.c.b16 %v400, %v399
    %v410 = vpack.c.b16 %v402, %v401
    %v411 = vpack.c.b16 %v404, %v403
    %v412 = vpack.c.b16 %v406, %v405
    %v413 = vpack.c.b16 %v408, %v407
    %v420 = vsel %vm85, %v377, 0
    %422 = vmatprep.subr.bf16.mxu0 0
    %423 = vmatpush1.bf16.msra.mxu0 %v409
    %424 = vmatprep.subr.bf16.mxu0 0
    %425 = vmatpush1.bf16.msra.mxu0 %v410
    %426 = vmatprep.subr.bf16.mxu0 0
    %427 = vmatpush1.bf16.msra.mxu0 %v411
    %428 = vmatprep.subr.bf16.mxu0 0
    %429 = vmatpush1.bf16.msra.mxu0 %v412
    %430 = vmatprep.subr.bf16.mxu0 0
    %431 = vmatpush1.bf16.msra.mxu0 %v413
    %432 = vmatprep.subr.bf16.mxu0 0
    %433 = vmatpush1.bf16.msra.mxu0 0
    %434 = vmatprep.subr.bf16.mxu0 0
    %435 = vmatpush1.bf16.msra.mxu0 0
    %436 = vmatprep.subr.bf16.mxu0 0
    %437 = vmatpush1.bf16.msra.mxu0 0
    %438 = vmatprep.subr.bf16.mxu0 0
    %439 = vmatpush1.bf16.msra.mxu0 0
    %440 = vmatprep.subr.bf16.mxu0 0
    %441 = vmatpush1.bf16.msra.mxu0 0
    %442 = vmatprep.subr.bf16.mxu0 0
    %443 = vmatpush1.bf16.msra.mxu0 0
    %444 = vmatprep.subr.bf16.mxu0 0
    %445 = vmatpush1.bf16.msra.mxu0 0
    %446 = vmatprep.subr.bf16.mxu0 0
    %447 = vmatpush1.bf16.msra.mxu0 0
    %448 = vmatprep.subr.bf16.mxu0 0
    %449 = vmatpush1.bf16.msra.mxu0 0
    %450 = vmatprep.subr.bf16.mxu0 0
    %451 = vmatpush1.bf16.msra.mxu0 0
    %452 = vmatprep.subr.bf16.mxu0 0
    %453 = vmatpush1.bf16.msra.mxu0 0
    %454 = vmatprep.mubr.bf16.mxu0 0
    %455 = vmatmul.mubr.bf16.gmra.mrb[0].mxu0 %v420
    %v456 = vpop.f32.mrb[0].mxu0
    %v457 = vadd.f32 0.0, %v456
    %v458 = vpop.f32.mrb[0].mxu0
    %v459 = vpop.f32.mrb[0].mxu0
    %v460 = vpop.f32.mrb[0].mxu0
    %461 = vdwg.mxu0
    %v462 = vadd.f32 %v375, %v457
    %v463 = vld [vmem:[%s2] sm:$0x1]
    %v465 = vlaneseq
    %v466 = vshrl.u32 %v465, 7
    %v467 = vsub.s32 0, %v466
    %v468 = vrot.slane %v463, %v467
    %v470 = vadd.f32 %v462, %v468
    %v471 = vtanh.pop %v470
    %v472 = vpack.c.bf16 %v471, %v471
    %v473 = vld [vmem:[%s3] sm:$0xf]
    %v474 = vld [vmem:[%s3 + $0x4] sm:$0xf]
    %v475 = vld [vmem:[%s3 + $0x8] sm:$0xf]
    %v476 = vld [vmem:[%s3 + $0xc] sm:$0xf]
    %v477 = vld [vmem:[%s3 + $0x10] sm:$0xf]
    %v478 = vld [vmem:[%s3 + $0x14] sm:$0xf]
    %v479 = vld [vmem:[%s3 + $0x18] sm:$0xf]
    %v480 = vld [vmem:[%s3 + $0x1c] sm:$0xf]
    %v481 = vld [vmem:[%s3 + $0x20] sm:$0xf]
    %v482 = vld [vmem:[%s3 + $0x24] sm:$0xf]
    %v483 = vld [vmem:[%s3 + $0x28] sm:$0xf]
    %v484 = vld [vmem:[%s3 + $0x2c] sm:$0xf]
    %v485 = vld [vmem:[%s3 + $0x30] sm:$0xf]
    %v486 = vld [vmem:[%s3 + $0x34] sm:$0xf]
    %v487 = vld [vmem:[%s3 + $0x38] sm:$0xf]
    %v488 = vld [vmem:[%s3 + $0x3c] sm:$0xf]
    %v489 = vld [vmem:[%s4] sm:$0x1]
    %v491 = vlaneseq
    %v492 = vshrl.u32 %v491, 7
    %v493 = vsub.s32 0, %v492
    %v494 = vrot.slane %v489, %v493
    %v512 = vunpack.c.l.b16 %v473
    %v513 = vunpack.c.l.b16 %v474
    %v514 = vunpack.c.l.b16 %v475
    %v515 = vunpack.c.l.b16 %v476
    %v516 = vunpack.c.l.b16 %v477
    %v517 = vunpack.c.l.b16 %v478
    %v518 = vunpack.c.l.b16 %v479
    %v519 = vunpack.c.l.b16 %v480
    %v520 = vunpack.c.l.b16 %v481
    %v521 = vunpack.c.l.b16 %v482
    %v522 = vunpack.c.l.b16 %v483
    %v523 = vunpack.c.l.b16 %v484
    %v524 = vunpack.c.l.b16 %v485
    %v525 = vunpack.c.l.b16 %v486
    %v526 = vunpack.c.l.b16 %v487
    %v527 = vunpack.c.l.b16 %v488
    %v528 = vpack.c.b16 %v513, %v512
    %v529 = vpack.c.b16 %v515, %v514
    %v530 = vpack.c.b16 %v517, %v516
    %v531 = vpack.c.b16 %v519, %v518
    %v532 = vpack.c.b16 %v521, %v520
    %v533 = vpack.c.b16 %v523, %v522
    %v534 = vpack.c.b16 %v525, %v524
    %v535 = vpack.c.b16 %v527, %v526
    %544 = vmatprep.subr.bf16.mxu0 0
    %545 = vmatpush1.bf16.msra.mxu0 %v528
    %546 = vmatprep.subr.bf16.mxu0 0
    %547 = vmatpush1.bf16.msra.mxu0 %v529
    %548 = vmatprep.subr.bf16.mxu0 0
    %549 = vmatpush1.bf16.msra.mxu0 %v530
    %550 = vmatprep.subr.bf16.mxu0 0
    %551 = vmatpush1.bf16.msra.mxu0 %v531
    %552 = vmatprep.subr.bf16.mxu0 0
    %553 = vmatpush1.bf16.msra.mxu0 %v532
    %554 = vmatprep.subr.bf16.mxu0 0
    %555 = vmatpush1.bf16.msra.mxu0 %v533
    %556 = vmatprep.subr.bf16.mxu0 0
    %557 = vmatpush1.bf16.msra.mxu0 %v534
    %558 = vmatprep.subr.bf16.mxu0 0
    %559 = vmatpush1.bf16.msra.mxu0 %v535
    %560 = vmatprep.subr.bf16.mxu0 0
    %561 = vmatpush1.bf16.msra.mxu0 0
    %562 = vmatprep.subr.bf16.mxu0 0
    %563 = vmatpush1.bf16.msra.mxu0 0
    %564 = vmatprep.subr.bf16.mxu0 0
    %565 = vmatpush1.bf16.msra.mxu0 0
    %566 = vmatprep.subr.bf16.mxu0 0
    %567 = vmatpush1.bf16.msra.mxu0 0
    %568 = vmatprep.subr.bf16.mxu0 0
    %569 = vmatpush1.bf16.msra.mxu0 0
    %570 = vmatprep.subr.bf16.mxu0 0
    %571 = vmatpush1.bf16.msra.mxu0 0
    %572 = vmatprep.subr.bf16.mxu0 0
    %573 = vmatpush1.bf16.msra.mxu0 0
    %574 = vmatprep.subr.bf16.mxu0 0
    %575 = vmatpush1.bf16.msra.mxu0 0
    %576 = vmatprep.mubr.bf16.mxu0 0
    %577 = vmatmul.mubr.bf16.gmra.mrb[0].mxu0 %v472
    %v578 = vpop.f32.mrb[0].mxu0
    %v579 = vadd.f32 %v494, %v578
    %v580 = vpop.f32.mrb[0].mxu0
    %v581 = vpop.f32.mrb[0].mxu0
    %v582 = vpop.f32.mrb[0].mxu0
    %583 = vdwg.mxu0
    %v584 = vtanh.pop %v579
    %v585 = vpack.c.bf16 %v584, %v584
    %v586 = vld [vmem:[%s5] sm:$0xf]
    %v587 = vld [vmem:[%s5 + $0x4] sm:$0xf]
    %v588 = vld [vmem:[%s5 + $0x8] sm:$0xf]
    %v589 = vld [vmem:[%s5 + $0xc] sm:$0xf]
    %v590 = vld [vmem:[%s5 + $0x10] sm:$0xf]
    %v591 = vld [vmem:[%s5 + $0x14] sm:$0xf]
    %v592 = vld [vmem:[%s5 + $0x18] sm:$0xf]
    %v593 = vld [vmem:[%s5 + $0x1c] sm:$0xf]
    %v594 = vld [vmem:[%s5 + $0x20] sm:$0xf]
    %v595 = vld [vmem:[%s5 + $0x24] sm:$0xf]
    %v596 = vld [vmem:[%s5 + $0x28] sm:$0xf]
    %v597 = vld [vmem:[%s5 + $0x2c] sm:$0xf]
    %v598 = vld [vmem:[%s5 + $0x30] sm:$0xf]
    %v599 = vld [vmem:[%s5 + $0x34] sm:$0xf]
    %v600 = vld [vmem:[%s5 + $0x38] sm:$0xf]
    %v601 = vld [vmem:[%s5 + $0x3c] sm:$0xf]
    %v602 = vld [vmem:[%s6] sm:$0x1]
    %v604 = vlaneseq
    %v605 = vshrl.u32 %v604, 7
    %v606 = vsub.s32 0, %v605
    %v607 = vrot.slane %v602, %v606
    %v625 = vunpack.c.l.b16 %v586
    %v626 = vunpack.c.l.b16 %v587
    %v627 = vunpack.c.l.b16 %v588
    %v628 = vunpack.c.l.b16 %v589
    %v629 = vunpack.c.l.b16 %v590
    %v630 = vunpack.c.l.b16 %v591
    %v631 = vunpack.c.l.b16 %v592
    %v632 = vunpack.c.l.b16 %v593
    %v633 = vunpack.c.l.b16 %v594
    %v634 = vunpack.c.l.b16 %v595
    %v635 = vunpack.c.l.b16 %v596
    %v636 = vunpack.c.l.b16 %v597
    %v637 = vunpack.c.l.b16 %v598
    %v638 = vunpack.c.l.b16 %v599
    %v639 = vunpack.c.l.b16 %v600
    %v640 = vunpack.c.l.b16 %v601
    %v641 = vpack.c.b16 %v626, %v625
    %v642 = vpack.c.b16 %v628, %v627
    %v643 = vpack.c.b16 %v630, %v629
    %v644 = vpack.c.b16 %v632, %v631
    %v645 = vpack.c.b16 %v634, %v633
    %v646 = vpack.c.b16 %v636, %v635
    %v647 = vpack.c.b16 %v638, %v637
    %v648 = vpack.c.b16 %v640, %v639
    %657 = vmatprep.subr.bf16.mxu0 0
    %658 = vmatpush1.bf16.msra.mxu0 %v641
    %659 = vmatprep.subr.bf16.mxu0 0
    %660 = vmatpush1.bf16.msra.mxu0 %v642
    %661 = vmatprep.subr.bf16.mxu0 0
    %662 = vmatpush1.bf16.msra.mxu0 %v643
    %663 = vmatprep.subr.bf16.mxu0 0
    %664 = vmatpush1.bf16.msra.mxu0 %v644
    %665 = vmatprep.subr.bf16.mxu0 0
    %666 = vmatpush1.bf16.msra.mxu0 %v645
    %667 = vmatprep.subr.bf16.mxu0 0
    %668 = vmatpush1.bf16.msra.mxu0 %v646
    %669 = vmatprep.subr.bf16.mxu0 0
    %670 = vmatpush1.bf16.msra.mxu0 %v647
    %671 = vmatprep.subr.bf16.mxu0 0
    %672 = vmatpush1.bf16.msra.mxu0 %v648
    %673 = vmatprep.subr.bf16.mxu0 0
    %674 = vmatpush1.bf16.msra.mxu0 0
    %675 = vmatprep.subr.bf16.mxu0 0
    %676 = vmatpush1.bf16.msra.mxu0 0
    %677 = vmatprep.subr.bf16.mxu0 0
    %678 = vmatpush1.bf16.msra.mxu0 0
    %679 = vmatprep.subr.bf16.mxu0 0
    %680 = vmatpush1.bf16.msra.mxu0 0
    %681 = vmatprep.subr.bf16.mxu0 0
    %682 = vmatpush1.bf16.msra.mxu0 0
    %683 = vmatprep.subr.bf16.mxu0 0
    %684 = vmatpush1.bf16.msra.mxu0 0
    %685 = vmatprep.subr.bf16.mxu0 0
    %686 = vmatpush1.bf16.msra.mxu0 0
    %687 = vmatprep.subr.bf16.mxu0 0
    %688 = vmatpush1.bf16.msra.mxu0 0
    %689 = vmatprep.mubr.bf16.mxu0 0
    %690 = vmatmul.mubr.bf16.gmra.mrb[0].mxu0 %v585
    %v691 = vpop.f32.mrb[0].mxu0
    %v692 = vadd.f32 %v607, %v691
    %v693 = vpop.f32.mrb[0].mxu0
    %v694 = vpop.f32.mrb[0].mxu0
    %v695 = vpop.f32.mrb[0].mxu0
    %696 = vdwg.mxu0
    %vm697 = vcmask 74752
    %698 = vst.msk [vmem:[#allocation2] sm:$0x3] %vm697, %v692
    %v699 = vsel %vm697, %v692, -inf
    %700 = vmax.xlane.f32.xlu0 %v699
    %v701 = vpop.xlane.xlu0 %700
    %v702 = vsub.f32 %v692, %v701
    %v703 = vmul.f32 %v702, 1.442695
    %v704 = vpow.pop %v703
    %v705 = vsel %vm697, %v704, 0.0
    %706 = vadd.xlane.f32.xlu0 %v705
    %v707 = vpop.xlane.xlu0 %706
    %v708 = vrcp.pop %v707
    %v709 = vmul.f32 %v704, %v708
    %710 = vst.msk [vmem:[#allocation4] sm:$0x3] %vm697, %v709
    // Predicated region
    $region30: #{lenet5_forward.5} parent=1 // pred_check
      _
    $region31: #{lenet5_forward.5} parent=1 // pred_check_branch
      %712 = sbr.rel (0) target = $region33
    $region32: #{lenet5_forward.5} parent=1 // pred_region
      %s714 = ssub.s32 32, 32
      %715 = vsyncadd [#allocation3], %s714
      %s717 = sshll.u32 [#allocation2], 4
      %s718 = int_to_ptr.vmem [resolvable:$true] %s717
      %720 = dma.vmem_to_hbm [thread:$0]  %s718, 32, %s7, [#allocation3]
    $region33: #{lenet5_forward.5} parent=1 // pred_fallthru
      _
    // Predicated region
    $region34: #{lenet5_forward.5} parent=1 // pred_check
      _
    $region35: #{lenet5_forward.5} parent=1 // pred_check_branch
      %722 = sbr.rel (0) target = $region37
    $region36: #{lenet5_forward.5} parent=1 // pred_region
      %s724 = ssub.s32 32, 32
      %725 = vsyncadd [#allocation5], %s724
      %s727 = sshll.u32 [#allocation4], 4
      %s728 = int_to_ptr.vmem [resolvable:$true] %s727
      %730 = dma.vmem_to_hbm [thread:$0]  %s728, 32, %s8, [#allocation5]
    $region37: #{lenet5_forward.5} parent=1 // pred_fallthru
      _
    // Predicated region
    $region38: #{lenet5_forward.5} parent=1 // pred_check
      _
    $region39: #{lenet5_forward.5} parent=1 // pred_check_branch
      %732 = sbr.rel (0) target = $region41
    $region40: #{lenet5_forward.5} parent=1 // pred_region
      %733 = dma.done [#allocation3], 32
    $region41: #{lenet5_forward.5} parent=1 // pred_fallthru
      _
    // Predicated region
    $region42: #{lenet5_forward.5} parent=1 // pred_check
      _
    $region43: #{lenet5_forward.5} parent=1 // pred_check_branch
      %735 = sbr.rel (0) target = $region45
    $region44: #{lenet5_forward.5} parent=1 // pred_region
      %736 = dma.done [#allocation5], 32
    $region45: #{lenet5_forward.5} parent=1 // pred_fallthru
      _
    %737 = vsyncpa [#allocation3], 1
    %738 = vsyncpa [#allocation5], 1

</llo_original>
